<compile_context>
chip_gen: v7x
topology: tpu7x:2x2x1
jax: 0.10.0
libtpu: 0.0.40
codegen_flags: <defaults>
</compile_context>

<pallas_src>
import math

import jax
import jax.numpy as jnp
from jax.experimental import pallas as pl
from jax.experimental.pallas import tpu as pltpu

# ---------------- KAN configuration (efficient-KAN defaults) -----------------
GRID_SIZE = 5
SPLINE_ORDER = 3
GRID_RANGE = (-1.0, 1.0)
N_BASIS = GRID_SIZE + SPLINE_ORDER                      # 8 basis fns per input
_H = (GRID_RANGE[1] - GRID_RANGE[0]) / GRID_SIZE
# 12 uniform knots (same for every input feature, as in the PyTorch module).
KNOTS = tuple(GRID_RANGE[0] + _H * (i - SPLINE_ORDER)
              for i in range(GRID_SIZE + 2 * SPLINE_ORDER + 1))
# Cumulative uniform-knot Cox-de Boor factor prod_{k=1..p} 1/(k*_H), folded
# into the fused spline weights (the kernel produces UNSCALED bases).
SPLINE_W_SCALE = 1.0 / (math.factorial(SPLINE_ORDER) * _H ** SPLINE_ORDER)

IN_FEATURES = 140
HIDDEN = 128
OUT_FEATURES = 128
BN_EPS = 1e-5

LANE = 128                          # vreg lane width
K1_PAD = 256                        # lane-aligned padding of the 140 inputs
N_SEG = N_BASIS + 1                 # SiLU segment + 8 spline-basis segments


def _silu(x):
    # sigmoid via the EUP tanh path: sigmoid(x) = 0.5*tanh(0.5*x) + 0.5
    return x * (0.5 * jnp.tanh(0.5 * x) + 0.5)


# ------------------------------ kernel helpers --------------------------------
def _write_feature_chunk(xc, feat_ref, seg_stride, col0):
    """Write [SiLU(xc), B0u(xc), ..., B7u(xc)] for one 128-lane chunk.

    xc: (B, 128) f32.  Segment s of the bf16 slab occupies columns
    [s*seg_stride + col0, s*seg_stride + col0 + 128).  The spline bases are
    UNSCALED (uniform-knot recursion without the 1/(k*_H) factors); the
    cumulative factor is folded into the fused weights in the wrapper.
    """
    feat_ref[:, col0:col0 + LANE] = _silu(xc).astype(jnp.bfloat16)

    # Shifted terms, hoisted out of the recursion (reused at every level).
    d = [xc - k for k in KNOTS]                                  # 12 arrays
    # Degree-0 bases from a monotone >= chain: bases[i] = ge[i] - ge[i+1]
    # (equals the half-open interval test [KNOTS[i], KNOTS[i+1])).
    ge = [(xc >= k).astype(jnp.float32) for k in KNOTS]
    bases = [ge[i] - ge[i + 1] for i in range(len(KNOTS) - 1)]   # 11 arrays

    for k in range(1, SPLINE_ORDER + 1):
        last = (k == SPLINE_ORDER)
        nxt = []
        for i in range(len(bases) - 1):
            # Uniform knots: the level-k scale is identical for every i, so
            # the recursion is just 2 mul + 1 sub per produced basis.
            b = d[i] * bases[i] - d[i + k + 1] * bases[i + 1]
            if last:
                off = (i + 1) * seg_stride + col0
                feat_ref[:, off:off + LANE] = b.astype(jnp.bfloat16)
            else:
                nxt.append(b)
        bases = nxt


def kan_molde_kernel(x_ref, w1_hbm, w2_hbm, gamma_ref, beta_ref, o_ref,
                     feat_ref, w1_ref, w2_ref, sem):
    # Kick off both fused-weight DMAs immediately (w1 first: it is needed
    # first); they overlap the VPU-bound basis builds below.
    w1_cp = pltpu.make_async_copy(w1_hbm, w1_ref, sem.at[0])
    w2_cp = pltpu.make_async_copy(w2_hbm, w2_ref, sem.at[1])
    w1_cp.start()
    w2_cp.start()

    # ---- fc1 features: SiLU + 8 spline bases, two 128-lane chunks ----
    for c in range(K1_PAD // LANE):
        xc = x_ref[:, c * LANE:(c + 1) * LANE]
        _write_feature_chunk(xc, feat_ref, K1_PAD, c * LANE)

    # ---- fc1: one fused bf16 MXU contraction + ReLU ----
    w1_cp.wait()
    h = jnp.dot(feat_ref[...], w1_ref[...],
                preferred_element_type=jnp.float32)              # (B, 128)
    h = jnp.maximum(h, 0.0)

    # ---- BatchNorm1d (training-mode batch stats, biased var) ----
    # Two-pass centered variance (avoids E[h^2]-mean^2 cancellation).
    # At B=16 these sublane reductions are negligible; the MXU ones-vector
    # sum/sumsq belongs with the batch-tiled variant (see TODO above).
    mean = jnp.mean(h, axis=0, keepdims=True)                    # (1, 128)
    hc = h - mean
    var = jnp.mean(hc * hc, axis=0, keepdims=True)
    scale = gamma_ref[...] * jax.lax.rsqrt(var + BN_EPS)
    h = hc * scale + beta_ref[...]

    # ---- fc2 features written into the SAME slab (first N_SEG*HIDDEN cols) ----
    _write_feature_chunk(h, feat_ref, HIDDEN, 0)
    w2_cp.wait()
    out = jnp.dot(feat_ref[:, :N_SEG * HIDDEN], w2_ref[...],
                  preferred_element_type=jnp.float32)            # (B, 128)
    o_ref[...] = jnp.maximum(out, 0.0)


# --------------------------------- wrapper ------------------------------------
def kan_molde(x, params):
    w1, w2, gamma, beta = params          # w1/w2 are pre-fused bf16 matrices
    B, F = x.shape
    assert F == IN_FEATURES
    # Explicit lane-aligned zero padding 140 -> 256 (padded weight rows are 0,
    # so the spurious basis values of the padded columns contribute nothing).
    x_pad = jnp.pad(x.astype(jnp.float32), ((0, 0), (0, K1_PAD - F)))

    def vmem_spec(shape):
        nd = len(shape)
        return pl.BlockSpec(shape, lambda i, _nd=nd: (0,) * _nd)

    return pl.pallas_call(
        kan_molde_kernel,
        out_shape=jax.ShapeDtypeStruct((B, OUT_FEATURES), jnp.float32),
        grid=(1,),
        in_specs=[
            vmem_spec(x_pad.shape),
            pl.BlockSpec(memory_space=pl.ANY),     # w1 stays in HBM, manual DMA
            pl.BlockSpec(memory_space=pl.ANY),     # w2 stays in HBM, manual DMA
            vmem_spec(gamma.shape),
            vmem_spec(beta.shape),
        ],
        out_specs=vmem_spec((B, OUT_FEATURES)),
        scratch_shapes=[
            pltpu.VMEM((B, N_SEG * K1_PAD), jnp.bfloat16),   # shared feature slab
            pltpu.VMEM(w1.shape, jnp.bfloat16),              # w1 VMEM buffer
            pltpu.VMEM(w2.shape, jnp.bfloat16),              # w2 VMEM buffer
            pltpu.SemaphoreType.DMA((2,)),
        ],
        compiler_params=pltpu.CompilerParams(
            dimension_semantics=("arbitrary",),
            vmem_limit_bytes=32 * 1024 * 1024),
    )(x_pad, w1, w2, gamma, beta)


# -------------------- parameter construction / weight fusion ------------------
def _fuse_kan_weights(base_w, spline_w, scaler, k_pad):
    """Build the fused bf16 (N_SEG * k_pad, out) weight matrix for one KANLinear.

    Segment 0 holds the base (SiLU-path) weights; segments 1..8 hold the
    scaler-scaled spline weights of basis 0..7, each pre-multiplied by
    SPLINE_W_SCALE (the folded uniform-knot Cox-de Boor factor) and zero-padded
    to k_pad rows.
    """
    out_f, in_f = base_w.shape
    scaled = spline_w * scaler[..., None] * SPLINE_W_SCALE   # (out, in, N_BASIS)
    base_wT = base_w.T                                        # (in, out)
    spline_wT = jnp.transpose(scaled, (2, 1, 0))              # (N_BASIS, in, out)
    pad = k_pad - in_f
    base_wT = jnp.pad(base_wT, ((0, pad), (0, 0)))
    spline_wT = jnp.pad(spline_wT, ((0, 0), (0, pad), (0, 0)))
    fused = jnp.concatenate([base_wT[None], spline_wT], axis=0)  # (9,k_pad,out)
    return fused.reshape(N_SEG * k_pad, out_f).astype(jnp.bfloat16)


def init_params(key):
    k1, k2, k3, k4, k5, k6 = jax.random.split(key, 6)

    def kan_linear_raw(kb, ks, kc, in_f, out_f, base_offset):
        # base_weight (out, in); spline_weight (out, in, N_BASIS);
        # spline_scaler (out, in).  Deterministic synthetic init.  The small
        # positive offset on the layer-1 base weights keeps every BatchNorm
        # channel's batch variance comfortably away from zero at the tiny demo
        # batch (train-mode BN at B=16 is otherwise ill-conditioned).
        base_w = 0.1 * jax.random.normal(kb, (out_f, in_f), jnp.float32) + base_offset
        spline_w = 0.1 * jax.random.normal(ks, (out_f, in_f, N_BASIS), jnp.float32)
        scaler = 1.0 + 0.05 * jax.random.normal(kc, (out_f, in_f), jnp.float32)
        return base_w, spline_w, scaler

    l1 = kan_linear_raw(k1, k2, k3, IN_FEATURES, HIDDEN, 0.05)
    l2 = kan_linear_raw(k4, k5, k6, HIDDEN, OUT_FEATURES, 0.0)
    gamma = jnp.ones((1, HIDDEN), jnp.float32)   # BatchNorm1d default weight
    beta = jnp.zeros((1, HIDDEN), jnp.float32)   # BatchNorm1d default bias

    w1 = _fuse_kan_weights(*l1, K1_PAD)
    w2 = _fuse_kan_weights(*l2, HIDDEN)

    raw_params = (l1, l2, gamma, beta)           # for the pure-f32 reference
    kernel_params = (w1, w2, gamma, beta)        # pre-fused bf16 for the kernel
    return raw_params, kernel_params


# ------------------------- pure-JAX f32 reference (check) ---------------------
def _hp_dot(a, b):
    return jnp.dot(a, b, precision=jax.lax.Precision.HIGHEST)


def _ref_b_splines(x):
    """Naive scaled Cox-de Boor (matches the PyTorch efficient-KAN formulation)."""
    knots = jnp.asarray(KNOTS, jnp.float32)
    bases = [((x >= knots[i]) & (x < knots[i + 1])).astype(x.dtype)
             for i in range(len(KNOTS) - 1)]
    for k in range(1, SPLINE_ORDER + 1):
        nb = []
        for i in range(len(bases) - 1):
            left = (x - knots[i]) / (knots[i + k] - knots[i]) * bases[i]
            right = ((knots[i + k + 1] - x) /
                     (knots[i + k + 1] - knots[i + 1]) * bases[i + 1])
            nb.append(left + right)
        bases = nb
    return jnp.stack(bases, axis=-1)             # (B, in, N_BASIS)


def _ref_kan_linear(x, base_w, spline_w, scaler):
    base_out = _hp_dot(x * jax.nn.sigmoid(x), base_w.T)
    bases = _ref_b_splines(x)                                   # (B, in, n)
    scaled = spline_w * scaler[..., None]                       # (out, in, n)
    spline_out = _hp_dot(bases.reshape(x.shape[0], -1),
                         scaled.reshape(scaled.shape[0], -1).T)
    return base_out + spline_out


def _ref_forward(x, raw_params):
    (b1, s1, c1), (b2, s2, c2), gamma, beta = raw_params
    h = jnp.maximum(_ref_kan_linear(x, b1, s1, c1), 0.0)
    mean = jnp.mean(h, axis=0, keepdims=True)
    var = jnp.mean((h - mean) ** 2, axis=0, keepdims=True)
    h = (h - mean) * jax.lax.rsqrt(var + BN_EPS) * gamma + beta
    return jnp.maximum(_ref_kan_linear(h, b2, s2, c2), 0.0)


# ------------------------------------ main -------------------------------------
if __name__ == "__main__":
    key = jax.random.PRNGKey(0)
    kx, kp = jax.random.split(key)

    batch = 16
    x = jax.random.normal(kx, (batch, IN_FEATURES), jnp.float32)
    raw_params, kernel_params = init_params(kp)

    out = jax.block_until_ready(kan_molde(x, kernel_params))
    ref = jax.block_until_ready(_ref_forward(x, raw_params))

    assert out.shape == (batch, OUT_FEATURES)
    assert bool(jnp.isfinite(out).all())

    # Kernel uses the standard TPU bf16-MXU / f32-accumulate path; reference is
    # full f32.  Expected mismatch ~1e-2 relative RMS; a structural bug >3e-1.
    err = out - ref
    rms_ref = float(jnp.sqrt(jnp.mean(ref * ref))) + 1e-12
    rms_err = float(jnp.sqrt(jnp.mean(err * err)))
    max_err = float(jnp.max(jnp.abs(err)))
    assert rms_err < 4e-2 * rms_ref, ("relative RMS error too large", rms_err, rms_ref)
    assert max_err < 1.5e-1, ("max abs error too large", max_err)

    print("KERNEL_OK")
</pallas_src>

<mosaic_0001>
module attributes {stable_mosaic.version = 11 : i64} {
  func.func @kan_molde_kernel(%arg0: i32, %arg1: memref<16x256xf32, #tpu.memory_space<vmem>>, %arg2: memref<2304x128xbf16, #tpu.memory_space<any>>, %arg3: memref<1152x128xbf16, #tpu.memory_space<any>>, %arg4: memref<1x128xf32, #tpu.memory_space<vmem>>, %arg5: memref<1x128xf32, #tpu.memory_space<vmem>>, %arg6: memref<16x128xf32, #tpu.memory_space<vmem>>, %arg7: memref<16x2304xbf16, #tpu.memory_space<vmem>>, %arg8: memref<2304x128xbf16, #tpu.memory_space<vmem>>, %arg9: memref<1152x128xbf16, #tpu.memory_space<vmem>>, %arg10: memref<2x!tpu.dma_semaphore, #tpu.memory_space<semaphore_mem>>) attributes {dimension_semantics = [#tpu.dimension_semantics<arbitrary>], iteration_bounds = array<i64: 1>, scalar_prefetch = 0 : i64, scratch_operands = 4 : i64, tpu.core_type = #tpu.core_type<tc>, window_params = [{pipeline_mode = #tpu.pipeline_mode<synchronous>, transform_indices = @transform_0, window_bounds = array<i64: 16, 256>}, {}, {}, {pipeline_mode = #tpu.pipeline_mode<synchronous>, transform_indices = @transform_3, window_bounds = array<i64: 1, 128>}, {pipeline_mode = #tpu.pipeline_mode<synchronous>, transform_indices = @transform_4, window_bounds = array<i64: 1, 128>}, {pipeline_mode = #tpu.pipeline_mode<synchronous>, transform_indices = @transform_5, window_bounds = array<i64: 16, 128>}]} {
    %c0_i32 = arith.constant 0 : i32
    %0 = tpu.memref_slice %arg10[%c0_i32] : memref<2x!tpu.dma_semaphore, #tpu.memory_space<semaphore_mem>> -> memref<1x!tpu.dma_semaphore, #tpu.memory_space<semaphore_mem>>
    %1 = tpu.memref_squeeze %0 : memref<1x!tpu.dma_semaphore, #tpu.memory_space<semaphore_mem>> -> memref<!tpu.dma_semaphore, #tpu.memory_space<semaphore_mem>>
    tpu.enqueue_dma source(%arg2 : memref<2304x128xbf16, #tpu.memory_space<any>>) target(%arg8 : memref<2304x128xbf16, #tpu.memory_space<vmem>>) target_semaphore(%1 : memref<!tpu.dma_semaphore, #tpu.memory_space<semaphore_mem>>)
    %c1_i32 = arith.constant 1 : i32
    %2 = tpu.memref_slice %arg10[%c1_i32] : memref<2x!tpu.dma_semaphore, #tpu.memory_space<semaphore_mem>> -> memref<1x!tpu.dma_semaphore, #tpu.memory_space<semaphore_mem>>
    %3 = tpu.memref_squeeze %2 : memref<1x!tpu.dma_semaphore, #tpu.memory_space<semaphore_mem>> -> memref<!tpu.dma_semaphore, #tpu.memory_space<semaphore_mem>>
    tpu.enqueue_dma source(%arg3 : memref<1152x128xbf16, #tpu.memory_space<any>>) target(%arg9 : memref<1152x128xbf16, #tpu.memory_space<vmem>>) target_semaphore(%3 : memref<!tpu.dma_semaphore, #tpu.memory_space<semaphore_mem>>)
    %c0 = arith.constant 0 : index
    %c0_0 = arith.constant 0 : index
    %4 = vector.load %arg1[%c0, %c0_0] : memref<16x256xf32, #tpu.memory_space<vmem>>, vector<16x128xf32>
    %cst = arith.constant 5.000000e-01 : f32
    %5 = vector.broadcast %cst : f32 to vector<16x128xf32>
    %6 = arith.mulf %5, %4 : vector<16x128xf32>
    %7 = math.tanh %6 : vector<16x128xf32>
    %cst_1 = arith.constant 5.000000e-01 : f32
    %8 = vector.broadcast %cst_1 : f32 to vector<16x128xf32>
    %9 = arith.mulf %8, %7 : vector<16x128xf32>
    %cst_2 = arith.constant 5.000000e-01 : f32
    %10 = vector.broadcast %cst_2 : f32 to vector<16x128xf32>
    %11 = arith.addf %9, %10 : vector<16x128xf32>
    %12 = arith.mulf %4, %11 : vector<16x128xf32>
    %13 = arith.truncf %12 : vector<16x128xf32> to vector<16x128xbf16>
    %c0_3 = arith.constant 0 : index
    %c0_4 = arith.constant 0 : index
    %14 = vector.load %arg7[%c0_3, %c0_4] : memref<16x2304xbf16, #tpu.memory_space<vmem>>, vector<16x128xbf16>
    tpu.vector_store %arg7[%c0_3, %c0_4], %13 {strides = array<i32>} : memref<16x2304xbf16, #tpu.memory_space<vmem>>, vector<16x128xbf16>,
    %cst_5 = arith.constant -2.200000e+00 : f32
    %15 = vector.broadcast %cst_5 : f32 to vector<16x128xf32>
    %16 = arith.subf %4, %15 : vector<16x128xf32>
    %cst_6 = arith.constant -1.800000e+00 : f32
    %17 = vector.broadcast %cst_6 : f32 to vector<16x128xf32>
    %18 = arith.subf %4, %17 : vector<16x128xf32>
    %cst_7 = arith.constant -1.400000e+00 : f32
    %19 = vector.broadcast %cst_7 : f32 to vector<16x128xf32>
    %20 = arith.subf %4, %19 : vector<16x128xf32>
    %cst_8 = arith.constant -1.000000e+00 : f32
    %21 = vector.broadcast %cst_8 : f32 to vector<16x128xf32>
    %22 = arith.subf %4, %21 : vector<16x128xf32>
    %cst_9 = arith.constant -6.000000e-01 : f32
    %23 = vector.broadcast %cst_9 : f32 to vector<16x128xf32>
    %24 = arith.subf %4, %23 : vector<16x128xf32>
    %cst_10 = arith.constant -2.000000e-01 : f32
    %25 = vector.broadcast %cst_10 : f32 to vector<16x128xf32>
    %26 = arith.subf %4, %25 : vector<16x128xf32>
    %cst_11 = arith.constant 2.000000e-01 : f32
    %27 = vector.broadcast %cst_11 : f32 to vector<16x128xf32>
    %28 = arith.subf %4, %27 : vector<16x128xf32>
    %cst_12 = arith.constant 6.000000e-01 : f32
    %29 = vector.broadcast %cst_12 : f32 to vector<16x128xf32>
    %30 = arith.subf %4, %29 : vector<16x128xf32>
    %cst_13 = arith.constant 1.000000e+00 : f32
    %31 = vector.broadcast %cst_13 : f32 to vector<16x128xf32>
    %32 = arith.subf %4, %31 : vector<16x128xf32>
    %cst_14 = arith.constant 1.400000e+00 : f32
    %33 = vector.broadcast %cst_14 : f32 to vector<16x128xf32>
    %34 = arith.subf %4, %33 : vector<16x128xf32>
    %cst_15 = arith.constant 1.800000e+00 : f32
    %35 = vector.broadcast %cst_15 : f32 to vector<16x128xf32>
    %36 = arith.subf %4, %35 : vector<16x128xf32>
    %cst_16 = arith.constant 2.200000e+00 : f32
    %37 = vector.broadcast %cst_16 : f32 to vector<16x128xf32>
    %38 = arith.subf %4, %37 : vector<16x128xf32>
    %cst_17 = arith.constant -2.200000e+00 : f32
    %39 = vector.broadcast %cst_17 : f32 to vector<16x128xf32>
    %40 = arith.cmpf oge, %4, %39 : vector<16x128xf32>
    %41 = arith.extui %40 : vector<16x128xi1> to vector<16x128xi32>
    %42 = arith.sitofp %41 : vector<16x128xi32> to vector<16x128xf32>
    %cst_18 = arith.constant -1.800000e+00 : f32
    %43 = vector.broadcast %cst_18 : f32 to vector<16x128xf32>
    %44 = arith.cmpf oge, %4, %43 : vector<16x128xf32>
    %45 = arith.extui %44 : vector<16x128xi1> to vector<16x128xi32>
    %46 = arith.sitofp %45 : vector<16x128xi32> to vector<16x128xf32>
    %cst_19 = arith.constant -1.400000e+00 : f32
    %47 = vector.broadcast %cst_19 : f32 to vector<16x128xf32>
    %48 = arith.cmpf oge, %4, %47 : vector<16x128xf32>
    %49 = arith.extui %48 : vector<16x128xi1> to vector<16x128xi32>
    %50 = arith.sitofp %49 : vector<16x128xi32> to vector<16x128xf32>
    %cst_20 = arith.constant -1.000000e+00 : f32
    %51 = vector.broadcast %cst_20 : f32 to vector<16x128xf32>
    %52 = arith.cmpf oge, %4, %51 : vector<16x128xf32>
    %53 = arith.extui %52 : vector<16x128xi1> to vector<16x128xi32>
    %54 = arith.sitofp %53 : vector<16x128xi32> to vector<16x128xf32>
    %cst_21 = arith.constant -6.000000e-01 : f32
    %55 = vector.broadcast %cst_21 : f32 to vector<16x128xf32>
    %56 = arith.cmpf oge, %4, %55 : vector<16x128xf32>
    %57 = arith.extui %56 : vector<16x128xi1> to vector<16x128xi32>
    %58 = arith.sitofp %57 : vector<16x128xi32> to vector<16x128xf32>
    %cst_22 = arith.constant -2.000000e-01 : f32
    %59 = vector.broadcast %cst_22 : f32 to vector<16x128xf32>
    %60 = arith.cmpf oge, %4, %59 : vector<16x128xf32>
    %61 = arith.extui %60 : vector<16x128xi1> to vector<16x128xi32>
    %62 = arith.sitofp %61 : vector<16x128xi32> to vector<16x128xf32>
    %cst_23 = arith.constant 2.000000e-01 : f32
    %63 = vector.broadcast %cst_23 : f32 to vector<16x128xf32>
    %64 = arith.cmpf oge, %4, %63 : vector<16x128xf32>
    %65 = arith.extui %64 : vector<16x128xi1> to vector<16x128xi32>
    %66 = arith.sitofp %65 : vector<16x128xi32> to vector<16x128xf32>
    %cst_24 = arith.constant 6.000000e-01 : f32
    %67 = vector.broadcast %cst_24 : f32 to vector<16x128xf32>
    %68 = arith.cmpf oge, %4, %67 : vector<16x128xf32>
    %69 = arith.extui %68 : vector<16x128xi1> to vector<16x128xi32>
    %70 = arith.sitofp %69 : vector<16x128xi32> to vector<16x128xf32>
    %cst_25 = arith.constant 1.000000e+00 : f32
    %71 = vector.broadcast %cst_25 : f32 to vector<16x128xf32>
    %72 = arith.cmpf oge, %4, %71 : vector<16x128xf32>
    %73 = arith.extui %72 : vector<16x128xi1> to vector<16x128xi32>
    %74 = arith.sitofp %73 : vector<16x128xi32> to vector<16x128xf32>
    %cst_26 = arith.constant 1.400000e+00 : f32
    %75 = vector.broadcast %cst_26 : f32 to vector<16x128xf32>
    %76 = arith.cmpf oge, %4, %75 : vector<16x128xf32>
    %77 = arith.extui %76 : vector<16x128xi1> to vector<16x128xi32>
    %78 = arith.sitofp %77 : vector<16x128xi32> to vector<16x128xf32>
    %cst_27 = arith.constant 1.800000e+00 : f32
    %79 = vector.broadcast %cst_27 : f32 to vector<16x128xf32>
    %80 = arith.cmpf oge, %4, %79 : vector<16x128xf32>
    %81 = arith.extui %80 : vector<16x128xi1> to vector<16x128xi32>
    %82 = arith.sitofp %81 : vector<16x128xi32> to vector<16x128xf32>
    %cst_28 = arith.constant 2.200000e+00 : f32
    %83 = vector.broadcast %cst_28 : f32 to vector<16x128xf32>
    %84 = arith.cmpf oge, %4, %83 : vector<16x128xf32>
    %85 = arith.extui %84 : vector<16x128xi1> to vector<16x128xi32>
    %86 = arith.sitofp %85 : vector<16x128xi32> to vector<16x128xf32>
    %87 = arith.subf %42, %46 : vector<16x128xf32>
    %88 = arith.subf %46, %50 : vector<16x128xf32>
    %89 = arith.subf %50, %54 : vector<16x128xf32>
    %90 = arith.subf %54, %58 : vector<16x128xf32>
    %91 = arith.subf %58, %62 : vector<16x128xf32>
    %92 = arith.subf %62, %66 : vector<16x128xf32>
    %93 = arith.subf %66, %70 : vector<16x128xf32>
    %94 = arith.subf %70, %74 : vector<16x128xf32>
    %95 = arith.subf %74, %78 : vector<16x128xf32>
    %96 = arith.subf %78, %82 : vector<16x128xf32>
    %97 = arith.subf %82, %86 : vector<16x128xf32>
    %98 = arith.mulf %16, %87 : vector<16x128xf32>
    %99 = arith.mulf %20, %88 : vector<16x128xf32>
    %100 = arith.subf %98, %99 : vector<16x128xf32>
    %101 = arith.mulf %18, %88 : vector<16x128xf32>
    %102 = arith.mulf %22, %89 : vector<16x128xf32>
    %103 = arith.subf %101, %102 : vector<16x128xf32>
    %104 = arith.mulf %20, %89 : vector<16x128xf32>
    %105 = arith.mulf %24, %90 : vector<16x128xf32>
    %106 = arith.subf %104, %105 : vector<16x128xf32>
    %107 = arith.mulf %22, %90 : vector<16x128xf32>
    %108 = arith.mulf %26, %91 : vector<16x128xf32>
    %109 = arith.subf %107, %108 : vector<16x128xf32>
    %110 = arith.mulf %24, %91 : vector<16x128xf32>
    %111 = arith.mulf %28, %92 : vector<16x128xf32>
    %112 = arith.subf %110, %111 : vector<16x128xf32>
    %113 = arith.mulf %26, %92 : vector<16x128xf32>
    %114 = arith.mulf %30, %93 : vector<16x128xf32>
    %115 = arith.subf %113, %114 : vector<16x128xf32>
    %116 = arith.mulf %28, %93 : vector<16x128xf32>
    %117 = arith.mulf %32, %94 : vector<16x128xf32>
    %118 = arith.subf %116, %117 : vector<16x128xf32>
    %119 = arith.mulf %30, %94 : vector<16x128xf32>
    %120 = arith.mulf %34, %95 : vector<16x128xf32>
    %121 = arith.subf %119, %120 : vector<16x128xf32>
    %122 = arith.mulf %32, %95 : vector<16x128xf32>
    %123 = arith.mulf %36, %96 : vector<16x128xf32>
    %124 = arith.subf %122, %123 : vector<16x128xf32>
    %125 = arith.mulf %34, %96 : vector<16x128xf32>
    %126 = arith.mulf %38, %97 : vector<16x128xf32>
    %127 = arith.subf %125, %126 : vector<16x128xf32>
    %128 = arith.mulf %16, %100 : vector<16x128xf32>
    %129 = arith.mulf %22, %103 : vector<16x128xf32>
    %130 = arith.subf %128, %129 : vector<16x128xf32>
    %131 = arith.mulf %18, %103 : vector<16x128xf32>
    %132 = arith.mulf %24, %106 : vector<16x128xf32>
    %133 = arith.subf %131, %132 : vector<16x128xf32>
    %134 = arith.mulf %20, %106 : vector<16x128xf32>
    %135 = arith.mulf %26, %109 : vector<16x128xf32>
    %136 = arith.subf %134, %135 : vector<16x128xf32>
    %137 = arith.mulf %22, %109 : vector<16x128xf32>
    %138 = arith.mulf %28, %112 : vector<16x128xf32>
    %139 = arith.subf %137, %138 : vector<16x128xf32>
    %140 = arith.mulf %24, %112 : vector<16x128xf32>
    %141 = arith.mulf %30, %115 : vector<16x128xf32>
    %142 = arith.subf %140, %141 : vector<16x128xf32>
    %143 = arith.mulf %26, %115 : vector<16x128xf32>
    %144 = arith.mulf %32, %118 : vector<16x128xf32>
    %145 = arith.subf %143, %144 : vector<16x128xf32>
    %146 = arith.mulf %28, %118 : vector<16x128xf32>
    %147 = arith.mulf %34, %121 : vector<16x128xf32>
    %148 = arith.subf %146, %147 : vector<16x128xf32>
    %149 = arith.mulf %30, %121 : vector<16x128xf32>
    %150 = arith.mulf %36, %124 : vector<16x128xf32>
    %151 = arith.subf %149, %150 : vector<16x128xf32>
    %152 = arith.mulf %32, %124 : vector<16x128xf32>
    %153 = arith.mulf %38, %127 : vector<16x128xf32>
    %154 = arith.subf %152, %153 : vector<16x128xf32>
    %155 = arith.mulf %16, %130 : vector<16x128xf32>
    %156 = arith.mulf %24, %133 : vector<16x128xf32>
    %157 = arith.subf %155, %156 : vector<16x128xf32>
    %158 = arith.truncf %157 : vector<16x128xf32> to vector<16x128xbf16>
    %c0_29 = arith.constant 0 : index
    %c256 = arith.constant 256 : index
    %159 = vector.load %arg7[%c0_29, %c256] : memref<16x2304xbf16, #tpu.memory_space<vmem>>, vector<16x128xbf16>
    tpu.vector_store %arg7[%c0_29, %c256], %158 {strides = array<i32>} : memref<16x2304xbf16, #tpu.memory_space<vmem>>, vector<16x128xbf16>,
    %160 = arith.mulf %18, %133 : vector<16x128xf32>
    %161 = arith.mulf %26, %136 : vector<16x128xf32>
    %162 = arith.subf %160, %161 : vector<16x128xf32>
    %163 = arith.truncf %162 : vector<16x128xf32> to vector<16x128xbf16>
    %c0_30 = arith.constant 0 : index
    %c512 = arith.constant 512 : index
    %164 = vector.load %arg7[%c0_30, %c512] : memref<16x2304xbf16, #tpu.memory_space<vmem>>, vector<16x128xbf16>
    tpu.vector_store %arg7[%c0_30, %c512], %163 {strides = array<i32>} : memref<16x2304xbf16, #tpu.memory_space<vmem>>, vector<16x128xbf16>,
    %165 = arith.mulf %20, %136 : vector<16x128xf32>
    %166 = arith.mulf %28, %139 : vector<16x128xf32>
    %167 = arith.subf %165, %166 : vector<16x128xf32>
    %168 = arith.truncf %167 : vector<16x128xf32> to vector<16x128xbf16>
    %c0_31 = arith.constant 0 : index
    %c768 = arith.constant 768 : index
    %169 = vector.load %arg7[%c0_31, %c768] : memref<16x2304xbf16, #tpu.memory_space<vmem>>, vector<16x128xbf16>
    tpu.vector_store %arg7[%c0_31, %c768], %168 {strides = array<i32>} : memref<16x2304xbf16, #tpu.memory_space<vmem>>, vector<16x128xbf16>,
    %170 = arith.mulf %22, %139 : vector<16x128xf32>
    %171 = arith.mulf %30, %142 : vector<16x128xf32>
    %172 = arith.subf %170, %171 : vector<16x128xf32>
    %173 = arith.truncf %172 : vector<16x128xf32> to vector<16x128xbf16>
    %c0_32 = arith.constant 0 : index
    %c1024 = arith.constant 1024 : index
    %174 = vector.load %arg7[%c0_32, %c1024] : memref<16x2304xbf16, #tpu.memory_space<vmem>>, vector<16x128xbf16>
    tpu.vector_store %arg7[%c0_32, %c1024], %173 {strides = array<i32>} : memref<16x2304xbf16, #tpu.memory_space<vmem>>, vector<16x128xbf16>,
    %175 = arith.mulf %24, %142 : vector<16x128xf32>
    %176 = arith.mulf %32, %145 : vector<16x128xf32>
    %177 = arith.subf %175, %176 : vector<16x128xf32>
    %178 = arith.truncf %177 : vector<16x128xf32> to vector<16x128xbf16>
    %c0_33 = arith.constant 0 : index
    %c1280 = arith.constant 1280 : index
    %179 = vector.load %arg7[%c0_33, %c1280] : memref<16x2304xbf16, #tpu.memory_space<vmem>>, vector<16x128xbf16>
    tpu.vector_store %arg7[%c0_33, %c1280], %178 {strides = array<i32>} : memref<16x2304xbf16, #tpu.memory_space<vmem>>, vector<16x128xbf16>,
    %180 = arith.mulf %26, %145 : vector<16x128xf32>
    %181 = arith.mulf %34, %148 : vector<16x128xf32>
    %182 = arith.subf %180, %181 : vector<16x128xf32>
    %183 = arith.truncf %182 : vector<16x128xf32> to vector<16x128xbf16>
    %c0_34 = arith.constant 0 : index
    %c1536 = arith.constant 1536 : index
    %184 = vector.load %arg7[%c0_34, %c1536] : memref<16x2304xbf16, #tpu.memory_space<vmem>>, vector<16x128xbf16>
    tpu.vector_store %arg7[%c0_34, %c1536], %183 {strides = array<i32>} : memref<16x2304xbf16, #tpu.memory_space<vmem>>, vector<16x128xbf16>,
    %185 = arith.mulf %28, %148 : vector<16x128xf32>
    %186 = arith.mulf %36, %151 : vector<16x128xf32>
    %187 = arith.subf %185, %186 : vector<16x128xf32>
    %188 = arith.truncf %187 : vector<16x128xf32> to vector<16x128xbf16>
    %c0_35 = arith.constant 0 : index
    %c1792 = arith.constant 1792 : index
    %189 = vector.load %arg7[%c0_35, %c1792] : memref<16x2304xbf16, #tpu.memory_space<vmem>>, vector<16x128xbf16>
    tpu.vector_store %arg7[%c0_35, %c1792], %188 {strides = array<i32>} : memref<16x2304xbf16, #tpu.memory_space<vmem>>, vector<16x128xbf16>,
    %190 = arith.mulf %30, %151 : vector<16x128xf32>
    %191 = arith.mulf %38, %154 : vector<16x128xf32>
    %192 = arith.subf %190, %191 : vector<16x128xf32>
    %193 = arith.truncf %192 : vector<16x128xf32> to vector<16x128xbf16>
    %c0_36 = arith.constant 0 : index
    %c2048 = arith.constant 2048 : index
    %194 = vector.load %arg7[%c0_36, %c2048] : memref<16x2304xbf16, #tpu.memory_space<vmem>>, vector<16x128xbf16>
    tpu.vector_store %arg7[%c0_36, %c2048], %193 {strides = array<i32>} : memref<16x2304xbf16, #tpu.memory_space<vmem>>, vector<16x128xbf16>,
    %c0_37 = arith.constant 0 : index
    %c128 = arith.constant 128 : index
    %195 = vector.load %arg1[%c0_37, %c128] : memref<16x256xf32, #tpu.memory_space<vmem>>, vector<16x128xf32>
    %cst_38 = arith.constant 5.000000e-01 : f32
    %196 = vector.broadcast %cst_38 : f32 to vector<16x128xf32>
    %197 = arith.mulf %196, %195 : vector<16x128xf32>
    %198 = math.tanh %197 : vector<16x128xf32>
    %cst_39 = arith.constant 5.000000e-01 : f32
    %199 = vector.broadcast %cst_39 : f32 to vector<16x128xf32>
    %200 = arith.mulf %199, %198 : vector<16x128xf32>
    %cst_40 = arith.constant 5.000000e-01 : f32
    %201 = vector.broadcast %cst_40 : f32 to vector<16x128xf32>
    %202 = arith.addf %200, %201 : vector<16x128xf32>
    %203 = arith.mulf %195, %202 : vector<16x128xf32>
    %204 = arith.truncf %203 : vector<16x128xf32> to vector<16x128xbf16>
    %c0_41 = arith.constant 0 : index
    %c128_42 = arith.constant 128 : index
    %205 = vector.load %arg7[%c0_41, %c128_42] : memref<16x2304xbf16, #tpu.memory_space<vmem>>, vector<16x128xbf16>
    tpu.vector_store %arg7[%c0_41, %c128_42], %204 {strides = array<i32>} : memref<16x2304xbf16, #tpu.memory_space<vmem>>, vector<16x128xbf16>,
    %cst_43 = arith.constant -2.200000e+00 : f32
    %206 = vector.broadcast %cst_43 : f32 to vector<16x128xf32>
    %207 = arith.subf %195, %206 : vector<16x128xf32>
    %cst_44 = arith.constant -1.800000e+00 : f32
    %208 = vector.broadcast %cst_44 : f32 to vector<16x128xf32>
    %209 = arith.subf %195, %208 : vector<16x128xf32>
    %cst_45 = arith.constant -1.400000e+00 : f32
    %210 = vector.broadcast %cst_45 : f32 to vector<16x128xf32>
    %211 = arith.subf %195, %210 : vector<16x128xf32>
    %cst_46 = arith.constant -1.000000e+00 : f32
    %212 = vector.broadcast %cst_46 : f32 to vector<16x128xf32>
    %213 = arith.subf %195, %212 : vector<16x128xf32>
    %cst_47 = arith.constant -6.000000e-01 : f32
    %214 = vector.broadcast %cst_47 : f32 to vector<16x128xf32>
    %215 = arith.subf %195, %214 : vector<16x128xf32>
    %cst_48 = arith.constant -2.000000e-01 : f32
    %216 = vector.broadcast %cst_48 : f32 to vector<16x128xf32>
    %217 = arith.subf %195, %216 : vector<16x128xf32>
    %cst_49 = arith.constant 2.000000e-01 : f32
    %218 = vector.broadcast %cst_49 : f32 to vector<16x128xf32>
    %219 = arith.subf %195, %218 : vector<16x128xf32>
    %cst_50 = arith.constant 6.000000e-01 : f32
    %220 = vector.broadcast %cst_50 : f32 to vector<16x128xf32>
    %221 = arith.subf %195, %220 : vector<16x128xf32>
    %cst_51 = arith.constant 1.000000e+00 : f32
    %222 = vector.broadcast %cst_51 : f32 to vector<16x128xf32>
    %223 = arith.subf %195, %222 : vector<16x128xf32>
    %cst_52 = arith.constant 1.400000e+00 : f32
    %224 = vector.broadcast %cst_52 : f32 to vector<16x128xf32>
    %225 = arith.subf %195, %224 : vector<16x128xf32>
    %cst_53 = arith.constant 1.800000e+00 : f32
    %226 = vector.broadcast %cst_53 : f32 to vector<16x128xf32>
    %227 = arith.subf %195, %226 : vector<16x128xf32>
    %cst_54 = arith.constant 2.200000e+00 : f32
    %228 = vector.broadcast %cst_54 : f32 to vector<16x128xf32>
    %229 = arith.subf %195, %228 : vector<16x128xf32>
    %cst_55 = arith.constant -2.200000e+00 : f32
    %230 = vector.broadcast %cst_55 : f32 to vector<16x128xf32>
    %231 = arith.cmpf oge, %195, %230 : vector<16x128xf32>
    %232 = arith.extui %231 : vector<16x128xi1> to vector<16x128xi32>
    %233 = arith.sitofp %232 : vector<16x128xi32> to vector<16x128xf32>
    %cst_56 = arith.constant -1.800000e+00 : f32
    %234 = vector.broadcast %cst_56 : f32 to vector<16x128xf32>
    %235 = arith.cmpf oge, %195, %234 : vector<16x128xf32>
    %236 = arith.extui %235 : vector<16x128xi1> to vector<16x128xi32>
    %237 = arith.sitofp %236 : vector<16x128xi32> to vector<16x128xf32>
    %cst_57 = arith.constant -1.400000e+00 : f32
    %238 = vector.broadcast %cst_57 : f32 to vector<16x128xf32>
    %239 = arith.cmpf oge, %195, %238 : vector<16x128xf32>
    %240 = arith.extui %239 : vector<16x128xi1> to vector<16x128xi32>
    %241 = arith.sitofp %240 : vector<16x128xi32> to vector<16x128xf32>
    %cst_58 = arith.constant -1.000000e+00 : f32
    %242 = vector.broadcast %cst_58 : f32 to vector<16x128xf32>
    %243 = arith.cmpf oge, %195, %242 : vector<16x128xf32>
    %244 = arith.extui %243 : vector<16x128xi1> to vector<16x128xi32>
    %245 = arith.sitofp %244 : vector<16x128xi32> to vector<16x128xf32>
    %cst_59 = arith.constant -6.000000e-01 : f32
    %246 = vector.broadcast %cst_59 : f32 to vector<16x128xf32>
    %247 = arith.cmpf oge, %195, %246 : vector<16x128xf32>
    %248 = arith.extui %247 : vector<16x128xi1> to vector<16x128xi32>
    %249 = arith.sitofp %248 : vector<16x128xi32> to vector<16x128xf32>
    %cst_60 = arith.constant -2.000000e-01 : f32
    %250 = vector.broadcast %cst_60 : f32 to vector<16x128xf32>
    %251 = arith.cmpf oge, %195, %250 : vector<16x128xf32>
    %252 = arith.extui %251 : vector<16x128xi1> to vector<16x128xi32>
    %253 = arith.sitofp %252 : vector<16x128xi32> to vector<16x128xf32>
    %cst_61 = arith.constant 2.000000e-01 : f32
    %254 = vector.broadcast %cst_61 : f32 to vector<16x128xf32>
    %255 = arith.cmpf oge, %195, %254 : vector<16x128xf32>
    %256 = arith.extui %255 : vector<16x128xi1> to vector<16x128xi32>
    %257 = arith.sitofp %256 : vector<16x128xi32> to vector<16x128xf32>
    %cst_62 = arith.constant 6.000000e-01 : f32
    %258 = vector.broadcast %cst_62 : f32 to vector<16x128xf32>
    %259 = arith.cmpf oge, %195, %258 : vector<16x128xf32>
    %260 = arith.extui %259 : vector<16x128xi1> to vector<16x128xi32>
    %261 = arith.sitofp %260 : vector<16x128xi32> to vector<16x128xf32>
    %cst_63 = arith.constant 1.000000e+00 : f32
    %262 = vector.broadcast %cst_63 : f32 to vector<16x128xf32>
    %263 = arith.cmpf oge, %195, %262 : vector<16x128xf32>
    %264 = arith.extui %263 : vector<16x128xi1> to vector<16x128xi32>
    %265 = arith.sitofp %264 : vector<16x128xi32> to vector<16x128xf32>
    %cst_64 = arith.constant 1.400000e+00 : f32
    %266 = vector.broadcast %cst_64 : f32 to vector<16x128xf32>
    %267 = arith.cmpf oge, %195, %266 : vector<16x128xf32>
    %268 = arith.extui %267 : vector<16x128xi1> to vector<16x128xi32>
    %269 = arith.sitofp %268 : vector<16x128xi32> to vector<16x128xf32>
    %cst_65 = arith.constant 1.800000e+00 : f32
    %270 = vector.broadcast %cst_65 : f32 to vector<16x128xf32>
    %271 = arith.cmpf oge, %195, %270 : vector<16x128xf32>
    %272 = arith.extui %271 : vector<16x128xi1> to vector<16x128xi32>
    %273 = arith.sitofp %272 : vector<16x128xi32> to vector<16x128xf32>
    %cst_66 = arith.constant 2.200000e+00 : f32
    %274 = vector.broadcast %cst_66 : f32 to vector<16x128xf32>
    %275 = arith.cmpf oge, %195, %274 : vector<16x128xf32>
    %276 = arith.extui %275 : vector<16x128xi1> to vector<16x128xi32>
    %277 = arith.sitofp %276 : vector<16x128xi32> to vector<16x128xf32>
    %278 = arith.subf %233, %237 : vector<16x128xf32>
    %279 = arith.subf %237, %241 : vector<16x128xf32>
    %280 = arith.subf %241, %245 : vector<16x128xf32>
    %281 = arith.subf %245, %249 : vector<16x128xf32>
    %282 = arith.subf %249, %253 : vector<16x128xf32>
    %283 = arith.subf %253, %257 : vector<16x128xf32>
    %284 = arith.subf %257, %261 : vector<16x128xf32>
    %285 = arith.subf %261, %265 : vector<16x128xf32>
    %286 = arith.subf %265, %269 : vector<16x128xf32>
    %287 = arith.subf %269, %273 : vector<16x128xf32>
    %288 = arith.subf %273, %277 : vector<16x128xf32>
    %289 = arith.mulf %207, %278 : vector<16x128xf32>
    %290 = arith.mulf %211, %279 : vector<16x128xf32>
    %291 = arith.subf %289, %290 : vector<16x128xf32>
    %292 = arith.mulf %209, %279 : vector<16x128xf32>
    %293 = arith.mulf %213, %280 : vector<16x128xf32>
    %294 = arith.subf %292, %293 : vector<16x128xf32>
    %295 = arith.mulf %211, %280 : vector<16x128xf32>
    %296 = arith.mulf %215, %281 : vector<16x128xf32>
    %297 = arith.subf %295, %296 : vector<16x128xf32>
    %298 = arith.mulf %213, %281 : vector<16x128xf32>
    %299 = arith.mulf %217, %282 : vector<16x128xf32>
    %300 = arith.subf %298, %299 : vector<16x128xf32>
    %301 = arith.mulf %215, %282 : vector<16x128xf32>
    %302 = arith.mulf %219, %283 : vector<16x128xf32>
    %303 = arith.subf %301, %302 : vector<16x128xf32>
    %304 = arith.mulf %217, %283 : vector<16x128xf32>
    %305 = arith.mulf %221, %284 : vector<16x128xf32>
    %306 = arith.subf %304, %305 : vector<16x128xf32>
    %307 = arith.mulf %219, %284 : vector<16x128xf32>
    %308 = arith.mulf %223, %285 : vector<16x128xf32>
    %309 = arith.subf %307, %308 : vector<16x128xf32>
    %310 = arith.mulf %221, %285 : vector<16x128xf32>
    %311 = arith.mulf %225, %286 : vector<16x128xf32>
    %312 = arith.subf %310, %311 : vector<16x128xf32>
    %313 = arith.mulf %223, %286 : vector<16x128xf32>
    %314 = arith.mulf %227, %287 : vector<16x128xf32>
    %315 = arith.subf %313, %314 : vector<16x128xf32>
    %316 = arith.mulf %225, %287 : vector<16x128xf32>
    %317 = arith.mulf %229, %288 : vector<16x128xf32>
    %318 = arith.subf %316, %317 : vector<16x128xf32>
    %319 = arith.mulf %207, %291 : vector<16x128xf32>
    %320 = arith.mulf %213, %294 : vector<16x128xf32>
    %321 = arith.subf %319, %320 : vector<16x128xf32>
    %322 = arith.mulf %209, %294 : vector<16x128xf32>
    %323 = arith.mulf %215, %297 : vector<16x128xf32>
    %324 = arith.subf %322, %323 : vector<16x128xf32>
    %325 = arith.mulf %211, %297 : vector<16x128xf32>
    %326 = arith.mulf %217, %300 : vector<16x128xf32>
    %327 = arith.subf %325, %326 : vector<16x128xf32>
    %328 = arith.mulf %213, %300 : vector<16x128xf32>
    %329 = arith.mulf %219, %303 : vector<16x128xf32>
    %330 = arith.subf %328, %329 : vector<16x128xf32>
    %331 = arith.mulf %215, %303 : vector<16x128xf32>
    %332 = arith.mulf %221, %306 : vector<16x128xf32>
    %333 = arith.subf %331, %332 : vector<16x128xf32>
    %334 = arith.mulf %217, %306 : vector<16x128xf32>
    %335 = arith.mulf %223, %309 : vector<16x128xf32>
    %336 = arith.subf %334, %335 : vector<16x128xf32>
    %337 = arith.mulf %219, %309 : vector<16x128xf32>
    %338 = arith.mulf %225, %312 : vector<16x128xf32>
    %339 = arith.subf %337, %338 : vector<16x128xf32>
    %340 = arith.mulf %221, %312 : vector<16x128xf32>
    %341 = arith.mulf %227, %315 : vector<16x128xf32>
    %342 = arith.subf %340, %341 : vector<16x128xf32>
    %343 = arith.mulf %223, %315 : vector<16x128xf32>
    %344 = arith.mulf %229, %318 : vector<16x128xf32>
    %345 = arith.subf %343, %344 : vector<16x128xf32>
    %346 = arith.mulf %207, %321 : vector<16x128xf32>
    %347 = arith.mulf %215, %324 : vector<16x128xf32>
    %348 = arith.subf %346, %347 : vector<16x128xf32>
    %349 = arith.truncf %348 : vector<16x128xf32> to vector<16x128xbf16>
    %c0_67 = arith.constant 0 : index
    %c384 = arith.constant 384 : index
    %350 = vector.load %arg7[%c0_67, %c384] : memref<16x2304xbf16, #tpu.memory_space<vmem>>, vector<16x128xbf16>
    tpu.vector_store %arg7[%c0_67, %c384], %349 {strides = array<i32>} : memref<16x2304xbf16, #tpu.memory_space<vmem>>, vector<16x128xbf16>,
    %351 = arith.mulf %209, %324 : vector<16x128xf32>
    %352 = arith.mulf %217, %327 : vector<16x128xf32>
    %353 = arith.subf %351, %352 : vector<16x128xf32>
    %354 = arith.truncf %353 : vector<16x128xf32> to vector<16x128xbf16>
    %c0_68 = arith.constant 0 : index
    %c640 = arith.constant 640 : index
    %355 = vector.load %arg7[%c0_68, %c640] : memref<16x2304xbf16, #tpu.memory_space<vmem>>, vector<16x128xbf16>
    tpu.vector_store %arg7[%c0_68, %c640], %354 {strides = array<i32>} : memref<16x2304xbf16, #tpu.memory_space<vmem>>, vector<16x128xbf16>,
    %356 = arith.mulf %211, %327 : vector<16x128xf32>
    %357 = arith.mulf %219, %330 : vector<16x128xf32>
    %358 = arith.subf %356, %357 : vector<16x128xf32>
    %359 = arith.truncf %358 : vector<16x128xf32> to vector<16x128xbf16>
    %c0_69 = arith.constant 0 : index
    %c896 = arith.constant 896 : index
    %360 = vector.load %arg7[%c0_69, %c896] : memref<16x2304xbf16, #tpu.memory_space<vmem>>, vector<16x128xbf16>
    tpu.vector_store %arg7[%c0_69, %c896], %359 {strides = array<i32>} : memref<16x2304xbf16, #tpu.memory_space<vmem>>, vector<16x128xbf16>,
    %361 = arith.mulf %213, %330 : vector<16x128xf32>
    %362 = arith.mulf %221, %333 : vector<16x128xf32>
    %363 = arith.subf %361, %362 : vector<16x128xf32>
    %364 = arith.truncf %363 : vector<16x128xf32> to vector<16x128xbf16>
    %c0_70 = arith.constant 0 : index
    %c1152 = arith.constant 1152 : index
    %365 = vector.load %arg7[%c0_70, %c1152] : memref<16x2304xbf16, #tpu.memory_space<vmem>>, vector<16x128xbf16>
    tpu.vector_store %arg7[%c0_70, %c1152], %364 {strides = array<i32>} : memref<16x2304xbf16, #tpu.memory_space<vmem>>, vector<16x128xbf16>,
    %366 = arith.mulf %215, %333 : vector<16x128xf32>
    %367 = arith.mulf %223, %336 : vector<16x128xf32>
    %368 = arith.subf %366, %367 : vector<16x128xf32>
    %369 = arith.truncf %368 : vector<16x128xf32> to vector<16x128xbf16>
    %c0_71 = arith.constant 0 : index
    %c1408 = arith.constant 1408 : index
    %370 = vector.load %arg7[%c0_71, %c1408] : memref<16x2304xbf16, #tpu.memory_space<vmem>>, vector<16x128xbf16>
    tpu.vector_store %arg7[%c0_71, %c1408], %369 {strides = array<i32>} : memref<16x2304xbf16, #tpu.memory_space<vmem>>, vector<16x128xbf16>,
    %371 = arith.mulf %217, %336 : vector<16x128xf32>
    %372 = arith.mulf %225, %339 : vector<16x128xf32>
    %373 = arith.subf %371, %372 : vector<16x128xf32>
    %374 = arith.truncf %373 : vector<16x128xf32> to vector<16x128xbf16>
    %c0_72 = arith.constant 0 : index
    %c1664 = arith.constant 1664 : index
    %375 = vector.load %arg7[%c0_72, %c1664] : memref<16x2304xbf16, #tpu.memory_space<vmem>>, vector<16x128xbf16>
    tpu.vector_store %arg7[%c0_72, %c1664], %374 {strides = array<i32>} : memref<16x2304xbf16, #tpu.memory_space<vmem>>, vector<16x128xbf16>,
    %376 = arith.mulf %219, %339 : vector<16x128xf32>
    %377 = arith.mulf %227, %342 : vector<16x128xf32>
    %378 = arith.subf %376, %377 : vector<16x128xf32>
    %379 = arith.truncf %378 : vector<16x128xf32> to vector<16x128xbf16>
    %c0_73 = arith.constant 0 : index
    %c1920 = arith.constant 1920 : index
    %380 = vector.load %arg7[%c0_73, %c1920] : memref<16x2304xbf16, #tpu.memory_space<vmem>>, vector<16x128xbf16>
    tpu.vector_store %arg7[%c0_73, %c1920], %379 {strides = array<i32>} : memref<16x2304xbf16, #tpu.memory_space<vmem>>, vector<16x128xbf16>,
    %381 = arith.mulf %221, %342 : vector<16x128xf32>
    %382 = arith.mulf %229, %345 : vector<16x128xf32>
    %383 = arith.subf %381, %382 : vector<16x128xf32>
    %384 = arith.truncf %383 : vector<16x128xf32> to vector<16x128xbf16>
    %c0_74 = arith.constant 0 : index
    %c2176 = arith.constant 2176 : index
    %385 = vector.load %arg7[%c0_74, %c2176] : memref<16x2304xbf16, #tpu.memory_space<vmem>>, vector<16x128xbf16>
    tpu.vector_store %arg7[%c0_74, %c2176], %384 {strides = array<i32>} : memref<16x2304xbf16, #tpu.memory_space<vmem>>, vector<16x128xbf16>,
    %c0_i32_75 = arith.constant 0 : i32
    %386 = tpu.memref_slice %arg10[%c0_i32_75] : memref<2x!tpu.dma_semaphore, #tpu.memory_space<semaphore_mem>> -> memref<1x!tpu.dma_semaphore, #tpu.memory_space<semaphore_mem>>
    %387 = tpu.memref_squeeze %386 : memref<1x!tpu.dma_semaphore, #tpu.memory_space<semaphore_mem>> -> memref<!tpu.dma_semaphore, #tpu.memory_space<semaphore_mem>>
    tpu.wait_dma2 semaphore(%387 : memref<!tpu.dma_semaphore, #tpu.memory_space<semaphore_mem>>) src(%arg2 : memref<2304x128xbf16, #tpu.memory_space<any>>) dst(%arg8 : memref<2304x128xbf16, #tpu.memory_space<vmem>>)
    %c0_76 = arith.constant 0 : index
    %c0_77 = arith.constant 0 : index
    %388 = vector.load %arg7[%c0_76, %c0_77] : memref<16x2304xbf16, #tpu.memory_space<vmem>>, vector<16x2304xbf16>
    %c0_78 = arith.constant 0 : index
    %c0_79 = arith.constant 0 : index
    %389 = vector.load %arg8[%c0_78, %c0_79] : memref<2304x128xbf16, #tpu.memory_space<vmem>>, vector<2304x128xbf16>
    %cst_80 = arith.constant dense<0.000000e+00> : vector<16x128xf32>
    %390 = tpu.matmul %388, %389, %cst_80 {dimension_numbers = #tpu.dot_dimension_numbers<[1], [0], [0], [1], [0, 0, 1, 1], [], []>} : vector<16x2304xbf16>, vector<2304x128xbf16>, vector<16x128xf32> -> vector<16x128xf32>
    %cst_81 = arith.constant 0.000000e+00 : f32
    %391 = vector.broadcast %cst_81 : f32 to vector<16x128xf32>
    %392 = arith.maximumf %390, %391 : vector<16x128xf32>
    %cst_82 = arith.constant dense<0.000000e+00> : vector<128xf32>
    %393 = vector.multi_reduction <add>, %392, %cst_82 [0] : vector<16x128xf32> to vector<128xf32>
    %394 = vector.shape_cast %393 : vector<128xf32> to vector<1x128xf32>
    %cst_83 = arith.constant 1.600000e+01 : f32
    %395 = vector.broadcast %cst_83 : f32 to vector<1x128xf32>
    %396 = arith.divf %394, %395 : vector<1x128xf32>
    %397 = vector.broadcast %396 : vector<1x128xf32> to vector<16x128xf32>
    %398 = arith.subf %392, %397 : vector<16x128xf32>
    %399 = arith.mulf %398, %398 : vector<16x128xf32>
    %cst_84 = arith.constant dense<0.000000e+00> : vector<128xf32>
    %400 = vector.multi_reduction <add>, %399, %cst_84 [0] : vector<16x128xf32> to vector<128xf32>
    %401 = vector.shape_cast %400 : vector<128xf32> to vector<1x128xf32>
    %cst_85 = arith.constant 1.600000e+01 : f32
    %402 = vector.broadcast %cst_85 : f32 to vector<1x128xf32>
    %403 = arith.divf %401, %402 : vector<1x128xf32>
    %c0_86 = arith.constant 0 : index
    %c0_87 = arith.constant 0 : index
    %404 = vector.load %arg4[%c0_86, %c0_87] : memref<1x128xf32, #tpu.memory_space<vmem>>, vector<1x128xf32>
    %cst_88 = arith.constant 9.99999974E-6 : f32
    %405 = vector.broadcast %cst_88 : f32 to vector<1x128xf32>
    %406 = arith.addf %403, %405 : vector<1x128xf32>
    %407 = math.rsqrt %406 : vector<1x128xf32>
    %408 = arith.mulf %404, %407 : vector<1x128xf32>
    %409 = vector.broadcast %408 : vector<1x128xf32> to vector<16x128xf32>
    %410 = arith.mulf %398, %409 : vector<16x128xf32>
    %c0_89 = arith.constant 0 : index
    %c0_90 = arith.constant 0 : index
    %411 = vector.load %arg5[%c0_89, %c0_90] : memref<1x128xf32, #tpu.memory_space<vmem>>, vector<1x128xf32>
    %412 = vector.broadcast %411 : vector<1x128xf32> to vector<16x128xf32>
    %413 = arith.addf %410, %412 : vector<16x128xf32>
    %cst_91 = arith.constant 5.000000e-01 : f32
    %414 = vector.broadcast %cst_91 : f32 to vector<16x128xf32>
    %415 = arith.mulf %414, %413 : vector<16x128xf32>
    %416 = math.tanh %415 : vector<16x128xf32>
    %cst_92 = arith.constant 5.000000e-01 : f32
    %417 = vector.broadcast %cst_92 : f32 to vector<16x128xf32>
    %418 = arith.mulf %417, %416 : vector<16x128xf32>
    %cst_93 = arith.constant 5.000000e-01 : f32
    %419 = vector.broadcast %cst_93 : f32 to vector<16x128xf32>
    %420 = arith.addf %418, %419 : vector<16x128xf32>
    %421 = arith.mulf %413, %420 : vector<16x128xf32>
    %422 = arith.truncf %421 : vector<16x128xf32> to vector<16x128xbf16>
    %c0_94 = arith.constant 0 : index
    %c0_95 = arith.constant 0 : index
    %423 = vector.load %arg7[%c0_94, %c0_95] : memref<16x2304xbf16, #tpu.memory_space<vmem>>, vector<16x128xbf16>
    tpu.vector_store %arg7[%c0_94, %c0_95], %422 {strides = array<i32>} : memref<16x2304xbf16, #tpu.memory_space<vmem>>, vector<16x128xbf16>,
    %cst_96 = arith.constant -2.200000e+00 : f32
    %424 = vector.broadcast %cst_96 : f32 to vector<16x128xf32>
    %425 = arith.subf %413, %424 : vector<16x128xf32>
    %cst_97 = arith.constant -1.800000e+00 : f32
    %426 = vector.broadcast %cst_97 : f32 to vector<16x128xf32>
    %427 = arith.subf %413, %426 : vector<16x128xf32>
    %cst_98 = arith.constant -1.400000e+00 : f32
    %428 = vector.broadcast %cst_98 : f32 to vector<16x128xf32>
    %429 = arith.subf %413, %428 : vector<16x128xf32>
    %cst_99 = arith.constant -1.000000e+00 : f32
    %430 = vector.broadcast %cst_99 : f32 to vector<16x128xf32>
    %431 = arith.subf %413, %430 : vector<16x128xf32>
    %cst_100 = arith.constant -6.000000e-01 : f32
    %432 = vector.broadcast %cst_100 : f32 to vector<16x128xf32>
    %433 = arith.subf %413, %432 : vector<16x128xf32>
    %cst_101 = arith.constant -2.000000e-01 : f32
    %434 = vector.broadcast %cst_101 : f32 to vector<16x128xf32>
    %435 = arith.subf %413, %434 : vector<16x128xf32>
    %cst_102 = arith.constant 2.000000e-01 : f32
    %436 = vector.broadcast %cst_102 : f32 to vector<16x128xf32>
    %437 = arith.subf %413, %436 : vector<16x128xf32>
    %cst_103 = arith.constant 6.000000e-01 : f32
    %438 = vector.broadcast %cst_103 : f32 to vector<16x128xf32>
    %439 = arith.subf %413, %438 : vector<16x128xf32>
    %cst_104 = arith.constant 1.000000e+00 : f32
    %440 = vector.broadcast %cst_104 : f32 to vector<16x128xf32>
    %441 = arith.subf %413, %440 : vector<16x128xf32>
    %cst_105 = arith.constant 1.400000e+00 : f32
    %442 = vector.broadcast %cst_105 : f32 to vector<16x128xf32>
    %443 = arith.subf %413, %442 : vector<16x128xf32>
    %cst_106 = arith.constant 1.800000e+00 : f32
    %444 = vector.broadcast %cst_106 : f32 to vector<16x128xf32>
    %445 = arith.subf %413, %444 : vector<16x128xf32>
    %cst_107 = arith.constant 2.200000e+00 : f32
    %446 = vector.broadcast %cst_107 : f32 to vector<16x128xf32>
    %447 = arith.subf %413, %446 : vector<16x128xf32>
    %cst_108 = arith.constant -2.200000e+00 : f32
    %448 = vector.broadcast %cst_108 : f32 to vector<16x128xf32>
    %449 = arith.cmpf oge, %413, %448 : vector<16x128xf32>
    %450 = arith.extui %449 : vector<16x128xi1> to vector<16x128xi32>
    %451 = arith.sitofp %450 : vector<16x128xi32> to vector<16x128xf32>
    %cst_109 = arith.constant -1.800000e+00 : f32
    %452 = vector.broadcast %cst_109 : f32 to vector<16x128xf32>
    %453 = arith.cmpf oge, %413, %452 : vector<16x128xf32>
    %454 = arith.extui %453 : vector<16x128xi1> to vector<16x128xi32>
    %455 = arith.sitofp %454 : vector<16x128xi32> to vector<16x128xf32>
    %cst_110 = arith.constant -1.400000e+00 : f32
    %456 = vector.broadcast %cst_110 : f32 to vector<16x128xf32>
    %457 = arith.cmpf oge, %413, %456 : vector<16x128xf32>
    %458 = arith.extui %457 : vector<16x128xi1> to vector<16x128xi32>
    %459 = arith.sitofp %458 : vector<16x128xi32> to vector<16x128xf32>
    %cst_111 = arith.constant -1.000000e+00 : f32
    %460 = vector.broadcast %cst_111 : f32 to vector<16x128xf32>
    %461 = arith.cmpf oge, %413, %460 : vector<16x128xf32>
    %462 = arith.extui %461 : vector<16x128xi1> to vector<16x128xi32>
    %463 = arith.sitofp %462 : vector<16x128xi32> to vector<16x128xf32>
    %cst_112 = arith.constant -6.000000e-01 : f32
    %464 = vector.broadcast %cst_112 : f32 to vector<16x128xf32>
    %465 = arith.cmpf oge, %413, %464 : vector<16x128xf32>
    %466 = arith.extui %465 : vector<16x128xi1> to vector<16x128xi32>
    %467 = arith.sitofp %466 : vector<16x128xi32> to vector<16x128xf32>
    %cst_113 = arith.constant -2.000000e-01 : f32
    %468 = vector.broadcast %cst_113 : f32 to vector<16x128xf32>
    %469 = arith.cmpf oge, %413, %468 : vector<16x128xf32>
    %470 = arith.extui %469 : vector<16x128xi1> to vector<16x128xi32>
    %471 = arith.sitofp %470 : vector<16x128xi32> to vector<16x128xf32>
    %cst_114 = arith.constant 2.000000e-01 : f32
    %472 = vector.broadcast %cst_114 : f32 to vector<16x128xf32>
    %473 = arith.cmpf oge, %413, %472 : vector<16x128xf32>
    %474 = arith.extui %473 : vector<16x128xi1> to vector<16x128xi32>
    %475 = arith.sitofp %474 : vector<16x128xi32> to vector<16x128xf32>
    %cst_115 = arith.constant 6.000000e-01 : f32
    %476 = vector.broadcast %cst_115 : f32 to vector<16x128xf32>
    %477 = arith.cmpf oge, %413, %476 : vector<16x128xf32>
    %478 = arith.extui %477 : vector<16x128xi1> to vector<16x128xi32>
    %479 = arith.sitofp %478 : vector<16x128xi32> to vector<16x128xf32>
    %cst_116 = arith.constant 1.000000e+00 : f32
    %480 = vector.broadcast %cst_116 : f32 to vector<16x128xf32>
    %481 = arith.cmpf oge, %413, %480 : vector<16x128xf32>
    %482 = arith.extui %481 : vector<16x128xi1> to vector<16x128xi32>
    %483 = arith.sitofp %482 : vector<16x128xi32> to vector<16x128xf32>
    %cst_117 = arith.constant 1.400000e+00 : f32
    %484 = vector.broadcast %cst_117 : f32 to vector<16x128xf32>
    %485 = arith.cmpf oge, %413, %484 : vector<16x128xf32>
    %486 = arith.extui %485 : vector<16x128xi1> to vector<16x128xi32>
    %487 = arith.sitofp %486 : vector<16x128xi32> to vector<16x128xf32>
    %cst_118 = arith.constant 1.800000e+00 : f32
    %488 = vector.broadcast %cst_118 : f32 to vector<16x128xf32>
    %489 = arith.cmpf oge, %413, %488 : vector<16x128xf32>
    %490 = arith.extui %489 : vector<16x128xi1> to vector<16x128xi32>
    %491 = arith.sitofp %490 : vector<16x128xi32> to vector<16x128xf32>
    %cst_119 = arith.constant 2.200000e+00 : f32
    %492 = vector.broadcast %cst_119 : f32 to vector<16x128xf32>
    %493 = arith.cmpf oge, %413, %492 : vector<16x128xf32>
    %494 = arith.extui %493 : vector<16x128xi1> to vector<16x128xi32>
    %495 = arith.sitofp %494 : vector<16x128xi32> to vector<16x128xf32>
    %496 = arith.subf %451, %455 : vector<16x128xf32>
    %497 = arith.subf %455, %459 : vector<16x128xf32>
    %498 = arith.subf %459, %463 : vector<16x128xf32>
    %499 = arith.subf %463, %467 : vector<16x128xf32>
    %500 = arith.subf %467, %471 : vector<16x128xf32>
    %501 = arith.subf %471, %475 : vector<16x128xf32>
    %502 = arith.subf %475, %479 : vector<16x128xf32>
    %503 = arith.subf %479, %483 : vector<16x128xf32>
    %504 = arith.subf %483, %487 : vector<16x128xf32>
    %505 = arith.subf %487, %491 : vector<16x128xf32>
    %506 = arith.subf %491, %495 : vector<16x128xf32>
    %507 = arith.mulf %425, %496 : vector<16x128xf32>
    %508 = arith.mulf %429, %497 : vector<16x128xf32>
    %509 = arith.subf %507, %508 : vector<16x128xf32>
    %510 = arith.mulf %427, %497 : vector<16x128xf32>
    %511 = arith.mulf %431, %498 : vector<16x128xf32>
    %512 = arith.subf %510, %511 : vector<16x128xf32>
    %513 = arith.mulf %429, %498 : vector<16x128xf32>
    %514 = arith.mulf %433, %499 : vector<16x128xf32>
    %515 = arith.subf %513, %514 : vector<16x128xf32>
    %516 = arith.mulf %431, %499 : vector<16x128xf32>
    %517 = arith.mulf %435, %500 : vector<16x128xf32>
    %518 = arith.subf %516, %517 : vector<16x128xf32>
    %519 = arith.mulf %433, %500 : vector<16x128xf32>
    %520 = arith.mulf %437, %501 : vector<16x128xf32>
    %521 = arith.subf %519, %520 : vector<16x128xf32>
    %522 = arith.mulf %435, %501 : vector<16x128xf32>
    %523 = arith.mulf %439, %502 : vector<16x128xf32>
    %524 = arith.subf %522, %523 : vector<16x128xf32>
    %525 = arith.mulf %437, %502 : vector<16x128xf32>
    %526 = arith.mulf %441, %503 : vector<16x128xf32>
    %527 = arith.subf %525, %526 : vector<16x128xf32>
    %528 = arith.mulf %439, %503 : vector<16x128xf32>
    %529 = arith.mulf %443, %504 : vector<16x128xf32>
    %530 = arith.subf %528, %529 : vector<16x128xf32>
    %531 = arith.mulf %441, %504 : vector<16x128xf32>
    %532 = arith.mulf %445, %505 : vector<16x128xf32>
    %533 = arith.subf %531, %532 : vector<16x128xf32>
    %534 = arith.mulf %443, %505 : vector<16x128xf32>
    %535 = arith.mulf %447, %506 : vector<16x128xf32>
    %536 = arith.subf %534, %535 : vector<16x128xf32>
    %537 = arith.mulf %425, %509 : vector<16x128xf32>
    %538 = arith.mulf %431, %512 : vector<16x128xf32>
    %539 = arith.subf %537, %538 : vector<16x128xf32>
    %540 = arith.mulf %427, %512 : vector<16x128xf32>
    %541 = arith.mulf %433, %515 : vector<16x128xf32>
    %542 = arith.subf %540, %541 : vector<16x128xf32>
    %543 = arith.mulf %429, %515 : vector<16x128xf32>
    %544 = arith.mulf %435, %518 : vector<16x128xf32>
    %545 = arith.subf %543, %544 : vector<16x128xf32>
    %546 = arith.mulf %431, %518 : vector<16x128xf32>
    %547 = arith.mulf %437, %521 : vector<16x128xf32>
    %548 = arith.subf %546, %547 : vector<16x128xf32>
    %549 = arith.mulf %433, %521 : vector<16x128xf32>
    %550 = arith.mulf %439, %524 : vector<16x128xf32>
    %551 = arith.subf %549, %550 : vector<16x128xf32>
    %552 = arith.mulf %435, %524 : vector<16x128xf32>
    %553 = arith.mulf %441, %527 : vector<16x128xf32>
    %554 = arith.subf %552, %553 : vector<16x128xf32>
    %555 = arith.mulf %437, %527 : vector<16x128xf32>
    %556 = arith.mulf %443, %530 : vector<16x128xf32>
    %557 = arith.subf %555, %556 : vector<16x128xf32>
    %558 = arith.mulf %439, %530 : vector<16x128xf32>
    %559 = arith.mulf %445, %533 : vector<16x128xf32>
    %560 = arith.subf %558, %559 : vector<16x128xf32>
    %561 = arith.mulf %441, %533 : vector<16x128xf32>
    %562 = arith.mulf %447, %536 : vector<16x128xf32>
    %563 = arith.subf %561, %562 : vector<16x128xf32>
    %564 = arith.mulf %425, %539 : vector<16x128xf32>
    %565 = arith.mulf %433, %542 : vector<16x128xf32>
    %566 = arith.subf %564, %565 : vector<16x128xf32>
    %567 = arith.truncf %566 : vector<16x128xf32> to vector<16x128xbf16>
    %c0_120 = arith.constant 0 : index
    %c128_121 = arith.constant 128 : index
    %568 = vector.load %arg7[%c0_120, %c128_121] : memref<16x2304xbf16, #tpu.memory_space<vmem>>, vector<16x128xbf16>
    tpu.vector_store %arg7[%c0_120, %c128_121], %567 {strides = array<i32>} : memref<16x2304xbf16, #tpu.memory_space<vmem>>, vector<16x128xbf16>,
    %569 = arith.mulf %427, %542 : vector<16x128xf32>
    %570 = arith.mulf %435, %545 : vector<16x128xf32>
    %571 = arith.subf %569, %570 : vector<16x128xf32>
    %572 = arith.truncf %571 : vector<16x128xf32> to vector<16x128xbf16>
    %c0_122 = arith.constant 0 : index
    %c256_123 = arith.constant 256 : index
    %573 = vector.load %arg7[%c0_122, %c256_123] : memref<16x2304xbf16, #tpu.memory_space<vmem>>, vector<16x128xbf16>
    tpu.vector_store %arg7[%c0_122, %c256_123], %572 {strides = array<i32>} : memref<16x2304xbf16, #tpu.memory_space<vmem>>, vector<16x128xbf16>,
    %574 = arith.mulf %429, %545 : vector<16x128xf32>
    %575 = arith.mulf %437, %548 : vector<16x128xf32>
    %576 = arith.subf %574, %575 : vector<16x128xf32>
    %577 = arith.truncf %576 : vector<16x128xf32> to vector<16x128xbf16>
    %c0_124 = arith.constant 0 : index
    %c384_125 = arith.constant 384 : index
    %578 = vector.load %arg7[%c0_124, %c384_125] : memref<16x2304xbf16, #tpu.memory_space<vmem>>, vector<16x128xbf16>
    tpu.vector_store %arg7[%c0_124, %c384_125], %577 {strides = array<i32>} : memref<16x2304xbf16, #tpu.memory_space<vmem>>, vector<16x128xbf16>,
    %579 = arith.mulf %431, %548 : vector<16x128xf32>
    %580 = arith.mulf %439, %551 : vector<16x128xf32>
    %581 = arith.subf %579, %580 : vector<16x128xf32>
    %582 = arith.truncf %581 : vector<16x128xf32> to vector<16x128xbf16>
    %c0_126 = arith.constant 0 : index
    %c512_127 = arith.constant 512 : index
    %583 = vector.load %arg7[%c0_126, %c512_127] : memref<16x2304xbf16, #tpu.memory_space<vmem>>, vector<16x128xbf16>
    tpu.vector_store %arg7[%c0_126, %c512_127], %582 {strides = array<i32>} : memref<16x2304xbf16, #tpu.memory_space<vmem>>, vector<16x128xbf16>,
    %584 = arith.mulf %433, %551 : vector<16x128xf32>
    %585 = arith.mulf %441, %554 : vector<16x128xf32>
    %586 = arith.subf %584, %585 : vector<16x128xf32>
    %587 = arith.truncf %586 : vector<16x128xf32> to vector<16x128xbf16>
    %c0_128 = arith.constant 0 : index
    %c640_129 = arith.constant 640 : index
    %588 = vector.load %arg7[%c0_128, %c640_129] : memref<16x2304xbf16, #tpu.memory_space<vmem>>, vector<16x128xbf16>
    tpu.vector_store %arg7[%c0_128, %c640_129], %587 {strides = array<i32>} : memref<16x2304xbf16, #tpu.memory_space<vmem>>, vector<16x128xbf16>,
    %589 = arith.mulf %435, %554 : vector<16x128xf32>
    %590 = arith.mulf %443, %557 : vector<16x128xf32>
    %591 = arith.subf %589, %590 : vector<16x128xf32>
    %592 = arith.truncf %591 : vector<16x128xf32> to vector<16x128xbf16>
    %c0_130 = arith.constant 0 : index
    %c768_131 = arith.constant 768 : index
    %593 = vector.load %arg7[%c0_130, %c768_131] : memref<16x2304xbf16, #tpu.memory_space<vmem>>, vector<16x128xbf16>
    tpu.vector_store %arg7[%c0_130, %c768_131], %592 {strides = array<i32>} : memref<16x2304xbf16, #tpu.memory_space<vmem>>, vector<16x128xbf16>,
    %594 = arith.mulf %437, %557 : vector<16x128xf32>
    %595 = arith.mulf %445, %560 : vector<16x128xf32>
    %596 = arith.subf %594, %595 : vector<16x128xf32>
    %597 = arith.truncf %596 : vector<16x128xf32> to vector<16x128xbf16>
    %c0_132 = arith.constant 0 : index
    %c896_133 = arith.constant 896 : index
    %598 = vector.load %arg7[%c0_132, %c896_133] : memref<16x2304xbf16, #tpu.memory_space<vmem>>, vector<16x128xbf16>
    tpu.vector_store %arg7[%c0_132, %c896_133], %597 {strides = array<i32>} : memref<16x2304xbf16, #tpu.memory_space<vmem>>, vector<16x128xbf16>,
    %599 = arith.mulf %439, %560 : vector<16x128xf32>
    %600 = arith.mulf %447, %563 : vector<16x128xf32>
    %601 = arith.subf %599, %600 : vector<16x128xf32>
    %602 = arith.truncf %601 : vector<16x128xf32> to vector<16x128xbf16>
    %c0_134 = arith.constant 0 : index
    %c1024_135 = arith.constant 1024 : index
    %603 = vector.load %arg7[%c0_134, %c1024_135] : memref<16x2304xbf16, #tpu.memory_space<vmem>>, vector<16x128xbf16>
    tpu.vector_store %arg7[%c0_134, %c1024_135], %602 {strides = array<i32>} : memref<16x2304xbf16, #tpu.memory_space<vmem>>, vector<16x128xbf16>,
    %c1_i32_136 = arith.constant 1 : i32
    %604 = tpu.memref_slice %arg10[%c1_i32_136] : memref<2x!tpu.dma_semaphore, #tpu.memory_space<semaphore_mem>> -> memref<1x!tpu.dma_semaphore, #tpu.memory_space<semaphore_mem>>
    %605 = tpu.memref_squeeze %604 : memref<1x!tpu.dma_semaphore, #tpu.memory_space<semaphore_mem>> -> memref<!tpu.dma_semaphore, #tpu.memory_space<semaphore_mem>>
    tpu.wait_dma2 semaphore(%605 : memref<!tpu.dma_semaphore, #tpu.memory_space<semaphore_mem>>) src(%arg3 : memref<1152x128xbf16, #tpu.memory_space<any>>) dst(%arg9 : memref<1152x128xbf16, #tpu.memory_space<vmem>>)
    %c0_137 = arith.constant 0 : index
    %c0_138 = arith.constant 0 : index
    %606 = vector.load %arg7[%c0_137, %c0_138] : memref<16x2304xbf16, #tpu.memory_space<vmem>>, vector<16x1152xbf16>
    %c0_139 = arith.constant 0 : index
    %c0_140 = arith.constant 0 : index
    %607 = vector.load %arg9[%c0_139, %c0_140] : memref<1152x128xbf16, #tpu.memory_space<vmem>>, vector<1152x128xbf16>
    %cst_141 = arith.constant dense<0.000000e+00> : vector<16x128xf32>
    %608 = tpu.matmul %606, %607, %cst_141 {dimension_numbers = #tpu.dot_dimension_numbers<[1], [0], [0], [1], [0, 0, 1, 1], [], []>} : vector<16x1152xbf16>, vector<1152x128xbf16>, vector<16x128xf32> -> vector<16x128xf32>
    %cst_142 = arith.constant 0.000000e+00 : f32
    %609 = vector.broadcast %cst_142 : f32 to vector<16x128xf32>
    %610 = arith.maximumf %608, %609 : vector<16x128xf32>
    %c0_143 = arith.constant 0 : index
    %c0_144 = arith.constant 0 : index
    %611 = vector.load %arg6[%c0_143, %c0_144] : memref<16x128xf32, #tpu.memory_space<vmem>>, vector<16x128xf32>
    tpu.vector_store %arg6[%c0_143, %c0_144], %610 {strides = array<i32>} : memref<16x128xf32, #tpu.memory_space<vmem>>, vector<16x128xf32>,
    return
  }
  func.func @transform_0(%arg0: i32) -> (i32, i32) {
    %c0_i32 = arith.constant 0 : i32
    %c0_i32_0 = arith.constant 0 : i32
    %c0_i32_1 = arith.constant 0 : i32
    return %c0_i32, %c0_i32_0 : i32, i32
  }
  func.func @transform_3(%arg0: i32) -> (i32, i32) {
    %c0_i32 = arith.constant 0 : i32
    %c0_i32_0 = arith.constant 0 : i32
    %c0_i32_1 = arith.constant 0 : i32
    return %c0_i32, %c0_i32_0 : i32, i32
  }
  func.func @transform_4(%arg0: i32) -> (i32, i32) {
    %c0_i32 = arith.constant 0 : i32
    %c0_i32_0 = arith.constant 0 : i32
    %c0_i32_1 = arith.constant 0 : i32
    return %c0_i32, %c0_i32_0 : i32, i32
  }
  func.func @transform_5(%arg0: i32) -> (i32, i32) {
    %c0_i32 = arith.constant 0 : i32
    %c0_i32_0 = arith.constant 0 : i32
    %c0_i32_1 = arith.constant 0 : i32
    return %c0_i32, %c0_i32_0 : i32, i32
  }
}

</mosaic_0001>

<llo_original>
// kernel: tpu_custom_call.1
$region0: #{tpu_custom_call.1}
  #allocation0 [shape = 'u32[]', space=smem, size = 0x4, offset = 0x4, fixed_abs, tag = 'smem constant byte address 0x4 - core index']
  #allocation1 [shape = 'u32[144,128]{1,0:T(1,128)}', space=vmem, size = 0x12000, scoped, tag = 'internal scratch']
  #allocation2 [shape = 'bf16[16,2304]{1,0:T(16,128)(2,1)}', space=vmem, size = 0x12000, scoped, tag = 'scratch operand']
  #allocation3 [shape = 'bf16[2304,128]{1,0:T(16,128)(2,1)}', space=vmem, size = 0x90000, scoped, tag = 'scratch operand']
  #allocation4 [shape = 'bf16[1152,128]{1,0:T(16,128)(2,1)}', space=vmem, size = 0x48000, scoped, tag = 'scratch operand']
  #allocation5 [shape = 's32[2]{0}', space=sflag, size = 0x8, scoped, tag = 'scratch operand']
  #allocation10 [shape = 's32[]', space=sflag, size = 0x4, offset = 0, fixed_abs, tag = 'sflag constant byte address 0x0 - dummy sync flag']
  #allocation11 [shape = 's32[]', space=sflag, size = 0x4, offset = 0, fixed_abs, tag = 'sflag constant byte address 0x0 - dummy sync flag']
  #allocation12 [shape = 'u32[]', space=smem, size = 0x4, offset = 0x44, fixed_abs, tag = 'smem constant byte address 0x44 - assertion arg 0']
  #allocation13 [shape = 'u32[]', space=smem, size = 0x4, offset = 0x48, fixed_abs, tag = 'smem constant byte address 0x48 - assertion arg 1']
  #allocation14 [shape = 's32[]', space=sflag, size = 0x4, offset = 0, fixed_abs, tag = 'sflag constant byte address 0x0 - dummy sync flag']
  #allocation15 [shape = 's32[]', space=sflag, size = 0x4, offset = 0, fixed_abs, tag = 'sflag constant byte address 0x0 - dummy sync flag']
  %s0 = inlined_call_operand.hbm [shape: f32[16,256], index: 0, kind: input, shape index: {}]
  %s1 = inlined_call_operand.hbm [shape: bf16[2304,128], index: 1, kind: input, shape index: {}]
  %s2 = inlined_call_operand.hbm [shape: bf16[1152,128], index: 2, kind: input, shape index: {}]
  %s3 = inlined_call_operand.vmem [shape: f32[1,128], index: 3, kind: input, shape index: {}]
  %s4 = inlined_call_operand.vmem [shape: f32[1,128], index: 4, kind: input, shape index: {}]
  %s5 = inlined_call_operand.hbm [shape: f32[16,128], index: 5, kind: output, shape index: {}]
  %s6 = sld [smem:[#allocation0]]
  $region34: #{tpu_custom_call.1} parent=0
    _
  %s8 = ssub.s32 1, %s6
  %s9 = scalar_select 0, %s8, %s6
  $region1: #{tpu_custom_call.1} parent=0
    #allocation6 [shape = 'u8[16384]{0}', space=vmem, size = 0x4000, scoped, tag = 'input window, operand 0, single buffered']
    #allocation7 [shape = 's32[1]{0}', space=sflag, size = 0x4, scoped, tag = 'scoped memory for tpu_custom_call.1']
    #allocation8 [shape = 's32[1]{0}', space=sflag, size = 0x4, scoped, tag = 'scoped memory for tpu_custom_call.1']
    #allocation9 [shape = 'u8[8192]{0}', space=vmem, size = 0x2000, scoped, tag = 'output window, operand 0, single buffered']
    %10 = vsyncpa [#allocation7], 0
    %11 = vsyncpa [#allocation8], 0
    // Predicated region
    $region2: #{tpu_custom_call.1} parent=1 // pred_check
      _
    $region3: #{tpu_custom_call.1} parent=1 // pred_check_branch
      %13 = sbr.rel (0) target = $region5
    $region4: #{tpu_custom_call.1} parent=1 // pred_region
      %s15 = ssub.s32 512, 512
      %16 = vsyncadd [#allocation7], %s15
      %s17 = sshll.u32 [#allocation6], 4
      %s18 = int_to_ptr.vmem [resolvable:$true] %s17
      %23 = dma.hbm_to_vmem [thread:$0]  %s0, 512, %s18, [#allocation7], 256, 256, 16
    $region5: #{tpu_custom_call.1} parent=1 // pred_fallthru
      _
    // Predicated region
    $region6: #{tpu_custom_call.1} parent=1 // pred_check
      _
    $region7: #{tpu_custom_call.1} parent=1 // pred_check_branch
      %25 = sbr.rel (0) target = $region9
    $region8: #{tpu_custom_call.1} parent=1 // pred_region
      _
    $region9: #{tpu_custom_call.1} parent=1 // pred_fallthru
      _
    // Predicated region
    $region10: #{tpu_custom_call.1} parent=1 // pred_check
      _
    $region11: #{tpu_custom_call.1} parent=1 // pred_check_branch
      %27 = sbr.rel (0) target = $region13
    $region12: #{tpu_custom_call.1} parent=1 // pred_region
      _
    $region13: #{tpu_custom_call.1} parent=1 // pred_fallthru
      _
    // Predicated region
    $region14: #{tpu_custom_call.1} parent=1 // pred_check
      _
    $region15: #{tpu_custom_call.1} parent=1 // pred_check_branch
      %29 = sbr.rel (0) target = $region17
    $region16: #{tpu_custom_call.1} parent=1 // pred_region
      %30 = dma.done [#allocation7], 512
    $region17: #{tpu_custom_call.1} parent=1 // pred_fallthru
      _
    // Predicated region
    $region18: #{tpu_custom_call.1} parent=1 // pred_check
      _
    $region19: #{tpu_custom_call.1} parent=1 // pred_check_branch
      %33 = sbr.rel target = $region21
    $region20: #{tpu_custom_call.1} parent=1 // pred_region
      %34 = sst [smem:[#allocation12]] [#allocation11]
      %35 = sst [smem:[#allocation13]] [#allocation10]
    $region21: #{tpu_custom_call.1} parent=1 // pred_fallthru
      _
    %37 = shalt.err (0)
    %s39 = sshll.u32 [#allocation3], 4
    %s40 = int_to_ptr.vmem [resolvable:$true] %s39
    %42 = dma.hbm_to_vmem [thread:$0]  %s1, 18432, %s40, [#allocation5]
    %s43 = scalar_lea.sflag [#allocation5], 1
    // Predicated region
    $region22: #{tpu_custom_call.1} parent=1 // pred_check
      _
    $region23: #{tpu_custom_call.1} parent=1 // pred_check_branch
      %45 = sbr.rel target = $region25
    $region24: #{tpu_custom_call.1} parent=1 // pred_region
      %46 = sst [smem:[#allocation12]] [#allocation15]
      %47 = sst [smem:[#allocation13]] [#allocation14]
    $region25: #{tpu_custom_call.1} parent=1 // pred_fallthru
      _
    %49 = shalt.err (0)
    %s51 = sshll.u32 [#allocation4], 4
    %s52 = int_to_ptr.vmem [resolvable:$true] %s51
    %54 = dma.hbm_to_vmem [thread:$0]  %s2, 9216, %s52, %s43
    %v55 = vld [vmem:[#allocation6] sm:$0xff]
    %v56 = vld [vmem:[#allocation6 + $0x10] sm:$0xff]
    %v57 = vmul.f32 %v55, 0.5
    %v58 = vmul.f32 %v56, 0.5
    %v59 = vtanh.pop %v57
    %v60 = vtanh.pop %v58
    %v61 = vmul.f32 %v59, 0.5
    %v62 = vmul.f32 %v60, 0.5
    %v63 = vadd.f32 %v61, 0.5
    %v64 = vadd.f32 %v62, 0.5
    %v65 = vmul.f32 %v55, %v63
    %v66 = vmul.f32 %v56, %v64
    %v67 = vpack.c.bf16 %v66, %v65
    %68 = vst [vmem:[#allocation2] sm:$0xff] %v67
    %v69 = vsub.f32 %v55, -2.2
    %v70 = vsub.f32 %v56, -2.2
    %v71 = vsub.f32 %v55, -1.8
    %v72 = vsub.f32 %v56, -1.8
    %v73 = vsub.f32 %v55, -1.4
    %v74 = vsub.f32 %v56, -1.4
    %v75 = vsub.f32 %v55, -1.0
    %v76 = vsub.f32 %v56, -1.0
    %v77 = vsub.f32 %v55, -0.6
    %v78 = vsub.f32 %v56, -0.6
    %v79 = vsub.f32 %v55, -0.2
    %v80 = vsub.f32 %v56, -0.2
    %v81 = vsub.f32 %v55, 0.2
    %v82 = vsub.f32 %v56, 0.2
    %v83 = vsub.f32 %v55, 0.6
    %v84 = vsub.f32 %v56, 0.6
    %v85 = vsub.f32 %v55, 1.0
    %v86 = vsub.f32 %v56, 1.0
    %v87 = vsub.f32 %v55, 1.4
    %v88 = vsub.f32 %v56, 1.4
    %v89 = vsub.f32 %v55, 1.8
    %v90 = vsub.f32 %v56, 1.8
    %v91 = vsub.f32 %v55, 2.2
    %v92 = vsub.f32 %v56, 2.2
    %vm93 = vcmp.ge.f32.partialorder %v55, -2.2
    %vm94 = vcmp.ge.f32.partialorder %v56, -2.2
    %v95 = vsel %vm93, 1, 0
    %v96 = vsel %vm94, 1, 0
    %v97 = vcvt.s32.f32 %v95
    %v98 = vcvt.s32.f32 %v96
    %vm99 = vcmp.ge.f32.partialorder %v55, -1.8
    %vm100 = vcmp.ge.f32.partialorder %v56, -1.8
    %v101 = vsel %vm99, 1, 0
    %v102 = vsel %vm100, 1, 0
    %v103 = vcvt.s32.f32 %v101
    %v104 = vcvt.s32.f32 %v102
    %vm105 = vcmp.ge.f32.partialorder %v55, -1.4
    %vm106 = vcmp.ge.f32.partialorder %v56, -1.4
    %v107 = vsel %vm105, 1, 0
    %v108 = vsel %vm106, 1, 0
    %v109 = vcvt.s32.f32 %v107
    %v110 = vcvt.s32.f32 %v108
    %vm111 = vcmp.ge.f32.partialorder %v55, -1.0
    %vm112 = vcmp.ge.f32.partialorder %v56, -1.0
    %v113 = vsel %vm111, 1, 0
    %v114 = vsel %vm112, 1, 0
    %v115 = vcvt.s32.f32 %v113
    %v116 = vcvt.s32.f32 %v114
    %vm117 = vcmp.ge.f32.partialorder %v55, -0.6
    %vm118 = vcmp.ge.f32.partialorder %v56, -0.6
    %v119 = vsel %vm117, 1, 0
    %v120 = vsel %vm118, 1, 0
    %v121 = vcvt.s32.f32 %v119
    %v122 = vcvt.s32.f32 %v120
    %vm123 = vcmp.ge.f32.partialorder %v55, -0.2
    %vm124 = vcmp.ge.f32.partialorder %v56, -0.2
    %v125 = vsel %vm123, 1, 0
    %v126 = vsel %vm124, 1, 0
    %v127 = vcvt.s32.f32 %v125
    %v128 = vcvt.s32.f32 %v126
    %vm129 = vcmp.ge.f32.partialorder %v55, 0.2
    %vm130 = vcmp.ge.f32.partialorder %v56, 0.2
    %v131 = vsel %vm129, 1, 0
    %v132 = vsel %vm130, 1, 0
    %v133 = vcvt.s32.f32 %v131
    %v134 = vcvt.s32.f32 %v132
    %vm135 = vcmp.ge.f32.partialorder %v55, 0.6
    %vm136 = vcmp.ge.f32.partialorder %v56, 0.6
    %v137 = vsel %vm135, 1, 0
    %v138 = vsel %vm136, 1, 0
    %v139 = vcvt.s32.f32 %v137
    %v140 = vcvt.s32.f32 %v138
    %vm141 = vcmp.ge.f32.partialorder %v55, 1.0
    %vm142 = vcmp.ge.f32.partialorder %v56, 1.0
    %v143 = vsel %vm141, 1, 0
    %v144 = vsel %vm142, 1, 0
    %v145 = vcvt.s32.f32 %v143
    %v146 = vcvt.s32.f32 %v144
    %vm147 = vcmp.ge.f32.partialorder %v55, 1.4
    %vm148 = vcmp.ge.f32.partialorder %v56, 1.4
    %v149 = vsel %vm147, 1, 0
    %v150 = vsel %vm148, 1, 0
    %v151 = vcvt.s32.f32 %v149
    %v152 = vcvt.s32.f32 %v150
    %vm153 = vcmp.ge.f32.partialorder %v55, 1.8
    %vm154 = vcmp.ge.f32.partialorder %v56, 1.8
    %v155 = vsel %vm153, 1, 0
    %v156 = vsel %vm154, 1, 0
    %v157 = vcvt.s32.f32 %v155
    %v158 = vcvt.s32.f32 %v156
    %vm159 = vcmp.ge.f32.partialorder %v55, 2.2
    %vm160 = vcmp.ge.f32.partialorder %v56, 2.2
    %v161 = vsel %vm159, 1, 0
    %v162 = vsel %vm160, 1, 0
    %v163 = vcvt.s32.f32 %v161
    %v164 = vcvt.s32.f32 %v162
    %v165 = vsub.f32 %v97, %v103
    %v166 = vsub.f32 %v98, %v104
    %v167 = vsub.f32 %v103, %v109
    %v168 = vsub.f32 %v104, %v110
    %v169 = vsub.f32 %v109, %v115
    %v170 = vsub.f32 %v110, %v116
    %v171 = vsub.f32 %v115, %v121
    %v172 = vsub.f32 %v116, %v122
    %v173 = vsub.f32 %v121, %v127
    %v174 = vsub.f32 %v122, %v128
    %v175 = vsub.f32 %v127, %v133
    %v176 = vsub.f32 %v128, %v134
    %v177 = vsub.f32 %v133, %v139
    %v178 = vsub.f32 %v134, %v140
    %v179 = vsub.f32 %v139, %v145
    %v180 = vsub.f32 %v140, %v146
    %v181 = vsub.f32 %v145, %v151
    %v182 = vsub.f32 %v146, %v152
    %v183 = vsub.f32 %v151, %v157
    %v184 = vsub.f32 %v152, %v158
    %v185 = vsub.f32 %v157, %v163
    %v186 = vsub.f32 %v158, %v164
    %v187 = vmul.f32 %v69, %v165
    %v188 = vmul.f32 %v70, %v166
    %v189 = vmul.f32 %v73, %v167
    %v190 = vmul.f32 %v74, %v168
    %v191 = vsub.f32 %v187, %v189
    %v192 = vsub.f32 %v188, %v190
    %v193 = vmul.f32 %v71, %v167
    %v194 = vmul.f32 %v72, %v168
    %v195 = vmul.f32 %v75, %v169
    %v196 = vmul.f32 %v76, %v170
    %v197 = vsub.f32 %v193, %v195
    %v198 = vsub.f32 %v194, %v196
    %v199 = vmul.f32 %v73, %v169
    %v200 = vmul.f32 %v74, %v170
    %v201 = vmul.f32 %v77, %v171
    %v202 = vmul.f32 %v78, %v172
    %v203 = vsub.f32 %v199, %v201
    %v204 = vsub.f32 %v200, %v202
    %v205 = vmul.f32 %v75, %v171
    %v206 = vmul.f32 %v76, %v172
    %v207 = vmul.f32 %v79, %v173
    %v208 = vmul.f32 %v80, %v174
    %v209 = vsub.f32 %v205, %v207
    %v210 = vsub.f32 %v206, %v208
    %v211 = vmul.f32 %v77, %v173
    %v212 = vmul.f32 %v78, %v174
    %v213 = vmul.f32 %v81, %v175
    %v214 = vmul.f32 %v82, %v176
    %v215 = vsub.f32 %v211, %v213
    %v216 = vsub.f32 %v212, %v214
    %v217 = vmul.f32 %v79, %v175
    %v218 = vmul.f32 %v80, %v176
    %v219 = vmul.f32 %v83, %v177
    %v220 = vmul.f32 %v84, %v178
    %v221 = vsub.f32 %v217, %v219
    %v222 = vsub.f32 %v218, %v220
    %v223 = vmul.f32 %v81, %v177
    %v224 = vmul.f32 %v82, %v178
    %v225 = vmul.f32 %v85, %v179
    %v226 = vmul.f32 %v86, %v180
    %v227 = vsub.f32 %v223, %v225
    %v228 = vsub.f32 %v224, %v226
    %v229 = vmul.f32 %v83, %v179
    %v230 = vmul.f32 %v84, %v180
    %v231 = vmul.f32 %v87, %v181
    %v232 = vmul.f32 %v88, %v182
    %v233 = vsub.f32 %v229, %v231
    %v234 = vsub.f32 %v230, %v232
    %v235 = vmul.f32 %v85, %v181
    %v236 = vmul.f32 %v86, %v182
    %v237 = vmul.f32 %v89, %v183
    %v238 = vmul.f32 %v90, %v184
    %v239 = vsub.f32 %v235, %v237
    %v240 = vsub.f32 %v236, %v238
    %v241 = vmul.f32 %v87, %v183
    %v242 = vmul.f32 %v88, %v184
    %v243 = vmul.f32 %v91, %v185
    %v244 = vmul.f32 %v92, %v186
    %v245 = vsub.f32 %v241, %v243
    %v246 = vsub.f32 %v242, %v244
    %v247 = vmul.f32 %v69, %v191
    %v248 = vmul.f32 %v70, %v192
    %v249 = vmul.f32 %v75, %v197
    %v250 = vmul.f32 %v76, %v198
    %v251 = vsub.f32 %v247, %v249
    %v252 = vsub.f32 %v248, %v250
    %v253 = vmul.f32 %v71, %v197
    %v254 = vmul.f32 %v72, %v198
    %v255 = vmul.f32 %v77, %v203
    %v256 = vmul.f32 %v78, %v204
    %v257 = vsub.f32 %v253, %v255
    %v258 = vsub.f32 %v254, %v256
    %v259 = vmul.f32 %v73, %v203
    %v260 = vmul.f32 %v74, %v204
    %v261 = vmul.f32 %v79, %v209
    %v262 = vmul.f32 %v80, %v210
    %v263 = vsub.f32 %v259, %v261
    %v264 = vsub.f32 %v260, %v262
    %v265 = vmul.f32 %v75, %v209
    %v266 = vmul.f32 %v76, %v210
    %v267 = vmul.f32 %v81, %v215
    %v268 = vmul.f32 %v82, %v216
    %v269 = vsub.f32 %v265, %v267
    %v270 = vsub.f32 %v266, %v268
    %v271 = vmul.f32 %v77, %v215
    %v272 = vmul.f32 %v78, %v216
    %v273 = vmul.f32 %v83, %v221
    %v274 = vmul.f32 %v84, %v222
    %v275 = vsub.f32 %v271, %v273
    %v276 = vsub.f32 %v272, %v274
    %v277 = vmul.f32 %v79, %v221
    %v278 = vmul.f32 %v80, %v222
    %v279 = vmul.f32 %v85, %v227
    %v280 = vmul.f32 %v86, %v228
    %v281 = vsub.f32 %v277, %v279
    %v282 = vsub.f32 %v278, %v280
    %v283 = vmul.f32 %v81, %v227
    %v284 = vmul.f32 %v82, %v228
    %v285 = vmul.f32 %v87, %v233
    %v286 = vmul.f32 %v88, %v234
    %v287 = vsub.f32 %v283, %v285
    %v288 = vsub.f32 %v284, %v286
    %v289 = vmul.f32 %v83, %v233
    %v290 = vmul.f32 %v84, %v234
    %v291 = vmul.f32 %v89, %v239
    %v292 = vmul.f32 %v90, %v240
    %v293 = vsub.f32 %v289, %v291
    %v294 = vsub.f32 %v290, %v292
    %v295 = vmul.f32 %v85, %v239
    %v296 = vmul.f32 %v86, %v240
    %v297 = vmul.f32 %v91, %v245
    %v298 = vmul.f32 %v92, %v246
    %v299 = vsub.f32 %v295, %v297
    %v300 = vsub.f32 %v296, %v298
    %v301 = vmul.f32 %v69, %v251
    %v302 = vmul.f32 %v70, %v252
    %v303 = vmul.f32 %v77, %v257
    %v304 = vmul.f32 %v78, %v258
    %v305 = vsub.f32 %v301, %v303
    %v306 = vsub.f32 %v302, %v304
    %v307 = vpack.c.bf16 %v306, %v305
    %308 = vst [vmem:[#allocation2 + $0x10] sm:$0xff] %v307
    %v309 = vmul.f32 %v71, %v257
    %v310 = vmul.f32 %v72, %v258
    %v311 = vmul.f32 %v79, %v263
    %v312 = vmul.f32 %v80, %v264
    %v313 = vsub.f32 %v309, %v311
    %v314 = vsub.f32 %v310, %v312
    %v315 = vpack.c.bf16 %v314, %v313
    %316 = vst [vmem:[#allocation2 + $0x20] sm:$0xff] %v315
    %v317 = vmul.f32 %v73, %v263
    %v318 = vmul.f32 %v74, %v264
    %v319 = vmul.f32 %v81, %v269
    %v320 = vmul.f32 %v82, %v270
    %v321 = vsub.f32 %v317, %v319
    %v322 = vsub.f32 %v318, %v320
    %v323 = vpack.c.bf16 %v322, %v321
    %324 = vst [vmem:[#allocation2 + $0x30] sm:$0xff] %v323
    %v325 = vmul.f32 %v75, %v269
    %v326 = vmul.f32 %v76, %v270
    %v327 = vmul.f32 %v83, %v275
    %v328 = vmul.f32 %v84, %v276
    %v329 = vsub.f32 %v325, %v327
    %v330 = vsub.f32 %v326, %v328
    %v331 = vpack.c.bf16 %v330, %v329
    %332 = vst [vmem:[#allocation2 + $0x40] sm:$0xff] %v331
    %v333 = vmul.f32 %v77, %v275
    %v334 = vmul.f32 %v78, %v276
    %v335 = vmul.f32 %v85, %v281
    %v336 = vmul.f32 %v86, %v282
    %v337 = vsub.f32 %v333, %v335
    %v338 = vsub.f32 %v334, %v336
    %v339 = vpack.c.bf16 %v338, %v337
    %340 = vst [vmem:[#allocation2 + $0x50] sm:$0xff] %v339
    %v341 = vmul.f32 %v79, %v281
    %v342 = vmul.f32 %v80, %v282
    %v343 = vmul.f32 %v87, %v287
    %v344 = vmul.f32 %v88, %v288
    %v345 = vsub.f32 %v341, %v343
    %v346 = vsub.f32 %v342, %v344
    %v347 = vpack.c.bf16 %v346, %v345
    %348 = vst [vmem:[#allocation2 + $0x60] sm:$0xff] %v347
    %v349 = vmul.f32 %v81, %v287
    %v350 = vmul.f32 %v82, %v288
    %v351 = vmul.f32 %v89, %v293
    %v352 = vmul.f32 %v90, %v294
    %v353 = vsub.f32 %v349, %v351
    %v354 = vsub.f32 %v350, %v352
    %v355 = vpack.c.bf16 %v354, %v353
    %356 = vst [vmem:[#allocation2 + $0x70] sm:$0xff] %v355
    %v357 = vmul.f32 %v83, %v293
    %v358 = vmul.f32 %v84, %v294
    %v359 = vmul.f32 %v91, %v299
    %v360 = vmul.f32 %v92, %v300
    %v361 = vsub.f32 %v357, %v359
    %v362 = vsub.f32 %v358, %v360
    %v363 = vpack.c.bf16 %v362, %v361
    %364 = vst [vmem:[#allocation2 + $0x80] sm:$0xff] %v363
    %v365 = vld [vmem:[#allocation6 + $0x8] sm:$0xff]
    %v366 = vld [vmem:[#allocation6 + $0x18] sm:$0xff]
    %v367 = vmul.f32 %v365, 0.5
    %v368 = vmul.f32 %v366, 0.5
    %v369 = vtanh.pop %v367
    %v370 = vtanh.pop %v368
    %v371 = vmul.f32 %v369, 0.5
    %v372 = vmul.f32 %v370, 0.5
    %v373 = vadd.f32 %v371, 0.5
    %v374 = vadd.f32 %v372, 0.5
    %v375 = vmul.f32 %v365, %v373
    %v376 = vmul.f32 %v366, %v374
    %v377 = vpack.c.bf16 %v376, %v375
    %378 = vst [vmem:[#allocation2 + $0x8] sm:$0xff] %v377
    %v379 = vsub.f32 %v365, -2.2
    %v380 = vsub.f32 %v366, -2.2
    %v381 = vsub.f32 %v365, -1.8
    %v382 = vsub.f32 %v366, -1.8
    %v383 = vsub.f32 %v365, -1.4
    %v384 = vsub.f32 %v366, -1.4
    %v385 = vsub.f32 %v365, -1.0
    %v386 = vsub.f32 %v366, -1.0
    %v387 = vsub.f32 %v365, -0.6
    %v388 = vsub.f32 %v366, -0.6
    %v389 = vsub.f32 %v365, -0.2
    %v390 = vsub.f32 %v366, -0.2
    %v391 = vsub.f32 %v365, 0.2
    %v392 = vsub.f32 %v366, 0.2
    %v393 = vsub.f32 %v365, 0.6
    %v394 = vsub.f32 %v366, 0.6
    %v395 = vsub.f32 %v365, 1.0
    %v396 = vsub.f32 %v366, 1.0
    %v397 = vsub.f32 %v365, 1.4
    %v398 = vsub.f32 %v366, 1.4
    %v399 = vsub.f32 %v365, 1.8
    %v400 = vsub.f32 %v366, 1.8
    %v401 = vsub.f32 %v365, 2.2
    %v402 = vsub.f32 %v366, 2.2
    %vm403 = vcmp.ge.f32.partialorder %v365, -2.2
    %vm404 = vcmp.ge.f32.partialorder %v366, -2.2
    %v405 = vsel %vm403, 1, 0
    %v406 = vsel %vm404, 1, 0
    %v407 = vcvt.s32.f32 %v405
    %v408 = vcvt.s32.f32 %v406
    %vm409 = vcmp.ge.f32.partialorder %v365, -1.8
    %vm410 = vcmp.ge.f32.partialorder %v366, -1.8
    %v411 = vsel %vm409, 1, 0
    %v412 = vsel %vm410, 1, 0
    %v413 = vcvt.s32.f32 %v411
    %v414 = vcvt.s32.f32 %v412
    %vm415 = vcmp.ge.f32.partialorder %v365, -1.4
    %vm416 = vcmp.ge.f32.partialorder %v366, -1.4
    %v417 = vsel %vm415, 1, 0
    %v418 = vsel %vm416, 1, 0
    %v419 = vcvt.s32.f32 %v417
    %v420 = vcvt.s32.f32 %v418
    %vm421 = vcmp.ge.f32.partialorder %v365, -1.0
    %vm422 = vcmp.ge.f32.partialorder %v366, -1.0
    %v423 = vsel %vm421, 1, 0
    %v424 = vsel %vm422, 1, 0
    %v425 = vcvt.s32.f32 %v423
    %v426 = vcvt.s32.f32 %v424
    %vm427 = vcmp.ge.f32.partialorder %v365, -0.6
    %vm428 = vcmp.ge.f32.partialorder %v366, -0.6
    %v429 = vsel %vm427, 1, 0
    %v430 = vsel %vm428, 1, 0
    %v431 = vcvt.s32.f32 %v429
    %v432 = vcvt.s32.f32 %v430
    %vm433 = vcmp.ge.f32.partialorder %v365, -0.2
    %vm434 = vcmp.ge.f32.partialorder %v366, -0.2
    %v435 = vsel %vm433, 1, 0
    %v436 = vsel %vm434, 1, 0
    %v437 = vcvt.s32.f32 %v435
    %v438 = vcvt.s32.f32 %v436
    %vm439 = vcmp.ge.f32.partialorder %v365, 0.2
    %vm440 = vcmp.ge.f32.partialorder %v366, 0.2
    %v441 = vsel %vm439, 1, 0
    %v442 = vsel %vm440, 1, 0
    %v443 = vcvt.s32.f32 %v441
    %v444 = vcvt.s32.f32 %v442
    %vm445 = vcmp.ge.f32.partialorder %v365, 0.6
    %vm446 = vcmp.ge.f32.partialorder %v366, 0.6
    %v447 = vsel %vm445, 1, 0
    %v448 = vsel %vm446, 1, 0
    %v449 = vcvt.s32.f32 %v447
    %v450 = vcvt.s32.f32 %v448
    %vm451 = vcmp.ge.f32.partialorder %v365, 1.0
    %vm452 = vcmp.ge.f32.partialorder %v366, 1.0
    %v453 = vsel %vm451, 1, 0
    %v454 = vsel %vm452, 1, 0
    %v455 = vcvt.s32.f32 %v453
    %v456 = vcvt.s32.f32 %v454
    %vm457 = vcmp.ge.f32.partialorder %v365, 1.4
    %vm458 = vcmp.ge.f32.partialorder %v366, 1.4
    %v459 = vsel %vm457, 1, 0
    %v460 = vsel %vm458, 1, 0
    %v461 = vcvt.s32.f32 %v459
    %v462 = vcvt.s32.f32 %v460
    %vm463 = vcmp.ge.f32.partialorder %v365, 1.8
    %vm464 = vcmp.ge.f32.partialorder %v366, 1.8
    %v465 = vsel %vm463, 1, 0
    %v466 = vsel %vm464, 1, 0
    %v467 = vcvt.s32.f32 %v465
    %v468 = vcvt.s32.f32 %v466
    %vm469 = vcmp.ge.f32.partialorder %v365, 2.2
    %vm470 = vcmp.ge.f32.partialorder %v366, 2.2
    %v471 = vsel %vm469, 1, 0
    %v472 = vsel %vm470, 1, 0
    %v473 = vcvt.s32.f32 %v471
    %v474 = vcvt.s32.f32 %v472
    %v475 = vsub.f32 %v407, %v413
    %v476 = vsub.f32 %v408, %v414
    %v477 = vsub.f32 %v413, %v419
    %v478 = vsub.f32 %v414, %v420
    %v479 = vsub.f32 %v419, %v425
    %v480 = vsub.f32 %v420, %v426
    %v481 = vsub.f32 %v425, %v431
    %v482 = vsub.f32 %v426, %v432
    %v483 = vsub.f32 %v431, %v437
    %v484 = vsub.f32 %v432, %v438
    %v485 = vsub.f32 %v437, %v443
    %v486 = vsub.f32 %v438, %v444
    %v487 = vsub.f32 %v443, %v449
    %v488 = vsub.f32 %v444, %v450
    %v489 = vsub.f32 %v449, %v455
    %v490 = vsub.f32 %v450, %v456
    %v491 = vsub.f32 %v455, %v461
    %v492 = vsub.f32 %v456, %v462
    %v493 = vsub.f32 %v461, %v467
    %v494 = vsub.f32 %v462, %v468
    %v495 = vsub.f32 %v467, %v473
    %v496 = vsub.f32 %v468, %v474
    %v497 = vmul.f32 %v379, %v475
    %v498 = vmul.f32 %v380, %v476
    %v499 = vmul.f32 %v383, %v477
    %v500 = vmul.f32 %v384, %v478
    %v501 = vsub.f32 %v497, %v499
    %v502 = vsub.f32 %v498, %v500
    %v503 = vmul.f32 %v381, %v477
    %v504 = vmul.f32 %v382, %v478
    %v505 = vmul.f32 %v385, %v479
    %v506 = vmul.f32 %v386, %v480
    %v507 = vsub.f32 %v503, %v505
    %v508 = vsub.f32 %v504, %v506
    %v509 = vmul.f32 %v383, %v479
    %v510 = vmul.f32 %v384, %v480
    %v511 = vmul.f32 %v387, %v481
    %v512 = vmul.f32 %v388, %v482
    %v513 = vsub.f32 %v509, %v511
    %v514 = vsub.f32 %v510, %v512
    %v515 = vmul.f32 %v385, %v481
    %v516 = vmul.f32 %v386, %v482
    %v517 = vmul.f32 %v389, %v483
    %v518 = vmul.f32 %v390, %v484
    %v519 = vsub.f32 %v515, %v517
    %v520 = vsub.f32 %v516, %v518
    %v521 = vmul.f32 %v387, %v483
    %v522 = vmul.f32 %v388, %v484
    %v523 = vmul.f32 %v391, %v485
    %v524 = vmul.f32 %v392, %v486
    %v525 = vsub.f32 %v521, %v523
    %v526 = vsub.f32 %v522, %v524
    %v527 = vmul.f32 %v389, %v485
    %v528 = vmul.f32 %v390, %v486
    %v529 = vmul.f32 %v393, %v487
    %v530 = vmul.f32 %v394, %v488
    %v531 = vsub.f32 %v527, %v529
    %v532 = vsub.f32 %v528, %v530
    %v533 = vmul.f32 %v391, %v487
    %v534 = vmul.f32 %v392, %v488
    %v535 = vmul.f32 %v395, %v489
    %v536 = vmul.f32 %v396, %v490
    %v537 = vsub.f32 %v533, %v535
    %v538 = vsub.f32 %v534, %v536
    %v539 = vmul.f32 %v393, %v489
    %v540 = vmul.f32 %v394, %v490
    %v541 = vmul.f32 %v397, %v491
    %v542 = vmul.f32 %v398, %v492
    %v543 = vsub.f32 %v539, %v541
    %v544 = vsub.f32 %v540, %v542
    %v545 = vmul.f32 %v395, %v491
    %v546 = vmul.f32 %v396, %v492
    %v547 = vmul.f32 %v399, %v493
    %v548 = vmul.f32 %v400, %v494
    %v549 = vsub.f32 %v545, %v547
    %v550 = vsub.f32 %v546, %v548
    %v551 = vmul.f32 %v397, %v493
    %v552 = vmul.f32 %v398, %v494
    %v553 = vmul.f32 %v401, %v495
    %v554 = vmul.f32 %v402, %v496
    %v555 = vsub.f32 %v551, %v553
    %v556 = vsub.f32 %v552, %v554
    %v557 = vmul.f32 %v379, %v501
    %v558 = vmul.f32 %v380, %v502
    %v559 = vmul.f32 %v385, %v507
    %v560 = vmul.f32 %v386, %v508
    %v561 = vsub.f32 %v557, %v559
    %v562 = vsub.f32 %v558, %v560
    %v563 = vmul.f32 %v381, %v507
    %v564 = vmul.f32 %v382, %v508
    %v565 = vmul.f32 %v387, %v513
    %v566 = vmul.f32 %v388, %v514
    %v567 = vsub.f32 %v563, %v565
    %v568 = vsub.f32 %v564, %v566
    %v569 = vmul.f32 %v383, %v513
    %v570 = vmul.f32 %v384, %v514
    %v571 = vmul.f32 %v389, %v519
    %v572 = vmul.f32 %v390, %v520
    %v573 = vsub.f32 %v569, %v571
    %v574 = vsub.f32 %v570, %v572
    %v575 = vmul.f32 %v385, %v519
    %v576 = vmul.f32 %v386, %v520
    %v577 = vmul.f32 %v391, %v525
    %v578 = vmul.f32 %v392, %v526
    %v579 = vsub.f32 %v575, %v577
    %v580 = vsub.f32 %v576, %v578
    %v581 = vmul.f32 %v387, %v525
    %v582 = vmul.f32 %v388, %v526
    %v583 = vmul.f32 %v393, %v531
    %v584 = vmul.f32 %v394, %v532
    %v585 = vsub.f32 %v581, %v583
    %v586 = vsub.f32 %v582, %v584
    %v587 = vmul.f32 %v389, %v531
    %v588 = vmul.f32 %v390, %v532
    %v589 = vmul.f32 %v395, %v537
    %v590 = vmul.f32 %v396, %v538
    %v591 = vsub.f32 %v587, %v589
    %v592 = vsub.f32 %v588, %v590
    %v593 = vmul.f32 %v391, %v537
    %v594 = vmul.f32 %v392, %v538
    %v595 = vmul.f32 %v397, %v543
    %v596 = vmul.f32 %v398, %v544
    %v597 = vsub.f32 %v593, %v595
    %v598 = vsub.f32 %v594, %v596
    %v599 = vmul.f32 %v393, %v543
    %v600 = vmul.f32 %v394, %v544
    %v601 = vmul.f32 %v399, %v549
    %v602 = vmul.f32 %v400, %v550
    %v603 = vsub.f32 %v599, %v601
    %v604 = vsub.f32 %v600, %v602
    %v605 = vmul.f32 %v395, %v549
    %v606 = vmul.f32 %v396, %v550
    %v607 = vmul.f32 %v401, %v555
    %v608 = vmul.f32 %v402, %v556
    %v609 = vsub.f32 %v605, %v607
    %v610 = vsub.f32 %v606, %v608
    %v611 = vmul.f32 %v379, %v561
    %v612 = vmul.f32 %v380, %v562
    %v613 = vmul.f32 %v387, %v567
    %v614 = vmul.f32 %v388, %v568
    %v615 = vsub.f32 %v611, %v613
    %v616 = vsub.f32 %v612, %v614
    %v617 = vpack.c.bf16 %v616, %v615
    %618 = vst [vmem:[#allocation2 + $0x18] sm:$0xff] %v617
    %v619 = vmul.f32 %v381, %v567
    %v620 = vmul.f32 %v382, %v568
    %v621 = vmul.f32 %v389, %v573
    %v622 = vmul.f32 %v390, %v574
    %v623 = vsub.f32 %v619, %v621
    %v624 = vsub.f32 %v620, %v622
    %v625 = vpack.c.bf16 %v624, %v623
    %626 = vst [vmem:[#allocation2 + $0x28] sm:$0xff] %v625
    %v627 = vmul.f32 %v383, %v573
    %v628 = vmul.f32 %v384, %v574
    %v629 = vmul.f32 %v391, %v579
    %v630 = vmul.f32 %v392, %v580
    %v631 = vsub.f32 %v627, %v629
    %v632 = vsub.f32 %v628, %v630
    %v633 = vpack.c.bf16 %v632, %v631
    %634 = vst [vmem:[#allocation2 + $0x38] sm:$0xff] %v633
    %v635 = vmul.f32 %v385, %v579
    %v636 = vmul.f32 %v386, %v580
    %v637 = vmul.f32 %v393, %v585
    %v638 = vmul.f32 %v394, %v586
    %v639 = vsub.f32 %v635, %v637
    %v640 = vsub.f32 %v636, %v638
    %v641 = vpack.c.bf16 %v640, %v639
    %642 = vst [vmem:[#allocation2 + $0x48] sm:$0xff] %v641
    %v643 = vmul.f32 %v387, %v585
    %v644 = vmul.f32 %v388, %v586
    %v645 = vmul.f32 %v395, %v591
    %v646 = vmul.f32 %v396, %v592
    %v647 = vsub.f32 %v643, %v645
    %v648 = vsub.f32 %v644, %v646
    %v649 = vpack.c.bf16 %v648, %v647
    %650 = vst [vmem:[#allocation2 + $0x58] sm:$0xff] %v649
    %v651 = vmul.f32 %v389, %v591
    %v652 = vmul.f32 %v390, %v592
    %v653 = vmul.f32 %v397, %v597
    %v654 = vmul.f32 %v398, %v598
    %v655 = vsub.f32 %v651, %v653
    %v656 = vsub.f32 %v652, %v654
    %v657 = vpack.c.bf16 %v656, %v655
    %658 = vst [vmem:[#allocation2 + $0x68] sm:$0xff] %v657
    %v659 = vmul.f32 %v391, %v597
    %v660 = vmul.f32 %v392, %v598
    %v661 = vmul.f32 %v399, %v603
    %v662 = vmul.f32 %v400, %v604
    %v663 = vsub.f32 %v659, %v661
    %v664 = vsub.f32 %v660, %v662
    %v665 = vpack.c.bf16 %v664, %v663
    %666 = vst [vmem:[#allocation2 + $0x78] sm:$0xff] %v665
    %v667 = vmul.f32 %v393, %v603
    %v668 = vmul.f32 %v394, %v604
    %v669 = vmul.f32 %v401, %v609
    %v670 = vmul.f32 %v402, %v610
    %v671 = vsub.f32 %v667, %v669
    %v672 = vsub.f32 %v668, %v670
    %v673 = vpack.c.bf16 %v672, %v671
    %674 = vst [vmem:[#allocation2 + $0x88] sm:$0xff] %v673
    %s675 = smul.u32 4, 288
    %s676 = smul.u32 %s675, 1
    %s677 = sshll.u32 %s676, 4
    %678 = dma.done [#allocation5], %s677
    %v679 = vld [vmem:[#allocation2] sm:$0xff]
    %v680 = vld [vmem:[#allocation2 + $0x8] sm:$0xff]
    %v681 = vld [vmem:[#allocation2 + $0x10] sm:$0xff]
    %v682 = vld [vmem:[#allocation2 + $0x18] sm:$0xff]
    %v683 = vld [vmem:[#allocation2 + $0x20] sm:$0xff]
    %v684 = vld [vmem:[#allocation2 + $0x28] sm:$0xff]
    %v685 = vld [vmem:[#allocation2 + $0x30] sm:$0xff]
    %v686 = vld [vmem:[#allocation2 + $0x38] sm:$0xff]
    %v687 = vld [vmem:[#allocation2 + $0x40] sm:$0xff]
    %v688 = vld [vmem:[#allocation2 + $0x48] sm:$0xff]
    %v689 = vld [vmem:[#allocation2 + $0x50] sm:$0xff]
    %v690 = vld [vmem:[#allocation2 + $0x58] sm:$0xff]
    %v691 = vld [vmem:[#allocation2 + $0x60] sm:$0xff]
    %v692 = vld [vmem:[#allocation2 + $0x68] sm:$0xff]
    %v693 = vld [vmem:[#allocation2 + $0x70] sm:$0xff]
    %v694 = vld [vmem:[#allocation2 + $0x78] sm:$0xff]
    %v695 = vld [vmem:[#allocation2 + $0x80] sm:$0xff]
    %v696 = vld [vmem:[#allocation2 + $0x88] sm:$0xff]
    %v697 = vld [vmem:[#allocation3] sm:$0xff]
    %v698 = vld [vmem:[#allocation3 + $0x8] sm:$0xff]
    %v699 = vld [vmem:[#allocation3 + $0x10] sm:$0xff]
    %v700 = vld [vmem:[#allocation3 + $0x18] sm:$0xff]
    %v701 = vld [vmem:[#allocation3 + $0x20] sm:$0xff]
    %v702 = vld [vmem:[#allocation3 + $0x28] sm:$0xff]
    %v703 = vld [vmem:[#allocation3 + $0x30] sm:$0xff]
    %v704 = vld [vmem:[#allocation3 + $0x38] sm:$0xff]
    %v705 = vld [vmem:[#allocation3 + $0x40] sm:$0xff]
    %v706 = vld [vmem:[#allocation3 + $0x48] sm:$0xff]
    %v707 = vld [vmem:[#allocation3 + $0x50] sm:$0xff]
    %v708 = vld [vmem:[#allocation3 + $0x58] sm:$0xff]
    %v709 = vld [vmem:[#allocation3 + $0x60] sm:$0xff]
    %v710 = vld [vmem:[#allocation3 + $0x68] sm:$0xff]
    %v711 = vld [vmem:[#allocation3 + $0x70] sm:$0xff]
    %v712 = vld [vmem:[#allocation3 + $0x78] sm:$0xff]
    %v713 = vld [vmem:[#allocation3 + $0x80] sm:$0xff]
    %v714 = vld [vmem:[#allocation3 + $0x88] sm:$0xff]
    %v715 = vld [vmem:[#allocation3 + $0x90] sm:$0xff]
    %v716 = vld [vmem:[#allocation3 + $0x98] sm:$0xff]
    %v717 = vld [vmem:[#allocation3 + $0xa0] sm:$0xff]
    %v718 = vld [vmem:[#allocation3 + $0xa8] sm:$0xff]
    %v719 = vld [vmem:[#allocation3 + $0xb0] sm:$0xff]
    %v720 = vld [vmem:[#allocation3 + $0xb8] sm:$0xff]
    %v721 = vld [vmem:[#allocation3 + $0xc0] sm:$0xff]
    %v722 = vld [vmem:[#allocation3 + $0xc8] sm:$0xff]
    %v723 = vld [vmem:[#allocation3 + $0xd0] sm:$0xff]
    %v724 = vld [vmem:[#allocation3 + $0xd8] sm:$0xff]
    %v725 = vld [vmem:[#allocation3 + $0xe0] sm:$0xff]
    %v726 = vld [vmem:[#allocation3 + $0xe8] sm:$0xff]
    %v727 = vld [vmem:[#allocation3 + $0xf0] sm:$0xff]
    %v728 = vld [vmem:[#allocation3 + $0xf8] sm:$0xff]
    %v729 = vld [vmem:[#allocation3 + $0x100] sm:$0xff]
    %v730 = vld [vmem:[#allocation3 + $0x108] sm:$0xff]
    %v731 = vld [vmem:[#allocation3 + $0x110] sm:$0xff]
    %v732 = vld [vmem:[#allocation3 + $0x118] sm:$0xff]
    %v733 = vld [vmem:[#allocation3 + $0x120] sm:$0xff]
    %v734 = vld [vmem:[#allocation3 + $0x128] sm:$0xff]
    %v735 = vld [vmem:[#allocation3 + $0x130] sm:$0xff]
    %v736 = vld [vmem:[#allocation3 + $0x138] sm:$0xff]
    %v737 = vld [vmem:[#allocation3 + $0x140] sm:$0xff]
    %v738 = vld [vmem:[#allocation3 + $0x148] sm:$0xff]
    %v739 = vld [vmem:[#allocation3 + $0x150] sm:$0xff]
    %v740 = vld [vmem:[#allocation3 + $0x158] sm:$0xff]
    %v741 = vld [vmem:[#allocation3 + $0x160] sm:$0xff]
    %v742 = vld [vmem:[#allocation3 + $0x168] sm:$0xff]
    %v743 = vld [vmem:[#allocation3 + $0x170] sm:$0xff]
    %v744 = vld [vmem:[#allocation3 + $0x178] sm:$0xff]
    %v745 = vld [vmem:[#allocation3 + $0x180] sm:$0xff]
    %v746 = vld [vmem:[#allocation3 + $0x188] sm:$0xff]
    %v747 = vld [vmem:[#allocation3 + $0x190] sm:$0xff]
    %v748 = vld [vmem:[#allocation3 + $0x198] sm:$0xff]
    %v749 = vld [vmem:[#allocation3 + $0x1a0] sm:$0xff]
    %v750 = vld [vmem:[#allocation3 + $0x1a8] sm:$0xff]
    %v751 = vld [vmem:[#allocation3 + $0x1b0] sm:$0xff]
    %v752 = vld [vmem:[#allocation3 + $0x1b8] sm:$0xff]
    %v753 = vld [vmem:[#allocation3 + $0x1c0] sm:$0xff]
    %v754 = vld [vmem:[#allocation3 + $0x1c8] sm:$0xff]
    %v755 = vld [vmem:[#allocation3 + $0x1d0] sm:$0xff]
    %v756 = vld [vmem:[#allocation3 + $0x1d8] sm:$0xff]
    %v757 = vld [vmem:[#allocation3 + $0x1e0] sm:$0xff]
    %v758 = vld [vmem:[#allocation3 + $0x1e8] sm:$0xff]
    %v759 = vld [vmem:[#allocation3 + $0x1f0] sm:$0xff]
    %v760 = vld [vmem:[#allocation3 + $0x1f8] sm:$0xff]
    %v761 = vld [vmem:[#allocation3 + $0x200] sm:$0xff]
    %v762 = vld [vmem:[#allocation3 + $0x208] sm:$0xff]
    %v763 = vld [vmem:[#allocation3 + $0x210] sm:$0xff]
    %v764 = vld [vmem:[#allocation3 + $0x218] sm:$0xff]
    %v765 = vld [vmem:[#allocation3 + $0x220] sm:$0xff]
    %v766 = vld [vmem:[#allocation3 + $0x228] sm:$0xff]
    %v767 = vld [vmem:[#allocation3 + $0x230] sm:$0xff]
    %v768 = vld [vmem:[#allocation3 + $0x238] sm:$0xff]
    %v769 = vld [vmem:[#allocation3 + $0x240] sm:$0xff]
    %v770 = vld [vmem:[#allocation3 + $0x248] sm:$0xff]
    %v771 = vld [vmem:[#allocation3 + $0x250] sm:$0xff]
    %v772 = vld [vmem:[#allocation3 + $0x258] sm:$0xff]
    %v773 = vld [vmem:[#allocation3 + $0x260] sm:$0xff]
    %v774 = vld [vmem:[#allocation3 + $0x268] sm:$0xff]
    %v775 = vld [vmem:[#allocation3 + $0x270] sm:$0xff]
    %v776 = vld [vmem:[#allocation3 + $0x278] sm:$0xff]
    %v777 = vld [vmem:[#allocation3 + $0x280] sm:$0xff]
    %v778 = vld [vmem:[#allocation3 + $0x288] sm:$0xff]
    %v779 = vld [vmem:[#allocation3 + $0x290] sm:$0xff]
    %v780 = vld [vmem:[#allocation3 + $0x298] sm:$0xff]
    %v781 = vld [vmem:[#allocation3 + $0x2a0] sm:$0xff]
    %v782 = vld [vmem:[#allocation3 + $0x2a8] sm:$0xff]
    %v783 = vld [vmem:[#allocation3 + $0x2b0] sm:$0xff]
    %v784 = vld [vmem:[#allocation3 + $0x2b8] sm:$0xff]
    %v785 = vld [vmem:[#allocation3 + $0x2c0] sm:$0xff]
    %v786 = vld [vmem:[#allocation3 + $0x2c8] sm:$0xff]
    %v787 = vld [vmem:[#allocation3 + $0x2d0] sm:$0xff]
    %v788 = vld [vmem:[#allocation3 + $0x2d8] sm:$0xff]
    %v789 = vld [vmem:[#allocation3 + $0x2e0] sm:$0xff]
    %v790 = vld [vmem:[#allocation3 + $0x2e8] sm:$0xff]
    %v791 = vld [vmem:[#allocation3 + $0x2f0] sm:$0xff]
    %v792 = vld [vmem:[#allocation3 + $0x2f8] sm:$0xff]
    %v793 = vld [vmem:[#allocation3 + $0x300] sm:$0xff]
    %v794 = vld [vmem:[#allocation3 + $0x308] sm:$0xff]
    %v795 = vld [vmem:[#allocation3 + $0x310] sm:$0xff]
    %v796 = vld [vmem:[#allocation3 + $0x318] sm:$0xff]
    %v797 = vld [vmem:[#allocation3 + $0x320] sm:$0xff]
    %v798 = vld [vmem:[#allocation3 + $0x328] sm:$0xff]
    %v799 = vld [vmem:[#allocation3 + $0x330] sm:$0xff]
    %v800 = vld [vmem:[#allocation3 + $0x338] sm:$0xff]
    %v801 = vld [vmem:[#allocation3 + $0x340] sm:$0xff]
    %v802 = vld [vmem:[#allocation3 + $0x348] sm:$0xff]
    %v803 = vld [vmem:[#allocation3 + $0x350] sm:$0xff]
    %v804 = vld [vmem:[#allocation3 + $0x358] sm:$0xff]
    %v805 = vld [vmem:[#allocation3 + $0x360] sm:$0xff]
    %v806 = vld [vmem:[#allocation3 + $0x368] sm:$0xff]
    %v807 = vld [vmem:[#allocation3 + $0x370] sm:$0xff]
    %v808 = vld [vmem:[#allocation3 + $0x378] sm:$0xff]
    %v809 = vld [vmem:[#allocation3 + $0x380] sm:$0xff]
    %v810 = vld [vmem:[#allocation3 + $0x388] sm:$0xff]
    %v811 = vld [vmem:[#allocation3 + $0x390] sm:$0xff]
    %v812 = vld [vmem:[#allocation3 + $0x398] sm:$0xff]
    %v813 = vld [vmem:[#allocation3 + $0x3a0] sm:$0xff]
    %v814 = vld [vmem:[#allocation3 + $0x3a8] sm:$0xff]
    %v815 = vld [vmem:[#allocation3 + $0x3b0] sm:$0xff]
    %v816 = vld [vmem:[#allocation3 + $0x3b8] sm:$0xff]
    %v817 = vld [vmem:[#allocation3 + $0x3c0] sm:$0xff]
    %v818 = vld [vmem:[#allocation3 + $0x3c8] sm:$0xff]
    %v819 = vld [vmem:[#allocation3 + $0x3d0] sm:$0xff]
    %v820 = vld [vmem:[#allocation3 + $0x3d8] sm:$0xff]
    %v821 = vld [vmem:[#allocation3 + $0x3e0] sm:$0xff]
    %v822 = vld [vmem:[#allocation3 + $0x3e8] sm:$0xff]
    %v823 = vld [vmem:[#allocation3 + $0x3f0] sm:$0xff]
    %v824 = vld [vmem:[#allocation3 + $0x3f8] sm:$0xff]
    %v825 = vld [vmem:[#allocation3 + $0x400] sm:$0xff]
    %v826 = vld [vmem:[#allocation3 + $0x408] sm:$0xff]
    %v827 = vld [vmem:[#allocation3 + $0x410] sm:$0xff]
    %v828 = vld [vmem:[#allocation3 + $0x418] sm:$0xff]
    %v829 = vld [vmem:[#allocation3 + $0x420] sm:$0xff]
    %v830 = vld [vmem:[#allocation3 + $0x428] sm:$0xff]
    %v831 = vld [vmem:[#allocation3 + $0x430] sm:$0xff]
    %v832 = vld [vmem:[#allocation3 + $0x438] sm:$0xff]
    %v833 = vld [vmem:[#allocation3 + $0x440] sm:$0xff]
    %v834 = vld [vmem:[#allocation3 + $0x448] sm:$0xff]
    %v835 = vld [vmem:[#allocation3 + $0x450] sm:$0xff]
    %v836 = vld [vmem:[#allocation3 + $0x458] sm:$0xff]
    %v837 = vld [vmem:[#allocation3 + $0x460] sm:$0xff]
    %v838 = vld [vmem:[#allocation3 + $0x468] sm:$0xff]
    %v839 = vld [vmem:[#allocation3 + $0x470] sm:$0xff]
    %v840 = vld [vmem:[#allocation3 + $0x478] sm:$0xff]
    %841 = vmatprep.subr.bf16.mxu0 0
    %842 = vmatpush1.bf16.msra.mxu0 %v697
    %843 = vmatprep.subr.bf16.mxu0 0
    %844 = vmatpush1.bf16.msra.mxu0 %v698
    %845 = vmatprep.subr.bf16.mxu0 0
    %846 = vmatpush1.bf16.msra.mxu0 %v699
    %847 = vmatprep.subr.bf16.mxu0 0
    %848 = vmatpush1.bf16.msra.mxu0 %v700
    %849 = vmatprep.subr.bf16.mxu0 0
    %850 = vmatpush1.bf16.msra.mxu0 %v701
    %851 = vmatprep.subr.bf16.mxu0 0
    %852 = vmatpush1.bf16.msra.mxu0 %v702
    %853 = vmatprep.subr.bf16.mxu0 0
    %854 = vmatpush1.bf16.msra.mxu0 %v703
    %855 = vmatprep.subr.bf16.mxu0 0
    %856 = vmatpush1.bf16.msra.mxu0 %v704
    %857 = vmatprep.subr.bf16.mxu0 0
    %858 = vmatpush1.bf16.msra.mxu0 %v705
    %859 = vmatprep.subr.bf16.mxu0 0
    %860 = vmatpush1.bf16.msra.mxu0 %v706
    %861 = vmatprep.subr.bf16.mxu0 0
    %862 = vmatpush1.bf16.msra.mxu0 %v707
    %863 = vmatprep.subr.bf16.mxu0 0
    %864 = vmatpush1.bf16.msra.mxu0 %v708
    %865 = vmatprep.subr.bf16.mxu0 0
    %866 = vmatpush1.bf16.msra.mxu0 %v709
    %867 = vmatprep.subr.bf16.mxu0 0
    %868 = vmatpush1.bf16.msra.mxu0 %v710
    %869 = vmatprep.subr.bf16.mxu0 0
    %870 = vmatpush1.bf16.msra.mxu0 %v711
    %871 = vmatprep.subr.bf16.mxu0 0
    %872 = vmatpush1.bf16.msra.mxu0 %v712
    %873 = vmatprep.mubr.bf16.mxu0 %v680
    %874 = vmatmul.mubr.bf16.gmra.mrb[0].mxu0 %v679
    %v875 = vpop.f32.mrb[0].mxu0
    %v876 = vadd.f32 0.0, %v875
    %v877 = vpop.f32.mrb[0].mxu0
    %v878 = vpop.f32.mrb[0].mxu0
    %v879 = vadd.f32 0.0, %v878
    %v880 = vpop.f32.mrb[0].mxu0
    %881 = vdwg.mxu0
    %882 = vmatprep.subr.bf16.mxu0 0
    %883 = vmatpush1.bf16.msra.mxu0 %v713
    %884 = vmatprep.subr.bf16.mxu0 0
    %885 = vmatpush1.bf16.msra.mxu0 %v714
    %886 = vmatprep.subr.bf16.mxu0 0
    %887 = vmatpush1.bf16.msra.mxu0 %v715
    %888 = vmatprep.subr.bf16.mxu0 0
    %889 = vmatpush1.bf16.msra.mxu0 %v716
    %890 = vmatprep.subr.bf16.mxu0 0
    %891 = vmatpush1.bf16.msra.mxu0 %v717
    %892 = vmatprep.subr.bf16.mxu0 0
    %893 = vmatpush1.bf16.msra.mxu0 %v718
    %894 = vmatprep.subr.bf16.mxu0 0
    %895 = vmatpush1.bf16.msra.mxu0 %v719
    %896 = vmatprep.subr.bf16.mxu0 0
    %897 = vmatpush1.bf16.msra.mxu0 %v720
    %898 = vmatprep.subr.bf16.mxu0 0
    %899 = vmatpush1.bf16.msra.mxu0 %v721
    %900 = vmatprep.subr.bf16.mxu0 0
    %901 = vmatpush1.bf16.msra.mxu0 %v722
    %902 = vmatprep.subr.bf16.mxu0 0
    %903 = vmatpush1.bf16.msra.mxu0 %v723
    %904 = vmatprep.subr.bf16.mxu0 0
    %905 = vmatpush1.bf16.msra.mxu0 %v724
    %906 = vmatprep.subr.bf16.mxu0 0
    %907 = vmatpush1.bf16.msra.mxu0 %v725
    %908 = vmatprep.subr.bf16.mxu0 0
    %909 = vmatpush1.bf16.msra.mxu0 %v726
    %910 = vmatprep.subr.bf16.mxu0 0
    %911 = vmatpush1.bf16.msra.mxu0 %v727
    %912 = vmatprep.subr.bf16.mxu0 0
    %913 = vmatpush1.bf16.msra.mxu0 %v728
    %914 = vmatprep.mubr.bf16.mxu0 %v682
    %915 = vmatmul.mubr.bf16.gmra.mrb[0].mxu0 %v681
    %v916 = vpop.f32.mrb[0].mxu0
    %v917 = vadd.f32 %v876, %v916
    %v918 = vpop.f32.mrb[0].mxu0
    %v919 = vpop.f32.mrb[0].mxu0
    %v920 = vadd.f32 %v879, %v919
    %v921 = vpop.f32.mrb[0].mxu0
    %922 = vdwg.mxu0
    %923 = vmatprep.subr.bf16.mxu0 0
    %924 = vmatpush1.bf16.msra.mxu0 %v729
    %925 = vmatprep.subr.bf16.mxu0 0
    %926 = vmatpush1.bf16.msra.mxu0 %v730
    %927 = vmatprep.subr.bf16.mxu0 0
    %928 = vmatpush1.bf16.msra.mxu0 %v731
    %929 = vmatprep.subr.bf16.mxu0 0
    %930 = vmatpush1.bf16.msra.mxu0 %v732
    %931 = vmatprep.subr.bf16.mxu0 0
    %932 = vmatpush1.bf16.msra.mxu0 %v733
    %933 = vmatprep.subr.bf16.mxu0 0
    %934 = vmatpush1.bf16.msra.mxu0 %v734
    %935 = vmatprep.subr.bf16.mxu0 0
    %936 = vmatpush1.bf16.msra.mxu0 %v735
    %937 = vmatprep.subr.bf16.mxu0 0
    %938 = vmatpush1.bf16.msra.mxu0 %v736
    %939 = vmatprep.subr.bf16.mxu0 0
    %940 = vmatpush1.bf16.msra.mxu0 %v737
    %941 = vmatprep.subr.bf16.mxu0 0
    %942 = vmatpush1.bf16.msra.mxu0 %v738
    %943 = vmatprep.subr.bf16.mxu0 0
    %944 = vmatpush1.bf16.msra.mxu0 %v739
    %945 = vmatprep.subr.bf16.mxu0 0
    %946 = vmatpush1.bf16.msra.mxu0 %v740
    %947 = vmatprep.subr.bf16.mxu0 0
    %948 = vmatpush1.bf16.msra.mxu0 %v741
    %949 = vmatprep.subr.bf16.mxu0 0
    %950 = vmatpush1.bf16.msra.mxu0 %v742
    %951 = vmatprep.subr.bf16.mxu0 0
    %952 = vmatpush1.bf16.msra.mxu0 %v743
    %953 = vmatprep.subr.bf16.mxu0 0
    %954 = vmatpush1.bf16.msra.mxu0 %v744
    %955 = vmatprep.mubr.bf16.mxu0 %v684
    %956 = vmatmul.mubr.bf16.gmra.mrb[0].mxu0 %v683
    %v957 = vpop.f32.mrb[0].mxu0
    %v958 = vadd.f32 %v917, %v957
    %v959 = vpop.f32.mrb[0].mxu0
    %v960 = vpop.f32.mrb[0].mxu0
    %v961 = vadd.f32 %v920, %v960
    %v962 = vpop.f32.mrb[0].mxu0
    %963 = vdwg.mxu0
    %964 = vmatprep.subr.bf16.mxu0 0
    %965 = vmatpush1.bf16.msra.mxu0 %v745
    %966 = vmatprep.subr.bf16.mxu0 0
    %967 = vmatpush1.bf16.msra.mxu0 %v746
    %968 = vmatprep.subr.bf16.mxu0 0
    %969 = vmatpush1.bf16.msra.mxu0 %v747
    %970 = vmatprep.subr.bf16.mxu0 0
    %971 = vmatpush1.bf16.msra.mxu0 %v748
    %972 = vmatprep.subr.bf16.mxu0 0
    %973 = vmatpush1.bf16.msra.mxu0 %v749
    %974 = vmatprep.subr.bf16.mxu0 0
    %975 = vmatpush1.bf16.msra.mxu0 %v750
    %976 = vmatprep.subr.bf16.mxu0 0
    %977 = vmatpush1.bf16.msra.mxu0 %v751
    %978 = vmatprep.subr.bf16.mxu0 0
    %979 = vmatpush1.bf16.msra.mxu0 %v752
    %980 = vmatprep.subr.bf16.mxu0 0
    %981 = vmatpush1.bf16.msra.mxu0 %v753
    %982 = vmatprep.subr.bf16.mxu0 0
    %983 = vmatpush1.bf16.msra.mxu0 %v754
    %984 = vmatprep.subr.bf16.mxu0 0
    %985 = vmatpush1.bf16.msra.mxu0 %v755
    %986 = vmatprep.subr.bf16.mxu0 0
    %987 = vmatpush1.bf16.msra.mxu0 %v756
    %988 = vmatprep.subr.bf16.mxu0 0
    %989 = vmatpush1.bf16.msra.mxu0 %v757
    %990 = vmatprep.subr.bf16.mxu0 0
    %991 = vmatpush1.bf16.msra.mxu0 %v758
    %992 = vmatprep.subr.bf16.mxu0 0
    %993 = vmatpush1.bf16.msra.mxu0 %v759
    %994 = vmatprep.subr.bf16.mxu0 0
    %995 = vmatpush1.bf16.msra.mxu0 %v760
    %996 = vmatprep.mubr.bf16.mxu0 %v686
    %997 = vmatmul.mubr.bf16.gmra.mrb[0].mxu0 %v685
    %v998 = vpop.f32.mrb[0].mxu0
    %v999 = vadd.f32 %v958, %v998
    %v1000 = vpop.f32.mrb[0].mxu0
    %v1001 = vpop.f32.mrb[0].mxu0
    %v1002 = vadd.f32 %v961, %v1001
    %v1003 = vpop.f32.mrb[0].mxu0
    %1004 = vdwg.mxu0
    %1005 = vmatprep.subr.bf16.mxu0 0
    %1006 = vmatpush1.bf16.msra.mxu0 %v761
    %1007 = vmatprep.subr.bf16.mxu0 0
    %1008 = vmatpush1.bf16.msra.mxu0 %v762
    %1009 = vmatprep.subr.bf16.mxu0 0
    %1010 = vmatpush1.bf16.msra.mxu0 %v763
    %1011 = vmatprep.subr.bf16.mxu0 0
    %1012 = vmatpush1.bf16.msra.mxu0 %v764
    %1013 = vmatprep.subr.bf16.mxu0 0
    %1014 = vmatpush1.bf16.msra.mxu0 %v765
    %1015 = vmatprep.subr.bf16.mxu0 0
    %1016 = vmatpush1.bf16.msra.mxu0 %v766
    %1017 = vmatprep.subr.bf16.mxu0 0
    %1018 = vmatpush1.bf16.msra.mxu0 %v767
    %1019 = vmatprep.subr.bf16.mxu0 0
    %1020 = vmatpush1.bf16.msra.mxu0 %v768
    %1021 = vmatprep.subr.bf16.mxu0 0
    %1022 = vmatpush1.bf16.msra.mxu0 %v769
    %1023 = vmatprep.subr.bf16.mxu0 0
    %1024 = vmatpush1.bf16.msra.mxu0 %v770
    %1025 = vmatprep.subr.bf16.mxu0 0
    %1026 = vmatpush1.bf16.msra.mxu0 %v771
    %1027 = vmatprep.subr.bf16.mxu0 0
    %1028 = vmatpush1.bf16.msra.mxu0 %v772
    %1029 = vmatprep.subr.bf16.mxu0 0
    %1030 = vmatpush1.bf16.msra.mxu0 %v773
    %1031 = vmatprep.subr.bf16.mxu0 0
    %1032 = vmatpush1.bf16.msra.mxu0 %v774
    %1033 = vmatprep.subr.bf16.mxu0 0
    %1034 = vmatpush1.bf16.msra.mxu0 %v775
    %1035 = vmatprep.subr.bf16.mxu0 0
    %1036 = vmatpush1.bf16.msra.mxu0 %v776
    %1037 = vmatprep.mubr.bf16.mxu0 %v688
    %1038 = vmatmul.mubr.bf16.gmra.mrb[0].mxu0 %v687
    %v1039 = vpop.f32.mrb[0].mxu0
    %v1040 = vadd.f32 %v999, %v1039
    %v1041 = vpop.f32.mrb[0].mxu0
    %v1042 = vpop.f32.mrb[0].mxu0
    %v1043 = vadd.f32 %v1002, %v1042
    %v1044 = vpop.f32.mrb[0].mxu0
    %1045 = vdwg.mxu0
    %1046 = vmatprep.subr.bf16.mxu0 0
    %1047 = vmatpush1.bf16.msra.mxu0 %v777
    %1048 = vmatprep.subr.bf16.mxu0 0
    %1049 = vmatpush1.bf16.msra.mxu0 %v778
    %1050 = vmatprep.subr.bf16.mxu0 0
    %1051 = vmatpush1.bf16.msra.mxu0 %v779
    %1052 = vmatprep.subr.bf16.mxu0 0
    %1053 = vmatpush1.bf16.msra.mxu0 %v780
    %1054 = vmatprep.subr.bf16.mxu0 0
    %1055 = vmatpush1.bf16.msra.mxu0 %v781
    %1056 = vmatprep.subr.bf16.mxu0 0
    %1057 = vmatpush1.bf16.msra.mxu0 %v782
    %1058 = vmatprep.subr.bf16.mxu0 0
    %1059 = vmatpush1.bf16.msra.mxu0 %v783
    %1060 = vmatprep.subr.bf16.mxu0 0
    %1061 = vmatpush1.bf16.msra.mxu0 %v784
    %1062 = vmatprep.subr.bf16.mxu0 0
    %1063 = vmatpush1.bf16.msra.mxu0 %v785
    %1064 = vmatprep.subr.bf16.mxu0 0
    %1065 = vmatpush1.bf16.msra.mxu0 %v786
    %1066 = vmatprep.subr.bf16.mxu0 0
    %1067 = vmatpush1.bf16.msra.mxu0 %v787
    %1068 = vmatprep.subr.bf16.mxu0 0
    %1069 = vmatpush1.bf16.msra.mxu0 %v788
    %1070 = vmatprep.subr.bf16.mxu0 0
    %1071 = vmatpush1.bf16.msra.mxu0 %v789
    %1072 = vmatprep.subr.bf16.mxu0 0
    %1073 = vmatpush1.bf16.msra.mxu0 %v790
    %1074 = vmatprep.subr.bf16.mxu0 0
    %1075 = vmatpush1.bf16.msra.mxu0 %v791
    %1076 = vmatprep.subr.bf16.mxu0 0
    %1077 = vmatpush1.bf16.msra.mxu0 %v792
    %1078 = vmatprep.mubr.bf16.mxu0 %v690
    %1079 = vmatmul.mubr.bf16.gmra.mrb[0].mxu0 %v689
    %v1080 = vpop.f32.mrb[0].mxu0
    %v1081 = vadd.f32 %v1040, %v1080
    %v1082 = vpop.f32.mrb[0].mxu0
    %v1083 = vpop.f32.mrb[0].mxu0
    %v1084 = vadd.f32 %v1043, %v1083
    %v1085 = vpop.f32.mrb[0].mxu0
    %1086 = vdwg.mxu0
    %1087 = vmatprep.subr.bf16.mxu0 0
    %1088 = vmatpush1.bf16.msra.mxu0 %v793
    %1089 = vmatprep.subr.bf16.mxu0 0
    %1090 = vmatpush1.bf16.msra.mxu0 %v794
    %1091 = vmatprep.subr.bf16.mxu0 0
    %1092 = vmatpush1.bf16.msra.mxu0 %v795
    %1093 = vmatprep.subr.bf16.mxu0 0
    %1094 = vmatpush1.bf16.msra.mxu0 %v796
    %1095 = vmatprep.subr.bf16.mxu0 0
    %1096 = vmatpush1.bf16.msra.mxu0 %v797
    %1097 = vmatprep.subr.bf16.mxu0 0
    %1098 = vmatpush1.bf16.msra.mxu0 %v798
    %1099 = vmatprep.subr.bf16.mxu0 0
    %1100 = vmatpush1.bf16.msra.mxu0 %v799
    %1101 = vmatprep.subr.bf16.mxu0 0
    %1102 = vmatpush1.bf16.msra.mxu0 %v800
    %1103 = vmatprep.subr.bf16.mxu0 0
    %1104 = vmatpush1.bf16.msra.mxu0 %v801
    %1105 = vmatprep.subr.bf16.mxu0 0
    %1106 = vmatpush1.bf16.msra.mxu0 %v802
    %1107 = vmatprep.subr.bf16.mxu0 0
    %1108 = vmatpush1.bf16.msra.mxu0 %v803
    %1109 = vmatprep.subr.bf16.mxu0 0
    %1110 = vmatpush1.bf16.msra.mxu0 %v804
    %1111 = vmatprep.subr.bf16.mxu0 0
    %1112 = vmatpush1.bf16.msra.mxu0 %v805
    %1113 = vmatprep.subr.bf16.mxu0 0
    %1114 = vmatpush1.bf16.msra.mxu0 %v806
    %1115 = vmatprep.subr.bf16.mxu0 0
    %1116 = vmatpush1.bf16.msra.mxu0 %v807
    %1117 = vmatprep.subr.bf16.mxu0 0
    %1118 = vmatpush1.bf16.msra.mxu0 %v808
    %1119 = vmatprep.mubr.bf16.mxu0 %v692
    %1120 = vmatmul.mubr.bf16.gmra.mrb[0].mxu0 %v691
    %v1121 = vpop.f32.mrb[0].mxu0
    %v1122 = vadd.f32 %v1081, %v1121
    %v1123 = vpop.f32.mrb[0].mxu0
    %v1124 = vpop.f32.mrb[0].mxu0
    %v1125 = vadd.f32 %v1084, %v1124
    %v1126 = vpop.f32.mrb[0].mxu0
    %1127 = vdwg.mxu0
    %1128 = vmatprep.subr.bf16.mxu0 0
    %1129 = vmatpush1.bf16.msra.mxu0 %v809
    %1130 = vmatprep.subr.bf16.mxu0 0
    %1131 = vmatpush1.bf16.msra.mxu0 %v810
    %1132 = vmatprep.subr.bf16.mxu0 0
    %1133 = vmatpush1.bf16.msra.mxu0 %v811
    %1134 = vmatprep.subr.bf16.mxu0 0
    %1135 = vmatpush1.bf16.msra.mxu0 %v812
    %1136 = vmatprep.subr.bf16.mxu0 0
    %1137 = vmatpush1.bf16.msra.mxu0 %v813
    %1138 = vmatprep.subr.bf16.mxu0 0
    %1139 = vmatpush1.bf16.msra.mxu0 %v814
    %1140 = vmatprep.subr.bf16.mxu0 0
    %1141 = vmatpush1.bf16.msra.mxu0 %v815
    %1142 = vmatprep.subr.bf16.mxu0 0
    %1143 = vmatpush1.bf16.msra.mxu0 %v816
    %1144 = vmatprep.subr.bf16.mxu0 0
    %1145 = vmatpush1.bf16.msra.mxu0 %v817
    %1146 = vmatprep.subr.bf16.mxu0 0
    %1147 = vmatpush1.bf16.msra.mxu0 %v818
    %1148 = vmatprep.subr.bf16.mxu0 0
    %1149 = vmatpush1.bf16.msra.mxu0 %v819
    %1150 = vmatprep.subr.bf16.mxu0 0
    %1151 = vmatpush1.bf16.msra.mxu0 %v820
    %1152 = vmatprep.subr.bf16.mxu0 0
    %1153 = vmatpush1.bf16.msra.mxu0 %v821
    %1154 = vmatprep.subr.bf16.mxu0 0
    %1155 = vmatpush1.bf16.msra.mxu0 %v822
    %1156 = vmatprep.subr.bf16.mxu0 0
    %1157 = vmatpush1.bf16.msra.mxu0 %v823
    %1158 = vmatprep.subr.bf16.mxu0 0
    %1159 = vmatpush1.bf16.msra.mxu0 %v824
    %1160 = vmatprep.mubr.bf16.mxu0 %v694
    %1161 = vmatmul.mubr.bf16.gmra.mrb[0].mxu0 %v693
    %v1162 = vpop.f32.mrb[0].mxu0
    %v1163 = vadd.f32 %v1122, %v1162
    %v1164 = vpop.f32.mrb[0].mxu0
    %v1165 = vpop.f32.mrb[0].mxu0
    %v1166 = vadd.f32 %v1125, %v1165
    %v1167 = vpop.f32.mrb[0].mxu0
    %1168 = vdwg.mxu0
    %1169 = vmatprep.subr.bf16.mxu0 0
    %1170 = vmatpush1.bf16.msra.mxu0 %v825
    %1171 = vmatprep.subr.bf16.mxu0 0
    %1172 = vmatpush1.bf16.msra.mxu0 %v826
    %1173 = vmatprep.subr.bf16.mxu0 0
    %1174 = vmatpush1.bf16.msra.mxu0 %v827
    %1175 = vmatprep.subr.bf16.mxu0 0
    %1176 = vmatpush1.bf16.msra.mxu0 %v828
    %1177 = vmatprep.subr.bf16.mxu0 0
    %1178 = vmatpush1.bf16.msra.mxu0 %v829
    %1179 = vmatprep.subr.bf16.mxu0 0
    %1180 = vmatpush1.bf16.msra.mxu0 %v830
    %1181 = vmatprep.subr.bf16.mxu0 0
    %1182 = vmatpush1.bf16.msra.mxu0 %v831
    %1183 = vmatprep.subr.bf16.mxu0 0
    %1184 = vmatpush1.bf16.msra.mxu0 %v832
    %1185 = vmatprep.subr.bf16.mxu0 0
    %1186 = vmatpush1.bf16.msra.mxu0 %v833
    %1187 = vmatprep.subr.bf16.mxu0 0
    %1188 = vmatpush1.bf16.msra.mxu0 %v834
    %1189 = vmatprep.subr.bf16.mxu0 0
    %1190 = vmatpush1.bf16.msra.mxu0 %v835
    %1191 = vmatprep.subr.bf16.mxu0 0
    %1192 = vmatpush1.bf16.msra.mxu0 %v836
    %1193 = vmatprep.subr.bf16.mxu0 0
    %1194 = vmatpush1.bf16.msra.mxu0 %v837
    %1195 = vmatprep.subr.bf16.mxu0 0
    %1196 = vmatpush1.bf16.msra.mxu0 %v838
    %1197 = vmatprep.subr.bf16.mxu0 0
    %1198 = vmatpush1.bf16.msra.mxu0 %v839
    %1199 = vmatprep.subr.bf16.mxu0 0
    %1200 = vmatpush1.bf16.msra.mxu0 %v840
    %1201 = vmatprep.mubr.bf16.mxu0 %v696
    %1202 = vmatmul.mubr.bf16.gmra.mrb[0].mxu0 %v695
    %v1203 = vpop.f32.mrb[0].mxu0
    %v1204 = vadd.f32 %v1163, %v1203
    %v1205 = vpop.f32.mrb[0].mxu0
    %v1206 = vpop.f32.mrb[0].mxu0
    %v1207 = vadd.f32 %v1166, %v1206
    %v1208 = vpop.f32.mrb[0].mxu0
    %1209 = vdwg.mxu0
    %v1210 = vmax.f32 %v1204, 0.0
    %v1211 = vmax.f32 %v1207, 0.0
    %v1212 = vadd.f32 %v1210, %v1211
    %v1213 = vrot.slane %v1212, 4
    %v1214 = vadd.f32 %v1212, %v1213
    %v1215 = vrot.slane %v1214, 2
    %v1216 = vadd.f32 %v1214, %v1215
    %v1217 = vrot.slane %v1216, 1
    %v1218 = vadd.f32 %v1216, %v1217
    %v1219 = vrcp.pop 16.0
    %v1220 = vmul.f32 %v1218, %v1219
    %v1221 = vsub.f32 %v1210, %v1220
    %v1222 = vsub.f32 %v1211, %v1220
    %v1223 = vmul.f32 %v1221, %v1221
    %v1224 = vmul.f32 %v1222, %v1222
    %v1225 = vadd.f32 %v1223, %v1224
    %v1226 = vrot.slane %v1225, 4
    %v1227 = vadd.f32 %v1225, %v1226
    %v1228 = vrot.slane %v1227, 2
    %v1229 = vadd.f32 %v1227, %v1228
    %v1230 = vrot.slane %v1229, 1
    %v1231 = vadd.f32 %v1229, %v1230
    %v1232 = vmul.f32 %v1231, %v1219
    %v1233 = vld [vmem:[%s3] sm:$0x1]
    %v1234 = vadd.f32 %v1232, 1e-05
    %v1235 = vrsqrt.pop %v1234
    %v1236 = vmul.f32 %v1233, %v1235
    %v1238 = vlaneseq
    %v1239 = vshrl.u32 %v1238, 7
    %v1240 = vsub.s32 0, %v1239
    %v1241 = vrot.slane %v1236, %v1240
    %v1243 = vmul.f32 %v1221, %v1241
    %v1244 = vmul.f32 %v1222, %v1241
    %v1245 = vld [vmem:[%s4] sm:$0x1]
    %v1247 = vlaneseq
    %v1248 = vshrl.u32 %v1247, 7
    %v1249 = vsub.s32 0, %v1248
    %v1250 = vrot.slane %v1245, %v1249
    %v1252 = vadd.f32 %v1243, %v1250
    %v1253 = vadd.f32 %v1244, %v1250
    %v1254 = vmul.f32 %v1252, 0.5
    %v1255 = vmul.f32 %v1253, 0.5
    %v1256 = vtanh.pop %v1254
    %v1257 = vtanh.pop %v1255
    %v1258 = vmul.f32 %v1256, 0.5
    %v1259 = vmul.f32 %v1257, 0.5
    %v1260 = vadd.f32 %v1258, 0.5
    %v1261 = vadd.f32 %v1259, 0.5
    %v1262 = vmul.f32 %v1252, %v1260
    %v1263 = vmul.f32 %v1253, %v1261
    %v1264 = vpack.c.bf16 %v1263, %v1262
    %1265 = vst [vmem:[#allocation2] sm:$0xff] %v1264
    %v1266 = vsub.f32 %v1252, -2.2
    %v1267 = vsub.f32 %v1253, -2.2
    %v1268 = vsub.f32 %v1252, -1.8
    %v1269 = vsub.f32 %v1253, -1.8
    %v1270 = vsub.f32 %v1252, -1.4
    %v1271 = vsub.f32 %v1253, -1.4
    %v1272 = vsub.f32 %v1252, -1.0
    %v1273 = vsub.f32 %v1253, -1.0
    %v1274 = vsub.f32 %v1252, -0.6
    %v1275 = vsub.f32 %v1253, -0.6
    %v1276 = vsub.f32 %v1252, -0.2
    %v1277 = vsub.f32 %v1253, -0.2
    %v1278 = vsub.f32 %v1252, 0.2
    %v1279 = vsub.f32 %v1253, 0.2
    %v1280 = vsub.f32 %v1252, 0.6
    %v1281 = vsub.f32 %v1253, 0.6
    %v1282 = vsub.f32 %v1252, 1.0
    %v1283 = vsub.f32 %v1253, 1.0
    %v1284 = vsub.f32 %v1252, 1.4
    %v1285 = vsub.f32 %v1253, 1.4
    %v1286 = vsub.f32 %v1252, 1.8
    %v1287 = vsub.f32 %v1253, 1.8
    %v1288 = vsub.f32 %v1252, 2.2
    %v1289 = vsub.f32 %v1253, 2.2
    %vm1290 = vcmp.ge.f32.partialorder %v1252, -2.2
    %vm1291 = vcmp.ge.f32.partialorder %v1253, -2.2
    %v1292 = vsel %vm1290, 1, 0
    %v1293 = vsel %vm1291, 1, 0
    %v1294 = vcvt.s32.f32 %v1292
    %v1295 = vcvt.s32.f32 %v1293
    %vm1296 = vcmp.ge.f32.partialorder %v1252, -1.8
    %vm1297 = vcmp.ge.f32.partialorder %v1253, -1.8
    %v1298 = vsel %vm1296, 1, 0
    %v1299 = vsel %vm1297, 1, 0
    %v1300 = vcvt.s32.f32 %v1298
    %v1301 = vcvt.s32.f32 %v1299
    %vm1302 = vcmp.ge.f32.partialorder %v1252, -1.4
    %vm1303 = vcmp.ge.f32.partialorder %v1253, -1.4
    %v1304 = vsel %vm1302, 1, 0
    %v1305 = vsel %vm1303, 1, 0
    %v1306 = vcvt.s32.f32 %v1304
    %v1307 = vcvt.s32.f32 %v1305
    %vm1308 = vcmp.ge.f32.partialorder %v1252, -1.0
    %vm1309 = vcmp.ge.f32.partialorder %v1253, -1.0
    %v1310 = vsel %vm1308, 1, 0
    %v1311 = vsel %vm1309, 1, 0
    %v1312 = vcvt.s32.f32 %v1310
    %v1313 = vcvt.s32.f32 %v1311
    %vm1314 = vcmp.ge.f32.partialorder %v1252, -0.6
    %vm1315 = vcmp.ge.f32.partialorder %v1253, -0.6
    %v1316 = vsel %vm1314, 1, 0
    %v1317 = vsel %vm1315, 1, 0
    %v1318 = vcvt.s32.f32 %v1316
    %v1319 = vcvt.s32.f32 %v1317
    %vm1320 = vcmp.ge.f32.partialorder %v1252, -0.2
    %vm1321 = vcmp.ge.f32.partialorder %v1253, -0.2
    %v1322 = vsel %vm1320, 1, 0
    %v1323 = vsel %vm1321, 1, 0
    %v1324 = vcvt.s32.f32 %v1322
    %v1325 = vcvt.s32.f32 %v1323
    %vm1326 = vcmp.ge.f32.partialorder %v1252, 0.2
    %vm1327 = vcmp.ge.f32.partialorder %v1253, 0.2
    %v1328 = vsel %vm1326, 1, 0
    %v1329 = vsel %vm1327, 1, 0
    %v1330 = vcvt.s32.f32 %v1328
    %v1331 = vcvt.s32.f32 %v1329
    %vm1332 = vcmp.ge.f32.partialorder %v1252, 0.6
    %vm1333 = vcmp.ge.f32.partialorder %v1253, 0.6
    %v1334 = vsel %vm1332, 1, 0
    %v1335 = vsel %vm1333, 1, 0
    %v1336 = vcvt.s32.f32 %v1334
    %v1337 = vcvt.s32.f32 %v1335
    %vm1338 = vcmp.ge.f32.partialorder %v1252, 1.0
    %vm1339 = vcmp.ge.f32.partialorder %v1253, 1.0
    %v1340 = vsel %vm1338, 1, 0
    %v1341 = vsel %vm1339, 1, 0
    %v1342 = vcvt.s32.f32 %v1340
    %v1343 = vcvt.s32.f32 %v1341
    %vm1344 = vcmp.ge.f32.partialorder %v1252, 1.4
    %vm1345 = vcmp.ge.f32.partialorder %v1253, 1.4
    %v1346 = vsel %vm1344, 1, 0
    %v1347 = vsel %vm1345, 1, 0
    %v1348 = vcvt.s32.f32 %v1346
    %v1349 = vcvt.s32.f32 %v1347
    %vm1350 = vcmp.ge.f32.partialorder %v1252, 1.8
    %vm1351 = vcmp.ge.f32.partialorder %v1253, 1.8
    %v1352 = vsel %vm1350, 1, 0
    %v1353 = vsel %vm1351, 1, 0
    %v1354 = vcvt.s32.f32 %v1352
    %v1355 = vcvt.s32.f32 %v1353
    %vm1356 = vcmp.ge.f32.partialorder %v1252, 2.2
    %vm1357 = vcmp.ge.f32.partialorder %v1253, 2.2
    %v1358 = vsel %vm1356, 1, 0
    %v1359 = vsel %vm1357, 1, 0
    %v1360 = vcvt.s32.f32 %v1358
    %v1361 = vcvt.s32.f32 %v1359
    %v1362 = vsub.f32 %v1294, %v1300
    %v1363 = vsub.f32 %v1295, %v1301
    %v1364 = vsub.f32 %v1300, %v1306
    %v1365 = vsub.f32 %v1301, %v1307
    %v1366 = vsub.f32 %v1306, %v1312
    %v1367 = vsub.f32 %v1307, %v1313
    %v1368 = vsub.f32 %v1312, %v1318
    %v1369 = vsub.f32 %v1313, %v1319
    %v1370 = vsub.f32 %v1318, %v1324
    %v1371 = vsub.f32 %v1319, %v1325
    %v1372 = vsub.f32 %v1324, %v1330
    %v1373 = vsub.f32 %v1325, %v1331
    %v1374 = vsub.f32 %v1330, %v1336
    %v1375 = vsub.f32 %v1331, %v1337
    %v1376 = vsub.f32 %v1336, %v1342
    %v1377 = vsub.f32 %v1337, %v1343
    %v1378 = vsub.f32 %v1342, %v1348
    %v1379 = vsub.f32 %v1343, %v1349
    %v1380 = vsub.f32 %v1348, %v1354
    %v1381 = vsub.f32 %v1349, %v1355
    %v1382 = vsub.f32 %v1354, %v1360
    %v1383 = vsub.f32 %v1355, %v1361
    %v1384 = vmul.f32 %v1266, %v1362
    %v1385 = vmul.f32 %v1267, %v1363
    %v1386 = vmul.f32 %v1270, %v1364
    %v1387 = vmul.f32 %v1271, %v1365
    %v1388 = vsub.f32 %v1384, %v1386
    %v1389 = vsub.f32 %v1385, %v1387
    %v1390 = vmul.f32 %v1268, %v1364
    %v1391 = vmul.f32 %v1269, %v1365
    %v1392 = vmul.f32 %v1272, %v1366
    %v1393 = vmul.f32 %v1273, %v1367
    %v1394 = vsub.f32 %v1390, %v1392
    %v1395 = vsub.f32 %v1391, %v1393
    %v1396 = vmul.f32 %v1270, %v1366
    %v1397 = vmul.f32 %v1271, %v1367
    %v1398 = vmul.f32 %v1274, %v1368
    %v1399 = vmul.f32 %v1275, %v1369
    %v1400 = vsub.f32 %v1396, %v1398
    %v1401 = vsub.f32 %v1397, %v1399
    %v1402 = vmul.f32 %v1272, %v1368
    %v1403 = vmul.f32 %v1273, %v1369
    %v1404 = vmul.f32 %v1276, %v1370
    %v1405 = vmul.f32 %v1277, %v1371
    %v1406 = vsub.f32 %v1402, %v1404
    %v1407 = vsub.f32 %v1403, %v1405
    %v1408 = vmul.f32 %v1274, %v1370
    %v1409 = vmul.f32 %v1275, %v1371
    %v1410 = vmul.f32 %v1278, %v1372
    %v1411 = vmul.f32 %v1279, %v1373
    %v1412 = vsub.f32 %v1408, %v1410
    %v1413 = vsub.f32 %v1409, %v1411
    %v1414 = vmul.f32 %v1276, %v1372
    %v1415 = vmul.f32 %v1277, %v1373
    %v1416 = vmul.f32 %v1280, %v1374
    %v1417 = vmul.f32 %v1281, %v1375
    %v1418 = vsub.f32 %v1414, %v1416
    %v1419 = vsub.f32 %v1415, %v1417
    %v1420 = vmul.f32 %v1278, %v1374
    %v1421 = vmul.f32 %v1279, %v1375
    %v1422 = vmul.f32 %v1282, %v1376
    %v1423 = vmul.f32 %v1283, %v1377
    %v1424 = vsub.f32 %v1420, %v1422
    %v1425 = vsub.f32 %v1421, %v1423
    %v1426 = vmul.f32 %v1280, %v1376
    %v1427 = vmul.f32 %v1281, %v1377
    %v1428 = vmul.f32 %v1284, %v1378
    %v1429 = vmul.f32 %v1285, %v1379
    %v1430 = vsub.f32 %v1426, %v1428
    %v1431 = vsub.f32 %v1427, %v1429
    %v1432 = vmul.f32 %v1282, %v1378
    %v1433 = vmul.f32 %v1283, %v1379
    %v1434 = vmul.f32 %v1286, %v1380
    %v1435 = vmul.f32 %v1287, %v1381
    %v1436 = vsub.f32 %v1432, %v1434
    %v1437 = vsub.f32 %v1433, %v1435
    %v1438 = vmul.f32 %v1284, %v1380
    %v1439 = vmul.f32 %v1285, %v1381
    %v1440 = vmul.f32 %v1288, %v1382
    %v1441 = vmul.f32 %v1289, %v1383
    %v1442 = vsub.f32 %v1438, %v1440
    %v1443 = vsub.f32 %v1439, %v1441
    %v1444 = vmul.f32 %v1266, %v1388
    %v1445 = vmul.f32 %v1267, %v1389
    %v1446 = vmul.f32 %v1272, %v1394
    %v1447 = vmul.f32 %v1273, %v1395
    %v1448 = vsub.f32 %v1444, %v1446
    %v1449 = vsub.f32 %v1445, %v1447
    %v1450 = vmul.f32 %v1268, %v1394
    %v1451 = vmul.f32 %v1269, %v1395
    %v1452 = vmul.f32 %v1274, %v1400
    %v1453 = vmul.f32 %v1275, %v1401
    %v1454 = vsub.f32 %v1450, %v1452
    %v1455 = vsub.f32 %v1451, %v1453
    %v1456 = vmul.f32 %v1270, %v1400
    %v1457 = vmul.f32 %v1271, %v1401
    %v1458 = vmul.f32 %v1276, %v1406
    %v1459 = vmul.f32 %v1277, %v1407
    %v1460 = vsub.f32 %v1456, %v1458
    %v1461 = vsub.f32 %v1457, %v1459
    %v1462 = vmul.f32 %v1272, %v1406
    %v1463 = vmul.f32 %v1273, %v1407
    %v1464 = vmul.f32 %v1278, %v1412
    %v1465 = vmul.f32 %v1279, %v1413
    %v1466 = vsub.f32 %v1462, %v1464
    %v1467 = vsub.f32 %v1463, %v1465
    %v1468 = vmul.f32 %v1274, %v1412
    %v1469 = vmul.f32 %v1275, %v1413
    %v1470 = vmul.f32 %v1280, %v1418
    %v1471 = vmul.f32 %v1281, %v1419
    %v1472 = vsub.f32 %v1468, %v1470
    %v1473 = vsub.f32 %v1469, %v1471
    %v1474 = vmul.f32 %v1276, %v1418
    %v1475 = vmul.f32 %v1277, %v1419
    %v1476 = vmul.f32 %v1282, %v1424
    %v1477 = vmul.f32 %v1283, %v1425
    %v1478 = vsub.f32 %v1474, %v1476
    %v1479 = vsub.f32 %v1475, %v1477
    %v1480 = vmul.f32 %v1278, %v1424
    %v1481 = vmul.f32 %v1279, %v1425
    %v1482 = vmul.f32 %v1284, %v1430
    %v1483 = vmul.f32 %v1285, %v1431
    %v1484 = vsub.f32 %v1480, %v1482
    %v1485 = vsub.f32 %v1481, %v1483
    %v1486 = vmul.f32 %v1280, %v1430
    %v1487 = vmul.f32 %v1281, %v1431
    %v1488 = vmul.f32 %v1286, %v1436
    %v1489 = vmul.f32 %v1287, %v1437
    %v1490 = vsub.f32 %v1486, %v1488
    %v1491 = vsub.f32 %v1487, %v1489
    %v1492 = vmul.f32 %v1282, %v1436
    %v1493 = vmul.f32 %v1283, %v1437
    %v1494 = vmul.f32 %v1288, %v1442
    %v1495 = vmul.f32 %v1289, %v1443
    %v1496 = vsub.f32 %v1492, %v1494
    %v1497 = vsub.f32 %v1493, %v1495
    %v1498 = vmul.f32 %v1266, %v1448
    %v1499 = vmul.f32 %v1267, %v1449
    %v1500 = vmul.f32 %v1274, %v1454
    %v1501 = vmul.f32 %v1275, %v1455
    %v1502 = vsub.f32 %v1498, %v1500
    %v1503 = vsub.f32 %v1499, %v1501
    %v1504 = vpack.c.bf16 %v1503, %v1502
    %1505 = vst [vmem:[#allocation2 + $0x8] sm:$0xff] %v1504
    %v1506 = vmul.f32 %v1268, %v1454
    %v1507 = vmul.f32 %v1269, %v1455
    %v1508 = vmul.f32 %v1276, %v1460
    %v1509 = vmul.f32 %v1277, %v1461
    %v1510 = vsub.f32 %v1506, %v1508
    %v1511 = vsub.f32 %v1507, %v1509
    %v1512 = vpack.c.bf16 %v1511, %v1510
    %1513 = vst [vmem:[#allocation2 + $0x10] sm:$0xff] %v1512
    %v1514 = vmul.f32 %v1270, %v1460
    %v1515 = vmul.f32 %v1271, %v1461
    %v1516 = vmul.f32 %v1278, %v1466
    %v1517 = vmul.f32 %v1279, %v1467
    %v1518 = vsub.f32 %v1514, %v1516
    %v1519 = vsub.f32 %v1515, %v1517
    %v1520 = vpack.c.bf16 %v1519, %v1518
    %1521 = vst [vmem:[#allocation2 + $0x18] sm:$0xff] %v1520
    %v1522 = vmul.f32 %v1272, %v1466
    %v1523 = vmul.f32 %v1273, %v1467
    %v1524 = vmul.f32 %v1280, %v1472
    %v1525 = vmul.f32 %v1281, %v1473
    %v1526 = vsub.f32 %v1522, %v1524
    %v1527 = vsub.f32 %v1523, %v1525
    %v1528 = vpack.c.bf16 %v1527, %v1526
    %1529 = vst [vmem:[#allocation2 + $0x20] sm:$0xff] %v1528
    %v1530 = vmul.f32 %v1274, %v1472
    %v1531 = vmul.f32 %v1275, %v1473
    %v1532 = vmul.f32 %v1282, %v1478
    %v1533 = vmul.f32 %v1283, %v1479
    %v1534 = vsub.f32 %v1530, %v1532
    %v1535 = vsub.f32 %v1531, %v1533
    %v1536 = vpack.c.bf16 %v1535, %v1534
    %1537 = vst [vmem:[#allocation2 + $0x28] sm:$0xff] %v1536
    %v1538 = vmul.f32 %v1276, %v1478
    %v1539 = vmul.f32 %v1277, %v1479
    %v1540 = vmul.f32 %v1284, %v1484
    %v1541 = vmul.f32 %v1285, %v1485
    %v1542 = vsub.f32 %v1538, %v1540
    %v1543 = vsub.f32 %v1539, %v1541
    %v1544 = vpack.c.bf16 %v1543, %v1542
    %1545 = vst [vmem:[#allocation2 + $0x30] sm:$0xff] %v1544
    %v1546 = vmul.f32 %v1278, %v1484
    %v1547 = vmul.f32 %v1279, %v1485
    %v1548 = vmul.f32 %v1286, %v1490
    %v1549 = vmul.f32 %v1287, %v1491
    %v1550 = vsub.f32 %v1546, %v1548
    %v1551 = vsub.f32 %v1547, %v1549
    %v1552 = vpack.c.bf16 %v1551, %v1550
    %1553 = vst [vmem:[#allocation2 + $0x38] sm:$0xff] %v1552
    %v1554 = vmul.f32 %v1280, %v1490
    %v1555 = vmul.f32 %v1281, %v1491
    %v1556 = vmul.f32 %v1288, %v1496
    %v1557 = vmul.f32 %v1289, %v1497
    %v1558 = vsub.f32 %v1554, %v1556
    %v1559 = vsub.f32 %v1555, %v1557
    %v1560 = vpack.c.bf16 %v1559, %v1558
    %1561 = vst [vmem:[#allocation2 + $0x40] sm:$0xff] %v1560
    %s1562 = smul.u32 4, 144
    %s1563 = smul.u32 %s1562, 1
    %s1564 = sshll.u32 %s1563, 4
    %1565 = dma.done %s43, %s1564
    %v1566 = vld [vmem:[#allocation2] sm:$0xff]
    %v1567 = vld [vmem:[#allocation2 + $0x8] sm:$0xff]
    %v1568 = vld [vmem:[#allocation2 + $0x10] sm:$0xff]
    %v1569 = vld [vmem:[#allocation2 + $0x18] sm:$0xff]
    %v1570 = vld [vmem:[#allocation2 + $0x20] sm:$0xff]
    %v1571 = vld [vmem:[#allocation2 + $0x28] sm:$0xff]
    %v1572 = vld [vmem:[#allocation2 + $0x30] sm:$0xff]
    %v1573 = vld [vmem:[#allocation2 + $0x38] sm:$0xff]
    %v1574 = vld [vmem:[#allocation2 + $0x40] sm:$0xff]
    %v1575 = vld [vmem:[#allocation4] sm:$0xff]
    %v1576 = vld [vmem:[#allocation4 + $0x8] sm:$0xff]
    %v1577 = vld [vmem:[#allocation4 + $0x10] sm:$0xff]
    %v1578 = vld [vmem:[#allocation4 + $0x18] sm:$0xff]
    %v1579 = vld [vmem:[#allocation4 + $0x20] sm:$0xff]
    %v1580 = vld [vmem:[#allocation4 + $0x28] sm:$0xff]
    %v1581 = vld [vmem:[#allocation4 + $0x30] sm:$0xff]
    %v1582 = vld [vmem:[#allocation4 + $0x38] sm:$0xff]
    %v1583 = vld [vmem:[#allocation4 + $0x40] sm:$0xff]
    %v1584 = vld [vmem:[#allocation4 + $0x48] sm:$0xff]
    %v1585 = vld [vmem:[#allocation4 + $0x50] sm:$0xff]
    %v1586 = vld [vmem:[#allocation4 + $0x58] sm:$0xff]
    %v1587 = vld [vmem:[#allocation4 + $0x60] sm:$0xff]
    %v1588 = vld [vmem:[#allocation4 + $0x68] sm:$0xff]
    %v1589 = vld [vmem:[#allocation4 + $0x70] sm:$0xff]
    %v1590 = vld [vmem:[#allocation4 + $0x78] sm:$0xff]
    %v1591 = vld [vmem:[#allocation4 + $0x80] sm:$0xff]
    %v1592 = vld [vmem:[#allocation4 + $0x88] sm:$0xff]
    %v1593 = vld [vmem:[#allocation4 + $0x90] sm:$0xff]
    %v1594 = vld [vmem:[#allocation4 + $0x98] sm:$0xff]
    %v1595 = vld [vmem:[#allocation4 + $0xa0] sm:$0xff]
    %v1596 = vld [vmem:[#allocation4 + $0xa8] sm:$0xff]
    %v1597 = vld [vmem:[#allocation4 + $0xb0] sm:$0xff]
    %v1598 = vld [vmem:[#allocation4 + $0xb8] sm:$0xff]
    %v1599 = vld [vmem:[#allocation4 + $0xc0] sm:$0xff]
    %v1600 = vld [vmem:[#allocation4 + $0xc8] sm:$0xff]
    %v1601 = vld [vmem:[#allocation4 + $0xd0] sm:$0xff]
    %v1602 = vld [vmem:[#allocation4 + $0xd8] sm:$0xff]
    %v1603 = vld [vmem:[#allocation4 + $0xe0] sm:$0xff]
    %v1604 = vld [vmem:[#allocation4 + $0xe8] sm:$0xff]
    %v1605 = vld [vmem:[#allocation4 + $0xf0] sm:$0xff]
    %v1606 = vld [vmem:[#allocation4 + $0xf8] sm:$0xff]
    %v1607 = vld [vmem:[#allocation4 + $0x100] sm:$0xff]
    %v1608 = vld [vmem:[#allocation4 + $0x108] sm:$0xff]
    %v1609 = vld [vmem:[#allocation4 + $0x110] sm:$0xff]
    %v1610 = vld [vmem:[#allocation4 + $0x118] sm:$0xff]
    %v1611 = vld [vmem:[#allocation4 + $0x120] sm:$0xff]
    %v1612 = vld [vmem:[#allocation4 + $0x128] sm:$0xff]
    %v1613 = vld [vmem:[#allocation4 + $0x130] sm:$0xff]
    %v1614 = vld [vmem:[#allocation4 + $0x138] sm:$0xff]
    %v1615 = vld [vmem:[#allocation4 + $0x140] sm:$0xff]
    %v1616 = vld [vmem:[#allocation4 + $0x148] sm:$0xff]
    %v1617 = vld [vmem:[#allocation4 + $0x150] sm:$0xff]
    %v1618 = vld [vmem:[#allocation4 + $0x158] sm:$0xff]
    %v1619 = vld [vmem:[#allocation4 + $0x160] sm:$0xff]
    %v1620 = vld [vmem:[#allocation4 + $0x168] sm:$0xff]
    %v1621 = vld [vmem:[#allocation4 + $0x170] sm:$0xff]
    %v1622 = vld [vmem:[#allocation4 + $0x178] sm:$0xff]
    %v1623 = vld [vmem:[#allocation4 + $0x180] sm:$0xff]
    %v1624 = vld [vmem:[#allocation4 + $0x188] sm:$0xff]
    %v1625 = vld [vmem:[#allocation4 + $0x190] sm:$0xff]
    %v1626 = vld [vmem:[#allocation4 + $0x198] sm:$0xff]
    %v1627 = vld [vmem:[#allocation4 + $0x1a0] sm:$0xff]
    %v1628 = vld [vmem:[#allocation4 + $0x1a8] sm:$0xff]
    %v1629 = vld [vmem:[#allocation4 + $0x1b0] sm:$0xff]
    %v1630 = vld [vmem:[#allocation4 + $0x1b8] sm:$0xff]
    %v1631 = vld [vmem:[#allocation4 + $0x1c0] sm:$0xff]
    %v1632 = vld [vmem:[#allocation4 + $0x1c8] sm:$0xff]
    %v1633 = vld [vmem:[#allocation4 + $0x1d0] sm:$0xff]
    %v1634 = vld [vmem:[#allocation4 + $0x1d8] sm:$0xff]
    %v1635 = vld [vmem:[#allocation4 + $0x1e0] sm:$0xff]
    %v1636 = vld [vmem:[#allocation4 + $0x1e8] sm:$0xff]
    %v1637 = vld [vmem:[#allocation4 + $0x1f0] sm:$0xff]
    %v1638 = vld [vmem:[#allocation4 + $0x1f8] sm:$0xff]
    %v1639 = vld [vmem:[#allocation4 + $0x200] sm:$0xff]
    %v1640 = vld [vmem:[#allocation4 + $0x208] sm:$0xff]
    %v1641 = vld [vmem:[#allocation4 + $0x210] sm:$0xff]
    %v1642 = vld [vmem:[#allocation4 + $0x218] sm:$0xff]
    %v1643 = vld [vmem:[#allocation4 + $0x220] sm:$0xff]
    %v1644 = vld [vmem:[#allocation4 + $0x228] sm:$0xff]
    %v1645 = vld [vmem:[#allocation4 + $0x230] sm:$0xff]
    %v1646 = vld [vmem:[#allocation4 + $0x238] sm:$0xff]
    %1647 = vmatprep.subr.bf16.mxu0 0
    %1648 = vmatpush1.bf16.msra.mxu0 %v1575
    %1649 = vmatprep.subr.bf16.mxu0 0
    %1650 = vmatpush1.bf16.msra.mxu0 %v1576
    %1651 = vmatprep.subr.bf16.mxu0 0
    %1652 = vmatpush1.bf16.msra.mxu0 %v1577
    %1653 = vmatprep.subr.bf16.mxu0 0
    %1654 = vmatpush1.bf16.msra.mxu0 %v1578
    %1655 = vmatprep.subr.bf16.mxu0 0
    %1656 = vmatpush1.bf16.msra.mxu0 %v1579
    %1657 = vmatprep.subr.bf16.mxu0 0
    %1658 = vmatpush1.bf16.msra.mxu0 %v1580
    %1659 = vmatprep.subr.bf16.mxu0 0
    %1660 = vmatpush1.bf16.msra.mxu0 %v1581
    %1661 = vmatprep.subr.bf16.mxu0 0
    %1662 = vmatpush1.bf16.msra.mxu0 %v1582
    %1663 = vmatprep.subr.bf16.mxu0 0
    %1664 = vmatpush1.bf16.msra.mxu0 %v1583
    %1665 = vmatprep.subr.bf16.mxu0 0
    %1666 = vmatpush1.bf16.msra.mxu0 %v1584
    %1667 = vmatprep.subr.bf16.mxu0 0
    %1668 = vmatpush1.bf16.msra.mxu0 %v1585
    %1669 = vmatprep.subr.bf16.mxu0 0
    %1670 = vmatpush1.bf16.msra.mxu0 %v1586
    %1671 = vmatprep.subr.bf16.mxu0 0
    %1672 = vmatpush1.bf16.msra.mxu0 %v1587
    %1673 = vmatprep.subr.bf16.mxu0 0
    %1674 = vmatpush1.bf16.msra.mxu0 %v1588
    %1675 = vmatprep.subr.bf16.mxu0 0
    %1676 = vmatpush1.bf16.msra.mxu0 %v1589
    %1677 = vmatprep.subr.bf16.mxu0 0
    %1678 = vmatpush1.bf16.msra.mxu0 %v1590
    %1679 = vmatprep.mubr.bf16.mxu0 %v1567
    %1680 = vmatmul.mubr.bf16.gmra.mrb[0].mxu0 %v1566
    %v1681 = vpop.f32.mrb[0].mxu0
    %v1682 = vadd.f32 0.0, %v1681
    %v1683 = vpop.f32.mrb[0].mxu0
    %v1684 = vpop.f32.mrb[0].mxu0
    %v1685 = vadd.f32 0.0, %v1684
    %v1686 = vpop.f32.mrb[0].mxu0
    %1687 = vdwg.mxu0
    %1688 = vmatprep.subr.bf16.mxu0 0
    %1689 = vmatpush1.bf16.msra.mxu0 %v1591
    %1690 = vmatprep.subr.bf16.mxu0 0
    %1691 = vmatpush1.bf16.msra.mxu0 %v1592
    %1692 = vmatprep.subr.bf16.mxu0 0
    %1693 = vmatpush1.bf16.msra.mxu0 %v1593
    %1694 = vmatprep.subr.bf16.mxu0 0
    %1695 = vmatpush1.bf16.msra.mxu0 %v1594
    %1696 = vmatprep.subr.bf16.mxu0 0
    %1697 = vmatpush1.bf16.msra.mxu0 %v1595
    %1698 = vmatprep.subr.bf16.mxu0 0
    %1699 = vmatpush1.bf16.msra.mxu0 %v1596
    %1700 = vmatprep.subr.bf16.mxu0 0
    %1701 = vmatpush1.bf16.msra.mxu0 %v1597
    %1702 = vmatprep.subr.bf16.mxu0 0
    %1703 = vmatpush1.bf16.msra.mxu0 %v1598
    %1704 = vmatprep.subr.bf16.mxu0 0
    %1705 = vmatpush1.bf16.msra.mxu0 %v1599
    %1706 = vmatprep.subr.bf16.mxu0 0
    %1707 = vmatpush1.bf16.msra.mxu0 %v1600
    %1708 = vmatprep.subr.bf16.mxu0 0
    %1709 = vmatpush1.bf16.msra.mxu0 %v1601
    %1710 = vmatprep.subr.bf16.mxu0 0
    %1711 = vmatpush1.bf16.msra.mxu0 %v1602
    %1712 = vmatprep.subr.bf16.mxu0 0
    %1713 = vmatpush1.bf16.msra.mxu0 %v1603
    %1714 = vmatprep.subr.bf16.mxu0 0
    %1715 = vmatpush1.bf16.msra.mxu0 %v1604
    %1716 = vmatprep.subr.bf16.mxu0 0
    %1717 = vmatpush1.bf16.msra.mxu0 %v1605
    %1718 = vmatprep.subr.bf16.mxu0 0
    %1719 = vmatpush1.bf16.msra.mxu0 %v1606
    %1720 = vmatprep.mubr.bf16.mxu0 %v1569
    %1721 = vmatmul.mubr.bf16.gmra.mrb[0].mxu0 %v1568
    %v1722 = vpop.f32.mrb[0].mxu0
    %v1723 = vadd.f32 %v1682, %v1722
    %v1724 = vpop.f32.mrb[0].mxu0
    %v1725 = vpop.f32.mrb[0].mxu0
    %v1726 = vadd.f32 %v1685, %v1725
    %v1727 = vpop.f32.mrb[0].mxu0
    %1728 = vdwg.mxu0
    %1729 = vmatprep.subr.bf16.mxu0 0
    %1730 = vmatpush1.bf16.msra.mxu0 %v1607
    %1731 = vmatprep.subr.bf16.mxu0 0
    %1732 = vmatpush1.bf16.msra.mxu0 %v1608
    %1733 = vmatprep.subr.bf16.mxu0 0
    %1734 = vmatpush1.bf16.msra.mxu0 %v1609
    %1735 = vmatprep.subr.bf16.mxu0 0
    %1736 = vmatpush1.bf16.msra.mxu0 %v1610
    %1737 = vmatprep.subr.bf16.mxu0 0
    %1738 = vmatpush1.bf16.msra.mxu0 %v1611
    %1739 = vmatprep.subr.bf16.mxu0 0
    %1740 = vmatpush1.bf16.msra.mxu0 %v1612
    %1741 = vmatprep.subr.bf16.mxu0 0
    %1742 = vmatpush1.bf16.msra.mxu0 %v1613
    %1743 = vmatprep.subr.bf16.mxu0 0
    %1744 = vmatpush1.bf16.msra.mxu0 %v1614
    %1745 = vmatprep.subr.bf16.mxu0 0
    %1746 = vmatpush1.bf16.msra.mxu0 %v1615
    %1747 = vmatprep.subr.bf16.mxu0 0
    %1748 = vmatpush1.bf16.msra.mxu0 %v1616
    %1749 = vmatprep.subr.bf16.mxu0 0
    %1750 = vmatpush1.bf16.msra.mxu0 %v1617
    %1751 = vmatprep.subr.bf16.mxu0 0
    %1752 = vmatpush1.bf16.msra.mxu0 %v1618
    %1753 = vmatprep.subr.bf16.mxu0 0
    %1754 = vmatpush1.bf16.msra.mxu0 %v1619
    %1755 = vmatprep.subr.bf16.mxu0 0
    %1756 = vmatpush1.bf16.msra.mxu0 %v1620
    %1757 = vmatprep.subr.bf16.mxu0 0
    %1758 = vmatpush1.bf16.msra.mxu0 %v1621
    %1759 = vmatprep.subr.bf16.mxu0 0
    %1760 = vmatpush1.bf16.msra.mxu0 %v1622
    %1761 = vmatprep.mubr.bf16.mxu0 %v1571
    %1762 = vmatmul.mubr.bf16.gmra.mrb[0].mxu0 %v1570
    %v1763 = vpop.f32.mrb[0].mxu0
    %v1764 = vadd.f32 %v1723, %v1763
    %v1765 = vpop.f32.mrb[0].mxu0
    %v1766 = vpop.f32.mrb[0].mxu0
    %v1767 = vadd.f32 %v1726, %v1766
    %v1768 = vpop.f32.mrb[0].mxu0
    %1769 = vdwg.mxu0
    %1770 = vmatprep.subr.bf16.mxu0 0
    %1771 = vmatpush1.bf16.msra.mxu0 %v1623
    %1772 = vmatprep.subr.bf16.mxu0 0
    %1773 = vmatpush1.bf16.msra.mxu0 %v1624
    %1774 = vmatprep.subr.bf16.mxu0 0
    %1775 = vmatpush1.bf16.msra.mxu0 %v1625
    %1776 = vmatprep.subr.bf16.mxu0 0
    %1777 = vmatpush1.bf16.msra.mxu0 %v1626
    %1778 = vmatprep.subr.bf16.mxu0 0
    %1779 = vmatpush1.bf16.msra.mxu0 %v1627
    %1780 = vmatprep.subr.bf16.mxu0 0
    %1781 = vmatpush1.bf16.msra.mxu0 %v1628
    %1782 = vmatprep.subr.bf16.mxu0 0
    %1783 = vmatpush1.bf16.msra.mxu0 %v1629
    %1784 = vmatprep.subr.bf16.mxu0 0
    %1785 = vmatpush1.bf16.msra.mxu0 %v1630
    %1786 = vmatprep.subr.bf16.mxu0 0
    %1787 = vmatpush1.bf16.msra.mxu0 %v1631
    %1788 = vmatprep.subr.bf16.mxu0 0
    %1789 = vmatpush1.bf16.msra.mxu0 %v1632
    %1790 = vmatprep.subr.bf16.mxu0 0
    %1791 = vmatpush1.bf16.msra.mxu0 %v1633
    %1792 = vmatprep.subr.bf16.mxu0 0
    %1793 = vmatpush1.bf16.msra.mxu0 %v1634
    %1794 = vmatprep.subr.bf16.mxu0 0
    %1795 = vmatpush1.bf16.msra.mxu0 %v1635
    %1796 = vmatprep.subr.bf16.mxu0 0
    %1797 = vmatpush1.bf16.msra.mxu0 %v1636
    %1798 = vmatprep.subr.bf16.mxu0 0
    %1799 = vmatpush1.bf16.msra.mxu0 %v1637
    %1800 = vmatprep.subr.bf16.mxu0 0
    %1801 = vmatpush1.bf16.msra.mxu0 %v1638
    %1802 = vmatprep.mubr.bf16.mxu0 %v1573
    %1803 = vmatmul.mubr.bf16.gmra.mrb[0].mxu0 %v1572
    %v1804 = vpop.f32.mrb[0].mxu0
    %v1805 = vadd.f32 %v1764, %v1804
    %v1806 = vpop.f32.mrb[0].mxu0
    %v1807 = vpop.f32.mrb[0].mxu0
    %v1808 = vadd.f32 %v1767, %v1807
    %v1809 = vpop.f32.mrb[0].mxu0
    %1810 = vdwg.mxu0
    %1811 = vmatprep.subr.bf16.mxu0 0
    %1812 = vmatpush1.bf16.msra.mxu0 %v1639
    %1813 = vmatprep.subr.bf16.mxu0 0
    %1814 = vmatpush1.bf16.msra.mxu0 %v1640
    %1815 = vmatprep.subr.bf16.mxu0 0
    %1816 = vmatpush1.bf16.msra.mxu0 %v1641
    %1817 = vmatprep.subr.bf16.mxu0 0
    %1818 = vmatpush1.bf16.msra.mxu0 %v1642
    %1819 = vmatprep.subr.bf16.mxu0 0
    %1820 = vmatpush1.bf16.msra.mxu0 %v1643
    %1821 = vmatprep.subr.bf16.mxu0 0
    %1822 = vmatpush1.bf16.msra.mxu0 %v1644
    %1823 = vmatprep.subr.bf16.mxu0 0
    %1824 = vmatpush1.bf16.msra.mxu0 %v1645
    %1825 = vmatprep.subr.bf16.mxu0 0
    %1826 = vmatpush1.bf16.msra.mxu0 %v1646
    %1827 = vmatprep.subr.bf16.mxu0 0
    %1828 = vmatpush1.bf16.msra.mxu0 0
    %1829 = vmatprep.subr.bf16.mxu0 0
    %1830 = vmatpush1.bf16.msra.mxu0 0
    %1831 = vmatprep.subr.bf16.mxu0 0
    %1832 = vmatpush1.bf16.msra.mxu0 0
    %1833 = vmatprep.subr.bf16.mxu0 0
    %1834 = vmatpush1.bf16.msra.mxu0 0
    %1835 = vmatprep.subr.bf16.mxu0 0
    %1836 = vmatpush1.bf16.msra.mxu0 0
    %1837 = vmatprep.subr.bf16.mxu0 0
    %1838 = vmatpush1.bf16.msra.mxu0 0
    %1839 = vmatprep.subr.bf16.mxu0 0
    %1840 = vmatpush1.bf16.msra.mxu0 0
    %1841 = vmatprep.subr.bf16.mxu0 0
    %1842 = vmatpush1.bf16.msra.mxu0 0
    %1843 = vmatprep.mubr.bf16.mxu0 0
    %1844 = vmatmul.mubr.bf16.gmra.mrb[0].mxu0 %v1574
    %v1845 = vpop.f32.mrb[0].mxu0
    %v1846 = vadd.f32 %v1805, %v1845
    %v1847 = vpop.f32.mrb[0].mxu0
    %v1848 = vpop.f32.mrb[0].mxu0
    %v1849 = vadd.f32 %v1808, %v1848
    %v1850 = vpop.f32.mrb[0].mxu0
    %1851 = vdwg.mxu0
    %v1852 = vmax.f32 %v1846, 0.0
    %v1853 = vmax.f32 %v1849, 0.0
    %1854 = vst [vmem:[#allocation9] sm:$0xff] %v1852
    %1855 = vst [vmem:[#allocation9 + $0x8] sm:$0xff] %v1853
    // Predicated region
    $region26: #{tpu_custom_call.1} parent=1 // pred_check
      _
    $region27: #{tpu_custom_call.1} parent=1 // pred_check_branch
      %1857 = sbr.rel (0) target = $region29
    $region28: #{tpu_custom_call.1} parent=1 // pred_region
      %s1859 = ssub.s32 256, 256
      %1860 = vsyncadd [#allocation8], %s1859
      %s1861 = sshll.u32 [#allocation9], 4
      %s1862 = int_to_ptr.vmem [resolvable:$true] %s1861
      %1867 = dma.vmem_to_hbm [thread:$0]  %s1862, 256, %s5, [#allocation8], 128, 128, 8
    $region29: #{tpu_custom_call.1} parent=1 // pred_fallthru
      _
    // Predicated region
    $region30: #{tpu_custom_call.1} parent=1 // pred_check
      _
    $region31: #{tpu_custom_call.1} parent=1 // pred_check_branch
      %1869 = sbr.rel (0) target = $region33
    $region32: #{tpu_custom_call.1} parent=1 // pred_region
      %1870 = dma.done [#allocation8], 256
    $region33: #{tpu_custom_call.1} parent=1 // pred_fallthru
      _
    %1871 = vsyncpa [#allocation7], 1
    %1872 = vsyncpa [#allocation8], 1
  %1873 = vsyncmov [#allocation5]
  %s1874 = vpop.sfrf %1873
  %p1875 = scmp.eq.s32.totalorder %s1874, 0
  %p1876 = pneg %p1875
  %1878 = shalt.err (%p1876)
  %s1879 = scalar_lea.sflag [#allocation5], 1
  %1880 = vsyncmov %s1879
  %s1881 = vpop.sfrf %1880
  %p1882 = scmp.eq.s32.totalorder %s1881, 0
  %p1883 = pneg %p1882
  %1885 = shalt.err (%p1883)

</llo_original>
